<compile_context>
chip_gen: v6e
topology: v6e:2x2x1
jax: 0.10.0
libtpu: 0.0.40
codegen_flags: <defaults>
</compile_context>

<pallas_src>
import numpy as np
import jax
import jax.numpy as jnp
from jax.experimental import pallas as pl
from jax.experimental.pallas import tpu as pltpu

EPS = 1e-5     # InstanceNorm2d default eps
LANE = 128     # TPU lane width


# --------------------------- host-side table builders ----------------------- #

def _round_up(x, m):
    return ((x + m - 1) // m) * m


def _tap_offsets(W):
    # PyTorch Conv2d (cross-correlation) tap order: t = i*3 + j  <->  (ky, kx) = (i-1, j-1)
    return [((t // 3) - 1, (t % 3) - 1) for t in range(9)]


def _tap_masks_np(H, W, bb, n_pad):
    """(9, 1, n_pad) 0/1 masks: 1 where the tap's neighbour (h+ky, w+kx) is in bounds."""
    HW = H * W
    hh, ww = np.meshgrid(np.arange(H), np.arange(W), indexing="ij")
    masks = np.zeros((9, 1, n_pad), np.float32)
    for t, (ky, kx) in enumerate(_tap_offsets(W)):
        ok = ((hh + ky >= 0) & (hh + ky < H) &
              (ww + kx >= 0) & (ww + kx < W)).astype(np.float32).reshape(HW)
        for n in range(bb):
            masks[t, 0, n * HW:(n + 1) * HW] = ok
    return masks


def _image_masks_np(HW, bb, n_pad):
    """(bb, 1, n_pad) 0/1 masks selecting each image's real lanes (per-image InstanceNorm)."""
    m = np.zeros((bb, 1, n_pad), np.float32)
    for n in range(bb):
        m[n, 0, n * HW:(n + 1) * HW] = 1.0
    return m


def _pool_select_np(H, W, bb, n_in_pad, n_out_pad):
    """(n_in_pad, n_out_pad) 0/1 selector picking (even row, even col) per image."""
    Ho, Wo = H // 2, W // 2
    HW, HWo = H * W, Ho * Wo
    sel = np.zeros((n_in_pad, n_out_pad), np.float32)
    for n in range(bb):
        for ph in range(Ho):
            for pw in range(Wo):
                sel[n * HW + (2 * ph) * W + 2 * pw, n * HWo + ph * Wo + pw] = 1.0
    return sel


def _upsample_1d_np(n):
    """(n, 2n) bilinear x2 interpolation matrix (align_corners=False)."""
    m = np.zeros((n, 2 * n), np.float32)
    for o in range(2 * n):
        c = (o + 0.5) / 2.0 - 0.5
        i0 = int(np.floor(c))
        frac = c - i0
        lo = min(max(i0, 0), n - 1)
        hi = min(max(i0 + 1, 0), n - 1)
        m[lo, o] += 1.0 - frac
        m[hi, o] += frac
    return m


def _upsample_np(Hc, Wc, bb, n_in_pad, n_out_pad):
    """Block-diag (over bb) separable bilinear x2 as a Kron product; padded lanes -> 0."""
    per = np.kron(_upsample_1d_np(Hc), _upsample_1d_np(Wc))   # (Hc*Wc, 4*Hc*Wc)
    HWc = Hc * Wc
    HWf = 4 * HWc
    out = np.zeros((n_in_pad, n_out_pad), np.float32)
    for n in range(bb):
        out[n * HWc:(n + 1) * HWc, n * HWf:(n + 1) * HWf] = per
    return out


# ------------------------------- model builder ------------------------------ #

def make_fused_unet(in_chans, out_chans, chans, num_pool_layers, H, W, batch):
    L = num_pool_layers
    assert H % (1 << L) == 0 and W % (1 << L) == 0

    # --- channel plan, mirroring UnetModel.__init__ exactly ---
    downs = [(in_chans, chans)]
    ch = chans
    for _ in range(L - 1):
        downs.append((ch, ch * 2))
        ch *= 2
    mid_io = (ch, ch)
    ups = []
    for _ in range(L - 1):
        ups.append((ch * 2, ch // 2))
        ch //= 2
    ups.append((ch * 2, ch))
    conv2_io = [(ch, ch // 2), (ch // 2, out_chans), (out_chans, out_chans)]

    skip_ch = [co for (_, co) in downs]
    cur_ch = mid_io[1]
    for k in range(L):
        assert ups[k][0] == cur_ch + skip_ch[L - 1 - k]
        cur_ch = ups[k][1]

    Hr = [H >> r for r in range(L + 1)]
    Wr = [W >> r for r in range(L + 1)]
    HWr = [Hr[r] * Wr[r] for r in range(L + 1)]

    # --- batch block: pack bb images along the lane axis to densify lanes ---
    bb = 1
    while (bb < batch and batch % (bb * 2) == 0 and bb * 2 <= 8
           and bb * HWr[L] < LANE):
        bb *= 2
    # every resolution is padded to a multiple of 128 lanes (dense vregs / unmasked stores)
    npad = [_round_up(bb * HWr[r], LANE) for r in range(L + 1)]

    # --- constant tables (all tiny; no O(HW^2) shift operators) ---
    tap_masks = [jnp.asarray(_tap_masks_np(Hr[r], Wr[r], bb, npad[r]))
                 for r in range(L + 1)]
    img_masks = [jnp.asarray(_image_masks_np(HWr[r], bb, npad[r]))
                 for r in range(L + 1)]
    pool_sel = [jnp.asarray(_pool_select_np(Hr[r], Wr[r], bb, npad[r], npad[r + 1]))
                for r in range(L)]
    up_mats = [jnp.asarray(_upsample_np(Hr[r + 1], Wr[r + 1], bb, npad[r + 1], npad[r]))
               for r in range(L)]
    consts = tuple(tap_masks) + tuple(img_masks) + tuple(pool_sel) + tuple(up_mats)
    n_res = L + 1

    # ----------------------------- parameters ------------------------------ #

    def init_params(key):
        def conv_init(k, cin, cout, ksz):
            kw, kb = jax.random.split(k)
            bound = 1.0 / np.sqrt(cin * ksz * ksz)
            w = jax.random.uniform(kw, (cout, cin, ksz, ksz), jnp.float32, -bound, bound)
            b = jax.random.uniform(kb, (cout,), jnp.float32, -bound, bound)
            return w, b

        keys = iter(jax.random.split(key, 2 * L + 4))
        return {
            "down": [conv_init(next(keys), ci, co, 3) for (ci, co) in downs],
            "mid": conv_init(next(keys), *mid_io, 3),
            "up": [conv_init(next(keys), ci, co, 3) for (ci, co) in ups],
            "conv2": [conv_init(next(keys), ci, co, 1) for (ci, co) in conv2_io],
        }

    def prepare_inputs(params):
        """Torch-layout params -> flat tuple of kernel inputs (tables + weights)."""
        def flat3(w):  # (Cout, Cin, 3, 3) -> (Cout, 9*Cin), K index = t*Cin + c
            co, ci = w.shape[0], w.shape[1]
            return (jnp.transpose(w, (0, 2, 3, 1)).reshape(co, 9 * ci)
                    .astype(jnp.bfloat16))

        flat = []
        # Conv-block biases cancel exactly in InstanceNorm2d(affine=False) -> dropped.
        for (w, _b) in params["down"]:
            flat.append(flat3(w))
        flat.append(flat3(params["mid"][0]))
        for (w, _b) in params["up"]:
            flat.append(flat3(w))            # unsplit: acts on cat([upsampled, skip])
        # Fold the three 1x1 convs (linear chain, no nonlinearity in between).
        (w1, b1), (w2, b2), (w3, b3) = params["conv2"]
        m1, m2, m3 = w1[:, :, 0, 0], w2[:, :, 0, 0], w3[:, :, 0, 0]
        w_eff = m3 @ (m2 @ m1)
        b_eff = m3 @ (m2 @ b1) + m3 @ b2 + b3
        flat.append(w_eff.astype(jnp.bfloat16))
        flat.append(b_eff.reshape(out_chans, 1).astype(jnp.float32))
        return consts + tuple(flat)

    # -------------------------------- kernel -------------------------------- #

    def kernel(*refs):
        x_ref = refs[0]
        i0 = 1
        tmask = refs[i0:i0 + n_res]; i0 += n_res
        imask = refs[i0:i0 + n_res]; i0 += n_res
        sel = refs[i0:i0 + L]; i0 += L
        upm = refs[i0:i0 + L]; i0 += L
        wd = refs[i0:i0 + L]; i0 += L
        wmid = refs[i0]; i0 += 1
        wu = refs[i0:i0 + L]; i0 += L
        wfin, bfin = refs[i0], refs[i0 + 1]
        out_ref = refs[i0 + 2]

        def gather_taps(x, r):
            """9 zero-padded neighbour maps of x (C, npad[r]): pltpu.roll + 0/1 mask (f32)."""
            n = npad[r]
            taps = []
            for t, (ky, kx) in enumerate(_tap_offsets(Wr[r])):
                d = ky * Wr[r] + kx
                p = x if d == 0 else pltpu.roll(x, shift=(-d) % n, axis=1)
                taps.append(p * tmask[r][t])
            return taps

        def conv_block(x, w_ref, r):
            """3x3 conv (pad=1, bias cancels) + InstanceNorm2d + ReLU.  Dropout2d = identity."""
            # im2col: stack the 9 rolled/masked copies along sublanes -> one wide-K matmul.
            patches = jnp.concatenate(gather_taps(x, r), axis=0)        # (9*Cin, n) f32
            acc = jnp.dot(w_ref[...], patches.astype(jnp.bfloat16),
                          preferred_element_type=jnp.float32)            # (Cout, n) f32
            # Per-image InstanceNorm statistics (two-pass, f32); padded lanes stay 0.
            inv = 1.0 / HWr[r]
            mean_b = jnp.zeros_like(acc)
            for b_ in range(bb):
                m = imask[r][b_]
                mean_b = mean_b + (jnp.sum(acc * m, axis=-1, keepdims=True) * inv) * m
            xc = acc - mean_b
            xc2 = xc * xc
            var_b = jnp.zeros_like(acc)
            for b_ in range(bb):
                m = imask[r][b_]
                var_b = var_b + (jnp.sum(xc2 * m, axis=-1, keepdims=True) * inv) * m
            y = xc * jax.lax.rsqrt(var_b + EPS)
            return jnp.maximum(y, 0.0)

        def max_pool(x, r):
            """2x2/stride-2 max pool: rolls + max (f32), then a 0/1 select matmul."""
            n = npad[r]
            m = jnp.maximum(x, pltpu.roll(x, shift=(-1) % n, axis=1))       # right neighbour
            m = jnp.maximum(m, pltpu.roll(m, shift=(-Wr[r]) % n, axis=1))   # down neighbour
            return jnp.dot(m, sel[r][...], preferred_element_type=jnp.float32)

        x_in = x_ref[0].astype(jnp.float32)            # (in_chans, npad[0])

        # encoder
        cur = x_in
        skips = []
        for d in range(L):
            cur = conv_block(cur, wd[d], d)
            skips.append(cur)
            cur = max_pool(cur, d)
        # bottleneck
        cur = conv_block(cur, wmid, L)
        # decoder: bilinear x2 (f32 matmul), sublane concat with skip, single-matmul conv
        for k in range(L):
            r = L - 1 - k
            cur = jnp.dot(cur, upm[r][...], preferred_element_type=jnp.float32)
            cur = conv_block(jnp.concatenate([cur, skips[r]], axis=0), wu[k], r)
        # folded 1x1 chain + residual add (fs_out = conv2(x) + us_input)
        y = jnp.dot(wfin[...], cur.astype(jnp.bfloat16),
                    preferred_element_type=jnp.float32)
        out_ref[0] = y + bfin[...] + x_in

    # ------------------------------- forward -------------------------------- #

    def forward(prepared, us_input, ksp, mask):
        """us_input: (B, in_chans, H, W); ksp: (H, W, 2); mask: (H, W)."""
        B = us_input.shape[0]
        assert B % bb == 0
        nb = B // bb
        hw0 = H * W
        # layout plumbing: (B, C, H, W) -> (nb, C, bb*HW) lane-dense blocks (+pad to 128)
        x = us_input.astype(jnp.float32).reshape(nb, bb, in_chans, hw0)
        x = jnp.transpose(x, (0, 2, 1, 3)).reshape(nb, in_chans, bb * hw0)
        if npad[0] > bb * hw0:
            x = jnp.pad(x, ((0, 0), (0, 0), (0, npad[0] - bb * hw0)))

        inputs = (x,) + tuple(prepared)

        def bcast_spec(a):
            nd = a.ndim
            return pl.BlockSpec(a.shape, lambda g, _nd=nd: (0,) * _nd)

        in_specs = [pl.BlockSpec((1, in_chans, npad[0]), lambda g: (g, 0, 0))]
        in_specs += [bcast_spec(a) for a in inputs[1:]]

        unet_out = pl.pallas_call(
            kernel,
            out_shape=jax.ShapeDtypeStruct((nb, out_chans, npad[0]), jnp.float32),
            grid=(nb,),
            in_specs=in_specs,
            out_specs=pl.BlockSpec((1, out_chans, npad[0]), lambda g: (g, 0, 0)),
            compiler_params=pltpu.CompilerParams(
                dimension_semantics=("parallel",)),
        )(*inputs)

        fs = unet_out[:, :, :bb * hw0].reshape(nb, out_chans, bb, hw0)
        fs = jnp.transpose(fs, (0, 2, 1, 3)).reshape(B, out_chans, H, W)
        return data_consistency(fs, ksp, mask)

    return init_params, prepare_inputs, forward


# ------------------------------ data consistency ----------------------------- #

def data_consistency(predicted_img, us_kspace, us_mask):
    """DataConsistencyLayer.forward."""
    # TODO(synk): FFT/IFFT have no Pallas TPU primitive; this step runs as plain XLA ops.
    mask = us_mask[None, :, :]                        # (1, H, W)
    ksp = us_kspace[None, :, :, :]                    # (1, H, W, 2)
    pred = predicted_img[:, 0, :, :]                  # (B, H, W)
    kspace_pred = jnp.fft.fft2(pred, norm="ortho")
    ksp_c = ksp[..., 0] + 1j * ksp[..., 1]
    updated = mask * ksp_c + (1.0 - mask) * kspace_pred
    img = jnp.fft.ifft2(updated, norm="ortho")
    return jnp.real(img)[:, None, :, :].astype(jnp.float32)


# ---------------------------------- main ------------------------------------- #

if __name__ == "__main__":
    key = jax.random.PRNGKey(0)
    k_p, k_x, k_ksp, k_m = jax.random.split(key, 4)

    in_chans, out_chans, chans, num_pool_layers = 1, 1, 4, 2
    B, H, W = 2, 16, 16

    init_params, prepare_inputs, forward = make_fused_unet(
        in_chans, out_chans, chans, num_pool_layers, H, W, batch=B)

    params = init_params(k_p)
    prepared = prepare_inputs(params)   # masks / pool / upsample tables + bf16 weights

    us_input = jax.random.normal(k_x, (B, in_chans, H, W), dtype=jnp.float32)
    ksp = jax.random.normal(k_ksp, (H, W, 2), dtype=jnp.float32)
    mask = (jax.random.uniform(k_m, (H, W)) > 0.5).astype(jnp.float32)

    fwd = jax.jit(forward)
    out = fwd(prepared, us_input, ksp, mask)
    jax.block_until_ready(out)

    assert out.shape == (B, out_chans, H, W) and out.dtype == jnp.float32
    assert bool(jnp.all(jnp.isfinite(out)))
    print("KERNEL_OK")
</pallas_src>

<mosaic_0001>
module attributes {stable_mosaic.version = 11 : i64} {
  func.func @kernel(%arg0: i32, %arg1: memref<1x1x512xf32, #tpu.memory_space<vmem>>, %arg2: memref<9x1x512xf32, #tpu.memory_space<vmem>>, %arg3: memref<9x1x128xf32, #tpu.memory_space<vmem>>, %arg4: memref<9x1x128xf32, #tpu.memory_space<vmem>>, %arg5: memref<2x1x512xf32, #tpu.memory_space<vmem>>, %arg6: memref<2x1x128xf32, #tpu.memory_space<vmem>>, %arg7: memref<2x1x128xf32, #tpu.memory_space<vmem>>, %arg8: memref<512x128xf32, #tpu.memory_space<vmem>>, %arg9: memref<128x128xf32, #tpu.memory_space<vmem>>, %arg10: memref<128x512xf32, #tpu.memory_space<vmem>>, %arg11: memref<128x128xf32, #tpu.memory_space<vmem>>, %arg12: memref<4x9xbf16, #tpu.memory_space<vmem>>, %arg13: memref<8x36xbf16, #tpu.memory_space<vmem>>, %arg14: memref<8x72xbf16, #tpu.memory_space<vmem>>, %arg15: memref<4x144xbf16, #tpu.memory_space<vmem>>, %arg16: memref<4x72xbf16, #tpu.memory_space<vmem>>, %arg17: memref<1x4xbf16, #tpu.memory_space<vmem>>, %arg18: memref<1x1xf32, #tpu.memory_space<vmem>>, %arg19: memref<1x1x512xf32, #tpu.memory_space<vmem>>) attributes {dimension_semantics = [#tpu.dimension_semantics<parallel>], iteration_bounds = array<i64: 1>, scalar_prefetch = 0 : i64, scratch_operands = 0 : i64, tpu.core_type = #tpu.core_type<tc>, window_params = [{transform_indices = @transform_0, window_bounds = array<i64: 1, 1, 512>}, {pipeline_mode = #tpu.pipeline_mode<synchronous>, transform_indices = @transform_1, window_bounds = array<i64: 9, 1, 512>}, {pipeline_mode = #tpu.pipeline_mode<synchronous>, transform_indices = @transform_2, window_bounds = array<i64: 9, 1, 128>}, {pipeline_mode = #tpu.pipeline_mode<synchronous>, transform_indices = @transform_3, window_bounds = array<i64: 9, 1, 128>}, {pipeline_mode = #tpu.pipeline_mode<synchronous>, transform_indices = @transform_4, window_bounds = array<i64: 2, 1, 512>}, {pipeline_mode = #tpu.pipeline_mode<synchronous>, transform_indices = @transform_5, window_bounds = array<i64: 2, 1, 128>}, {pipeline_mode = #tpu.pipeline_mode<synchronous>, transform_indices = @transform_6, window_bounds = array<i64: 2, 1, 128>}, {pipeline_mode = #tpu.pipeline_mode<synchronous>, transform_indices = @transform_7, window_bounds = array<i64: 512, 128>}, {pipeline_mode = #tpu.pipeline_mode<synchronous>, transform_indices = @transform_8, window_bounds = array<i64: 128, 128>}, {pipeline_mode = #tpu.pipeline_mode<synchronous>, transform_indices = @transform_9, window_bounds = array<i64: 128, 512>}, {pipeline_mode = #tpu.pipeline_mode<synchronous>, transform_indices = @transform_10, window_bounds = array<i64: 128, 128>}, {pipeline_mode = #tpu.pipeline_mode<synchronous>, transform_indices = @transform_11, window_bounds = array<i64: 4, 9>}, {pipeline_mode = #tpu.pipeline_mode<synchronous>, transform_indices = @transform_12, window_bounds = array<i64: 8, 36>}, {pipeline_mode = #tpu.pipeline_mode<synchronous>, transform_indices = @transform_13, window_bounds = array<i64: 8, 72>}, {pipeline_mode = #tpu.pipeline_mode<synchronous>, transform_indices = @transform_14, window_bounds = array<i64: 4, 144>}, {pipeline_mode = #tpu.pipeline_mode<synchronous>, transform_indices = @transform_15, window_bounds = array<i64: 4, 72>}, {pipeline_mode = #tpu.pipeline_mode<synchronous>, transform_indices = @transform_16, window_bounds = array<i64: 1, 4>}, {pipeline_mode = #tpu.pipeline_mode<synchronous>, transform_indices = @transform_17, window_bounds = array<i64: 1, 1>}, {transform_indices = @transform_18, window_bounds = array<i64: 1, 1, 512>}]} {
    %c0 = arith.constant 0 : index
    %c0_0 = arith.constant 0 : index
    %c0_1 = arith.constant 0 : index
    %0 = vector.load %arg1[%c0, %c0_0, %c0_1] : memref<1x1x512xf32, #tpu.memory_space<vmem>>, vector<1x1x512xf32>
    %1 = vector.shape_cast %0 : vector<1x1x512xf32> to vector<1x512xf32>
    %c17_i32 = arith.constant 17 : i32
    %2 = tpu.dynamic_rotate %1 by %c17_i32 dim 1 : vector<1x512xf32>, i32 -> vector<1x512xf32>
    %c0_2 = arith.constant 0 : index
    %c0_3 = arith.constant 0 : index
    %c0_4 = arith.constant 0 : index
    %3 = vector.load %arg2[%c0_2, %c0_3, %c0_4] : memref<9x1x512xf32, #tpu.memory_space<vmem>>, vector<1x1x512xf32>
    %4 = vector.shape_cast %3 : vector<1x1x512xf32> to vector<1x512xf32>
    %5 = arith.mulf %2, %4 : vector<1x512xf32>
    %c16_i32 = arith.constant 16 : i32
    %6 = tpu.dynamic_rotate %1 by %c16_i32 dim 1 : vector<1x512xf32>, i32 -> vector<1x512xf32>
    %c1 = arith.constant 1 : index
    %c0_5 = arith.constant 0 : index
    %c0_6 = arith.constant 0 : index
    %7 = vector.load %arg2[%c1, %c0_5, %c0_6] : memref<9x1x512xf32, #tpu.memory_space<vmem>>, vector<1x1x512xf32>
    %8 = vector.shape_cast %7 : vector<1x1x512xf32> to vector<1x512xf32>
    %9 = arith.mulf %6, %8 : vector<1x512xf32>
    %c15_i32 = arith.constant 15 : i32
    %10 = tpu.dynamic_rotate %1 by %c15_i32 dim 1 : vector<1x512xf32>, i32 -> vector<1x512xf32>
    %c2 = arith.constant 2 : index
    %c0_7 = arith.constant 0 : index
    %c0_8 = arith.constant 0 : index
    %11 = vector.load %arg2[%c2, %c0_7, %c0_8] : memref<9x1x512xf32, #tpu.memory_space<vmem>>, vector<1x1x512xf32>
    %12 = vector.shape_cast %11 : vector<1x1x512xf32> to vector<1x512xf32>
    %13 = arith.mulf %10, %12 : vector<1x512xf32>
    %c1_i32 = arith.constant 1 : i32
    %14 = tpu.dynamic_rotate %1 by %c1_i32 dim 1 : vector<1x512xf32>, i32 -> vector<1x512xf32>
    %c3 = arith.constant 3 : index
    %c0_9 = arith.constant 0 : index
    %c0_10 = arith.constant 0 : index
    %15 = vector.load %arg2[%c3, %c0_9, %c0_10] : memref<9x1x512xf32, #tpu.memory_space<vmem>>, vector<1x1x512xf32>
    %16 = vector.shape_cast %15 : vector<1x1x512xf32> to vector<1x512xf32>
    %17 = arith.mulf %14, %16 : vector<1x512xf32>
    %c4 = arith.constant 4 : index
    %c0_11 = arith.constant 0 : index
    %c0_12 = arith.constant 0 : index
    %18 = vector.load %arg2[%c4, %c0_11, %c0_12] : memref<9x1x512xf32, #tpu.memory_space<vmem>>, vector<1x1x512xf32>
    %19 = vector.shape_cast %18 : vector<1x1x512xf32> to vector<1x512xf32>
    %20 = arith.mulf %1, %19 : vector<1x512xf32>
    %c511_i32 = arith.constant 511 : i32
    %21 = tpu.dynamic_rotate %1 by %c511_i32 dim 1 : vector<1x512xf32>, i32 -> vector<1x512xf32>
    %c5 = arith.constant 5 : index
    %c0_13 = arith.constant 0 : index
    %c0_14 = arith.constant 0 : index
    %22 = vector.load %arg2[%c5, %c0_13, %c0_14] : memref<9x1x512xf32, #tpu.memory_space<vmem>>, vector<1x1x512xf32>
    %23 = vector.shape_cast %22 : vector<1x1x512xf32> to vector<1x512xf32>
    %24 = arith.mulf %21, %23 : vector<1x512xf32>
    %c497_i32 = arith.constant 497 : i32
    %25 = tpu.dynamic_rotate %1 by %c497_i32 dim 1 : vector<1x512xf32>, i32 -> vector<1x512xf32>
    %c6 = arith.constant 6 : index
    %c0_15 = arith.constant 0 : index
    %c0_16 = arith.constant 0 : index
    %26 = vector.load %arg2[%c6, %c0_15, %c0_16] : memref<9x1x512xf32, #tpu.memory_space<vmem>>, vector<1x1x512xf32>
    %27 = vector.shape_cast %26 : vector<1x1x512xf32> to vector<1x512xf32>
    %28 = arith.mulf %25, %27 : vector<1x512xf32>
    %c496_i32 = arith.constant 496 : i32
    %29 = tpu.dynamic_rotate %1 by %c496_i32 dim 1 : vector<1x512xf32>, i32 -> vector<1x512xf32>
    %c7 = arith.constant 7 : index
    %c0_17 = arith.constant 0 : index
    %c0_18 = arith.constant 0 : index
    %30 = vector.load %arg2[%c7, %c0_17, %c0_18] : memref<9x1x512xf32, #tpu.memory_space<vmem>>, vector<1x1x512xf32>
    %31 = vector.shape_cast %30 : vector<1x1x512xf32> to vector<1x512xf32>
    %32 = arith.mulf %29, %31 : vector<1x512xf32>
    %c495_i32 = arith.constant 495 : i32
    %33 = tpu.dynamic_rotate %1 by %c495_i32 dim 1 : vector<1x512xf32>, i32 -> vector<1x512xf32>
    %c8 = arith.constant 8 : index
    %c0_19 = arith.constant 0 : index
    %c0_20 = arith.constant 0 : index
    %34 = vector.load %arg2[%c8, %c0_19, %c0_20] : memref<9x1x512xf32, #tpu.memory_space<vmem>>, vector<1x1x512xf32>
    %35 = vector.shape_cast %34 : vector<1x1x512xf32> to vector<1x512xf32>
    %36 = arith.mulf %33, %35 : vector<1x512xf32>
    %37 = tpu.concatenate %5, %9, %13, %17, %20, %24, %28, %32, %36 in 0 : vector<1x512xf32>, vector<1x512xf32>, vector<1x512xf32>, vector<1x512xf32>, vector<1x512xf32>, vector<1x512xf32>, vector<1x512xf32>, vector<1x512xf32>, vector<1x512xf32> -> vector<9x512xf32>
    %c0_21 = arith.constant 0 : index
    %c0_22 = arith.constant 0 : index
    %38 = vector.load %arg12[%c0_21, %c0_22] : memref<4x9xbf16, #tpu.memory_space<vmem>>, vector<4x9xbf16>
    %39 = arith.truncf %37 : vector<9x512xf32> to vector<9x512xbf16>
    %cst = arith.constant dense<0.000000e+00> : vector<4x512xf32>
    %40 = tpu.matmul %38, %39, %cst {dimension_numbers = #tpu.dot_dimension_numbers<[1], [0], [0], [1], [0, 0, 1, 1], [], []>} : vector<4x9xbf16>, vector<9x512xbf16>, vector<4x512xf32> -> vector<4x512xf32>
    %cst_23 = arith.constant 0.000000e+00 : f32
    %41 = vector.broadcast %cst_23 : f32 to vector<4x512xf32>
    %c0_24 = arith.constant 0 : index
    %c0_25 = arith.constant 0 : index
    %c0_26 = arith.constant 0 : index
    %42 = vector.load %arg5[%c0_24, %c0_25, %c0_26] : memref<2x1x512xf32, #tpu.memory_space<vmem>>, vector<1x1x512xf32>
    %43 = vector.shape_cast %42 : vector<1x1x512xf32> to vector<1x512xf32>
    %44 = vector.broadcast %43 : vector<1x512xf32> to vector<4x512xf32>
    %45 = arith.mulf %40, %44 : vector<4x512xf32>
    %cst_27 = arith.constant dense<0.000000e+00> : vector<4xf32>
    %46 = vector.multi_reduction <add>, %45, %cst_27 [1] : vector<4x512xf32> to vector<4xf32>
    %47 = vector.shape_cast %46 : vector<4xf32> to vector<4x1xf32>
    %cst_28 = arith.constant 3.906250e-03 : f32
    %48 = vector.broadcast %cst_28 : f32 to vector<4x1xf32>
    %49 = arith.mulf %47, %48 : vector<4x1xf32>
    %50 = vector.broadcast %49 : vector<4x1xf32> to vector<4x512xf32>
    %51 = vector.broadcast %43 : vector<1x512xf32> to vector<4x512xf32>
    %52 = arith.mulf %50, %51 : vector<4x512xf32>
    %53 = arith.addf %41, %52 : vector<4x512xf32>
    %c1_29 = arith.constant 1 : index
    %c0_30 = arith.constant 0 : index
    %c0_31 = arith.constant 0 : index
    %54 = vector.load %arg5[%c1_29, %c0_30, %c0_31] : memref<2x1x512xf32, #tpu.memory_space<vmem>>, vector<1x1x512xf32>
    %55 = vector.shape_cast %54 : vector<1x1x512xf32> to vector<1x512xf32>
    %56 = vector.broadcast %55 : vector<1x512xf32> to vector<4x512xf32>
    %57 = arith.mulf %40, %56 : vector<4x512xf32>
    %cst_32 = arith.constant dense<0.000000e+00> : vector<4xf32>
    %58 = vector.multi_reduction <add>, %57, %cst_32 [1] : vector<4x512xf32> to vector<4xf32>
    %59 = vector.shape_cast %58 : vector<4xf32> to vector<4x1xf32>
    %cst_33 = arith.constant 3.906250e-03 : f32
    %60 = vector.broadcast %cst_33 : f32 to vector<4x1xf32>
    %61 = arith.mulf %59, %60 : vector<4x1xf32>
    %62 = vector.broadcast %61 : vector<4x1xf32> to vector<4x512xf32>
    %63 = vector.broadcast %55 : vector<1x512xf32> to vector<4x512xf32>
    %64 = arith.mulf %62, %63 : vector<4x512xf32>
    %65 = arith.addf %53, %64 : vector<4x512xf32>
    %66 = arith.subf %40, %65 : vector<4x512xf32>
    %67 = arith.mulf %66, %66 : vector<4x512xf32>
    %cst_34 = arith.constant 0.000000e+00 : f32
    %68 = vector.broadcast %cst_34 : f32 to vector<4x512xf32>
    %c0_35 = arith.constant 0 : index
    %c0_36 = arith.constant 0 : index
    %c0_37 = arith.constant 0 : index
    %69 = vector.load %arg5[%c0_35, %c0_36, %c0_37] : memref<2x1x512xf32, #tpu.memory_space<vmem>>, vector<1x1x512xf32>
    %70 = vector.shape_cast %69 : vector<1x1x512xf32> to vector<1x512xf32>
    %71 = vector.broadcast %70 : vector<1x512xf32> to vector<4x512xf32>
    %72 = arith.mulf %67, %71 : vector<4x512xf32>
    %cst_38 = arith.constant dense<0.000000e+00> : vector<4xf32>
    %73 = vector.multi_reduction <add>, %72, %cst_38 [1] : vector<4x512xf32> to vector<4xf32>
    %74 = vector.shape_cast %73 : vector<4xf32> to vector<4x1xf32>
    %cst_39 = arith.constant 3.906250e-03 : f32
    %75 = vector.broadcast %cst_39 : f32 to vector<4x1xf32>
    %76 = arith.mulf %74, %75 : vector<4x1xf32>
    %77 = vector.broadcast %76 : vector<4x1xf32> to vector<4x512xf32>
    %78 = vector.broadcast %70 : vector<1x512xf32> to vector<4x512xf32>
    %79 = arith.mulf %77, %78 : vector<4x512xf32>
    %80 = arith.addf %68, %79 : vector<4x512xf32>
    %c1_40 = arith.constant 1 : index
    %c0_41 = arith.constant 0 : index
    %c0_42 = arith.constant 0 : index
    %81 = vector.load %arg5[%c1_40, %c0_41, %c0_42] : memref<2x1x512xf32, #tpu.memory_space<vmem>>, vector<1x1x512xf32>
    %82 = vector.shape_cast %81 : vector<1x1x512xf32> to vector<1x512xf32>
    %83 = vector.broadcast %82 : vector<1x512xf32> to vector<4x512xf32>
    %84 = arith.mulf %67, %83 : vector<4x512xf32>
    %cst_43 = arith.constant dense<0.000000e+00> : vector<4xf32>
    %85 = vector.multi_reduction <add>, %84, %cst_43 [1] : vector<4x512xf32> to vector<4xf32>
    %86 = vector.shape_cast %85 : vector<4xf32> to vector<4x1xf32>
    %cst_44 = arith.constant 3.906250e-03 : f32
    %87 = vector.broadcast %cst_44 : f32 to vector<4x1xf32>
    %88 = arith.mulf %86, %87 : vector<4x1xf32>
    %89 = vector.broadcast %88 : vector<4x1xf32> to vector<4x512xf32>
    %90 = vector.broadcast %82 : vector<1x512xf32> to vector<4x512xf32>
    %91 = arith.mulf %89, %90 : vector<4x512xf32>
    %92 = arith.addf %80, %91 : vector<4x512xf32>
    %cst_45 = arith.constant 9.99999974E-6 : f32
    %93 = vector.broadcast %cst_45 : f32 to vector<4x512xf32>
    %94 = arith.addf %92, %93 : vector<4x512xf32>
    %95 = math.rsqrt %94 : vector<4x512xf32>
    %96 = arith.mulf %66, %95 : vector<4x512xf32>
    %cst_46 = arith.constant 0.000000e+00 : f32
    %97 = vector.broadcast %cst_46 : f32 to vector<4x512xf32>
    %98 = arith.maximumf %96, %97 : vector<4x512xf32>
    %c511_i32_47 = arith.constant 511 : i32
    %99 = tpu.dynamic_rotate %98 by %c511_i32_47 dim 1 : vector<4x512xf32>, i32 -> vector<4x512xf32>
    %100 = arith.maximumf %98, %99 : vector<4x512xf32>
    %c496_i32_48 = arith.constant 496 : i32
    %101 = tpu.dynamic_rotate %100 by %c496_i32_48 dim 1 : vector<4x512xf32>, i32 -> vector<4x512xf32>
    %102 = arith.maximumf %100, %101 : vector<4x512xf32>
    %c0_49 = arith.constant 0 : index
    %c0_50 = arith.constant 0 : index
    %103 = vector.load %arg8[%c0_49, %c0_50] : memref<512x128xf32, #tpu.memory_space<vmem>>, vector<512x128xf32>
    %cst_51 = arith.constant dense<0.000000e+00> : vector<4x128xf32>
    %104 = tpu.matmul %102, %103, %cst_51 {dimension_numbers = #tpu.dot_dimension_numbers<[1], [0], [0], [1], [0, 0, 1, 1], [], []>} : vector<4x512xf32>, vector<512x128xf32>, vector<4x128xf32> -> vector<4x128xf32>
    %c9_i32 = arith.constant 9 : i32
    %105 = tpu.dynamic_rotate %104 by %c9_i32 dim 1 : vector<4x128xf32>, i32 -> vector<4x128xf32>
    %c0_52 = arith.constant 0 : index
    %c0_53 = arith.constant 0 : index
    %c0_54 = arith.constant 0 : index
    %106 = vector.load %arg3[%c0_52, %c0_53, %c0_54] : memref<9x1x128xf32, #tpu.memory_space<vmem>>, vector<1x1x128xf32>
    %107 = vector.shape_cast %106 : vector<1x1x128xf32> to vector<1x128xf32>
    %108 = vector.broadcast %107 : vector<1x128xf32> to vector<4x128xf32>
    %109 = arith.mulf %105, %108 : vector<4x128xf32>
    %c8_i32 = arith.constant 8 : i32
    %110 = tpu.dynamic_rotate %104 by %c8_i32 dim 1 : vector<4x128xf32>, i32 -> vector<4x128xf32>
    %c1_55 = arith.constant 1 : index
    %c0_56 = arith.constant 0 : index
    %c0_57 = arith.constant 0 : index
    %111 = vector.load %arg3[%c1_55, %c0_56, %c0_57] : memref<9x1x128xf32, #tpu.memory_space<vmem>>, vector<1x1x128xf32>
    %112 = vector.shape_cast %111 : vector<1x1x128xf32> to vector<1x128xf32>
    %113 = vector.broadcast %112 : vector<1x128xf32> to vector<4x128xf32>
    %114 = arith.mulf %110, %113 : vector<4x128xf32>
    %c7_i32 = arith.constant 7 : i32
    %115 = tpu.dynamic_rotate %104 by %c7_i32 dim 1 : vector<4x128xf32>, i32 -> vector<4x128xf32>
    %c2_58 = arith.constant 2 : index
    %c0_59 = arith.constant 0 : index
    %c0_60 = arith.constant 0 : index
    %116 = vector.load %arg3[%c2_58, %c0_59, %c0_60] : memref<9x1x128xf32, #tpu.memory_space<vmem>>, vector<1x1x128xf32>
    %117 = vector.shape_cast %116 : vector<1x1x128xf32> to vector<1x128xf32>
    %118 = vector.broadcast %117 : vector<1x128xf32> to vector<4x128xf32>
    %119 = arith.mulf %115, %118 : vector<4x128xf32>
    %c1_i32_61 = arith.constant 1 : i32
    %120 = tpu.dynamic_rotate %104 by %c1_i32_61 dim 1 : vector<4x128xf32>, i32 -> vector<4x128xf32>
    %c3_62 = arith.constant 3 : index
    %c0_63 = arith.constant 0 : index
    %c0_64 = arith.constant 0 : index
    %121 = vector.load %arg3[%c3_62, %c0_63, %c0_64] : memref<9x1x128xf32, #tpu.memory_space<vmem>>, vector<1x1x128xf32>
    %122 = vector.shape_cast %121 : vector<1x1x128xf32> to vector<1x128xf32>
    %123 = vector.broadcast %122 : vector<1x128xf32> to vector<4x128xf32>
    %124 = arith.mulf %120, %123 : vector<4x128xf32>
    %c4_65 = arith.constant 4 : index
    %c0_66 = arith.constant 0 : index
    %c0_67 = arith.constant 0 : index
    %125 = vector.load %arg3[%c4_65, %c0_66, %c0_67] : memref<9x1x128xf32, #tpu.memory_space<vmem>>, vector<1x1x128xf32>
    %126 = vector.shape_cast %125 : vector<1x1x128xf32> to vector<1x128xf32>
    %127 = vector.broadcast %126 : vector<1x128xf32> to vector<4x128xf32>
    %128 = arith.mulf %104, %127 : vector<4x128xf32>
    %c127_i32 = arith.constant 127 : i32
    %129 = tpu.dynamic_rotate %104 by %c127_i32 dim 1 : vector<4x128xf32>, i32 -> vector<4x128xf32>
    %c5_68 = arith.constant 5 : index
    %c0_69 = arith.constant 0 : index
    %c0_70 = arith.constant 0 : index
    %130 = vector.load %arg3[%c5_68, %c0_69, %c0_70] : memref<9x1x128xf32, #tpu.memory_space<vmem>>, vector<1x1x128xf32>
    %131 = vector.shape_cast %130 : vector<1x1x128xf32> to vector<1x128xf32>
    %132 = vector.broadcast %131 : vector<1x128xf32> to vector<4x128xf32>
    %133 = arith.mulf %129, %132 : vector<4x128xf32>
    %c121_i32 = arith.constant 121 : i32
    %134 = tpu.dynamic_rotate %104 by %c121_i32 dim 1 : vector<4x128xf32>, i32 -> vector<4x128xf32>
    %c6_71 = arith.constant 6 : index
    %c0_72 = arith.constant 0 : index
    %c0_73 = arith.constant 0 : index
    %135 = vector.load %arg3[%c6_71, %c0_72, %c0_73] : memref<9x1x128xf32, #tpu.memory_space<vmem>>, vector<1x1x128xf32>
    %136 = vector.shape_cast %135 : vector<1x1x128xf32> to vector<1x128xf32>
    %137 = vector.broadcast %136 : vector<1x128xf32> to vector<4x128xf32>
    %138 = arith.mulf %134, %137 : vector<4x128xf32>
    %c120_i32 = arith.constant 120 : i32
    %139 = tpu.dynamic_rotate %104 by %c120_i32 dim 1 : vector<4x128xf32>, i32 -> vector<4x128xf32>
    %c7_74 = arith.constant 7 : index
    %c0_75 = arith.constant 0 : index
    %c0_76 = arith.constant 0 : index
    %140 = vector.load %arg3[%c7_74, %c0_75, %c0_76] : memref<9x1x128xf32, #tpu.memory_space<vmem>>, vector<1x1x128xf32>
    %141 = vector.shape_cast %140 : vector<1x1x128xf32> to vector<1x128xf32>
    %142 = vector.broadcast %141 : vector<1x128xf32> to vector<4x128xf32>
    %143 = arith.mulf %139, %142 : vector<4x128xf32>
    %c119_i32 = arith.constant 119 : i32
    %144 = tpu.dynamic_rotate %104 by %c119_i32 dim 1 : vector<4x128xf32>, i32 -> vector<4x128xf32>
    %c8_77 = arith.constant 8 : index
    %c0_78 = arith.constant 0 : index
    %c0_79 = arith.constant 0 : index
    %145 = vector.load %arg3[%c8_77, %c0_78, %c0_79] : memref<9x1x128xf32, #tpu.memory_space<vmem>>, vector<1x1x128xf32>
    %146 = vector.shape_cast %145 : vector<1x1x128xf32> to vector<1x128xf32>
    %147 = vector.broadcast %146 : vector<1x128xf32> to vector<4x128xf32>
    %148 = arith.mulf %144, %147 : vector<4x128xf32>
    %149 = tpu.concatenate %109, %114, %119, %124, %128, %133, %138, %143, %148 in 0 : vector<4x128xf32>, vector<4x128xf32>, vector<4x128xf32>, vector<4x128xf32>, vector<4x128xf32>, vector<4x128xf32>, vector<4x128xf32>, vector<4x128xf32>, vector<4x128xf32> -> vector<36x128xf32>
    %c0_80 = arith.constant 0 : index
    %c0_81 = arith.constant 0 : index
    %150 = vector.load %arg13[%c0_80, %c0_81] : memref<8x36xbf16, #tpu.memory_space<vmem>>, vector<8x36xbf16>
    %151 = arith.truncf %149 : vector<36x128xf32> to vector<36x128xbf16>
    %cst_82 = arith.constant dense<0.000000e+00> : vector<8x128xf32>
    %152 = tpu.matmul %150, %151, %cst_82 {dimension_numbers = #tpu.dot_dimension_numbers<[1], [0], [0], [1], [0, 0, 1, 1], [], []>} : vector<8x36xbf16>, vector<36x128xbf16>, vector<8x128xf32> -> vector<8x128xf32>
    %cst_83 = arith.constant 0.000000e+00 : f32
    %153 = vector.broadcast %cst_83 : f32 to vector<8x128xf32>
    %c0_84 = arith.constant 0 : index
    %c0_85 = arith.constant 0 : index
    %c0_86 = arith.constant 0 : index
    %154 = vector.load %arg6[%c0_84, %c0_85, %c0_86] : memref<2x1x128xf32, #tpu.memory_space<vmem>>, vector<1x1x128xf32>
    %155 = vector.shape_cast %154 : vector<1x1x128xf32> to vector<1x128xf32>
    %156 = vector.broadcast %155 : vector<1x128xf32> to vector<8x128xf32>
    %157 = arith.mulf %152, %156 : vector<8x128xf32>
    %cst_87 = arith.constant dense<0.000000e+00> : vector<8xf32>
    %158 = vector.multi_reduction <add>, %157, %cst_87 [1] : vector<8x128xf32> to vector<8xf32>
    %159 = vector.shape_cast %158 : vector<8xf32> to vector<8x1xf32>
    %cst_88 = arith.constant 1.562500e-02 : f32
    %160 = vector.broadcast %cst_88 : f32 to vector<8x1xf32>
    %161 = arith.mulf %159, %160 : vector<8x1xf32>
    %162 = vector.broadcast %161 : vector<8x1xf32> to vector<8x128xf32>
    %163 = vector.broadcast %155 : vector<1x128xf32> to vector<8x128xf32>
    %164 = arith.mulf %162, %163 : vector<8x128xf32>
    %165 = arith.addf %153, %164 : vector<8x128xf32>
    %c1_89 = arith.constant 1 : index
    %c0_90 = arith.constant 0 : index
    %c0_91 = arith.constant 0 : index
    %166 = vector.load %arg6[%c1_89, %c0_90, %c0_91] : memref<2x1x128xf32, #tpu.memory_space<vmem>>, vector<1x1x128xf32>
    %167 = vector.shape_cast %166 : vector<1x1x128xf32> to vector<1x128xf32>
    %168 = vector.broadcast %167 : vector<1x128xf32> to vector<8x128xf32>
    %169 = arith.mulf %152, %168 : vector<8x128xf32>
    %cst_92 = arith.constant dense<0.000000e+00> : vector<8xf32>
    %170 = vector.multi_reduction <add>, %169, %cst_92 [1] : vector<8x128xf32> to vector<8xf32>
    %171 = vector.shape_cast %170 : vector<8xf32> to vector<8x1xf32>
    %cst_93 = arith.constant 1.562500e-02 : f32
    %172 = vector.broadcast %cst_93 : f32 to vector<8x1xf32>
    %173 = arith.mulf %171, %172 : vector<8x1xf32>
    %174 = vector.broadcast %173 : vector<8x1xf32> to vector<8x128xf32>
    %175 = vector.broadcast %167 : vector<1x128xf32> to vector<8x128xf32>
    %176 = arith.mulf %174, %175 : vector<8x128xf32>
    %177 = arith.addf %165, %176 : vector<8x128xf32>
    %178 = arith.subf %152, %177 : vector<8x128xf32>
    %179 = arith.mulf %178, %178 : vector<8x128xf32>
    %cst_94 = arith.constant 0.000000e+00 : f32
    %180 = vector.broadcast %cst_94 : f32 to vector<8x128xf32>
    %c0_95 = arith.constant 0 : index
    %c0_96 = arith.constant 0 : index
    %c0_97 = arith.constant 0 : index
    %181 = vector.load %arg6[%c0_95, %c0_96, %c0_97] : memref<2x1x128xf32, #tpu.memory_space<vmem>>, vector<1x1x128xf32>
    %182 = vector.shape_cast %181 : vector<1x1x128xf32> to vector<1x128xf32>
    %183 = vector.broadcast %182 : vector<1x128xf32> to vector<8x128xf32>
    %184 = arith.mulf %179, %183 : vector<8x128xf32>
    %cst_98 = arith.constant dense<0.000000e+00> : vector<8xf32>
    %185 = vector.multi_reduction <add>, %184, %cst_98 [1] : vector<8x128xf32> to vector<8xf32>
    %186 = vector.shape_cast %185 : vector<8xf32> to vector<8x1xf32>
    %cst_99 = arith.constant 1.562500e-02 : f32
    %187 = vector.broadcast %cst_99 : f32 to vector<8x1xf32>
    %188 = arith.mulf %186, %187 : vector<8x1xf32>
    %189 = vector.broadcast %188 : vector<8x1xf32> to vector<8x128xf32>
    %190 = vector.broadcast %182 : vector<1x128xf32> to vector<8x128xf32>
    %191 = arith.mulf %189, %190 : vector<8x128xf32>
    %192 = arith.addf %180, %191 : vector<8x128xf32>
    %c1_100 = arith.constant 1 : index
    %c0_101 = arith.constant 0 : index
    %c0_102 = arith.constant 0 : index
    %193 = vector.load %arg6[%c1_100, %c0_101, %c0_102] : memref<2x1x128xf32, #tpu.memory_space<vmem>>, vector<1x1x128xf32>
    %194 = vector.shape_cast %193 : vector<1x1x128xf32> to vector<1x128xf32>
    %195 = vector.broadcast %194 : vector<1x128xf32> to vector<8x128xf32>
    %196 = arith.mulf %179, %195 : vector<8x128xf32>
    %cst_103 = arith.constant dense<0.000000e+00> : vector<8xf32>
    %197 = vector.multi_reduction <add>, %196, %cst_103 [1] : vector<8x128xf32> to vector<8xf32>
    %198 = vector.shape_cast %197 : vector<8xf32> to vector<8x1xf32>
    %cst_104 = arith.constant 1.562500e-02 : f32
    %199 = vector.broadcast %cst_104 : f32 to vector<8x1xf32>
    %200 = arith.mulf %198, %199 : vector<8x1xf32>
    %201 = vector.broadcast %200 : vector<8x1xf32> to vector<8x128xf32>
    %202 = vector.broadcast %194 : vector<1x128xf32> to vector<8x128xf32>
    %203 = arith.mulf %201, %202 : vector<8x128xf32>
    %204 = arith.addf %192, %203 : vector<8x128xf32>
    %cst_105 = arith.constant 9.99999974E-6 : f32
    %205 = vector.broadcast %cst_105 : f32 to vector<8x128xf32>
    %206 = arith.addf %204, %205 : vector<8x128xf32>
    %207 = math.rsqrt %206 : vector<8x128xf32>
    %208 = arith.mulf %178, %207 : vector<8x128xf32>
    %cst_106 = arith.constant 0.000000e+00 : f32
    %209 = vector.broadcast %cst_106 : f32 to vector<8x128xf32>
    %210 = arith.maximumf %208, %209 : vector<8x128xf32>
    %c127_i32_107 = arith.constant 127 : i32
    %211 = tpu.dynamic_rotate %210 by %c127_i32_107 dim 1 : vector<8x128xf32>, i32 -> vector<8x128xf32>
    %212 = arith.maximumf %210, %211 : vector<8x128xf32>
    %c120_i32_108 = arith.constant 120 : i32
    %213 = tpu.dynamic_rotate %212 by %c120_i32_108 dim 1 : vector<8x128xf32>, i32 -> vector<8x128xf32>
    %214 = arith.maximumf %212, %213 : vector<8x128xf32>
    %c0_109 = arith.constant 0 : index
    %c0_110 = arith.constant 0 : index
    %215 = vector.load %arg9[%c0_109, %c0_110] : memref<128x128xf32, #tpu.memory_space<vmem>>, vector<128x128xf32>
    %cst_111 = arith.constant dense<0.000000e+00> : vector<8x128xf32>
    %216 = tpu.matmul %214, %215, %cst_111 {dimension_numbers = #tpu.dot_dimension_numbers<[1], [0], [0], [1], [0, 0, 1, 1], [], []>} : vector<8x128xf32>, vector<128x128xf32>, vector<8x128xf32> -> vector<8x128xf32>
    %c5_i32 = arith.constant 5 : i32
    %217 = tpu.dynamic_rotate %216 by %c5_i32 dim 1 : vector<8x128xf32>, i32 -> vector<8x128xf32>
    %c0_112 = arith.constant 0 : index
    %c0_113 = arith.constant 0 : index
    %c0_114 = arith.constant 0 : index
    %218 = vector.load %arg4[%c0_112, %c0_113, %c0_114] : memref<9x1x128xf32, #tpu.memory_space<vmem>>, vector<1x1x128xf32>
    %219 = vector.shape_cast %218 : vector<1x1x128xf32> to vector<1x128xf32>
    %220 = vector.broadcast %219 : vector<1x128xf32> to vector<8x128xf32>
    %221 = arith.mulf %217, %220 : vector<8x128xf32>
    %c4_i32 = arith.constant 4 : i32
    %222 = tpu.dynamic_rotate %216 by %c4_i32 dim 1 : vector<8x128xf32>, i32 -> vector<8x128xf32>
    %c1_115 = arith.constant 1 : index
    %c0_116 = arith.constant 0 : index
    %c0_117 = arith.constant 0 : index
    %223 = vector.load %arg4[%c1_115, %c0_116, %c0_117] : memref<9x1x128xf32, #tpu.memory_space<vmem>>, vector<1x1x128xf32>
    %224 = vector.shape_cast %223 : vector<1x1x128xf32> to vector<1x128xf32>
    %225 = vector.broadcast %224 : vector<1x128xf32> to vector<8x128xf32>
    %226 = arith.mulf %222, %225 : vector<8x128xf32>
    %c3_i32 = arith.constant 3 : i32
    %227 = tpu.dynamic_rotate %216 by %c3_i32 dim 1 : vector<8x128xf32>, i32 -> vector<8x128xf32>
    %c2_118 = arith.constant 2 : index
    %c0_119 = arith.constant 0 : index
    %c0_120 = arith.constant 0 : index
    %228 = vector.load %arg4[%c2_118, %c0_119, %c0_120] : memref<9x1x128xf32, #tpu.memory_space<vmem>>, vector<1x1x128xf32>
    %229 = vector.shape_cast %228 : vector<1x1x128xf32> to vector<1x128xf32>
    %230 = vector.broadcast %229 : vector<1x128xf32> to vector<8x128xf32>
    %231 = arith.mulf %227, %230 : vector<8x128xf32>
    %c1_i32_121 = arith.constant 1 : i32
    %232 = tpu.dynamic_rotate %216 by %c1_i32_121 dim 1 : vector<8x128xf32>, i32 -> vector<8x128xf32>
    %c3_122 = arith.constant 3 : index
    %c0_123 = arith.constant 0 : index
    %c0_124 = arith.constant 0 : index
    %233 = vector.load %arg4[%c3_122, %c0_123, %c0_124] : memref<9x1x128xf32, #tpu.memory_space<vmem>>, vector<1x1x128xf32>
    %234 = vector.shape_cast %233 : vector<1x1x128xf32> to vector<1x128xf32>
    %235 = vector.broadcast %234 : vector<1x128xf32> to vector<8x128xf32>
    %236 = arith.mulf %232, %235 : vector<8x128xf32>
    %c4_125 = arith.constant 4 : index
    %c0_126 = arith.constant 0 : index
    %c0_127 = arith.constant 0 : index
    %237 = vector.load %arg4[%c4_125, %c0_126, %c0_127] : memref<9x1x128xf32, #tpu.memory_space<vmem>>, vector<1x1x128xf32>
    %238 = vector.shape_cast %237 : vector<1x1x128xf32> to vector<1x128xf32>
    %239 = vector.broadcast %238 : vector<1x128xf32> to vector<8x128xf32>
    %240 = arith.mulf %216, %239 : vector<8x128xf32>
    %c127_i32_128 = arith.constant 127 : i32
    %241 = tpu.dynamic_rotate %216 by %c127_i32_128 dim 1 : vector<8x128xf32>, i32 -> vector<8x128xf32>
    %c5_129 = arith.constant 5 : index
    %c0_130 = arith.constant 0 : index
    %c0_131 = arith.constant 0 : index
    %242 = vector.load %arg4[%c5_129, %c0_130, %c0_131] : memref<9x1x128xf32, #tpu.memory_space<vmem>>, vector<1x1x128xf32>
    %243 = vector.shape_cast %242 : vector<1x1x128xf32> to vector<1x128xf32>
    %244 = vector.broadcast %243 : vector<1x128xf32> to vector<8x128xf32>
    %245 = arith.mulf %241, %244 : vector<8x128xf32>
    %c125_i32 = arith.constant 125 : i32
    %246 = tpu.dynamic_rotate %216 by %c125_i32 dim 1 : vector<8x128xf32>, i32 -> vector<8x128xf32>
    %c6_132 = arith.constant 6 : index
    %c0_133 = arith.constant 0 : index
    %c0_134 = arith.constant 0 : index
    %247 = vector.load %arg4[%c6_132, %c0_133, %c0_134] : memref<9x1x128xf32, #tpu.memory_space<vmem>>, vector<1x1x128xf32>
    %248 = vector.shape_cast %247 : vector<1x1x128xf32> to vector<1x128xf32>
    %249 = vector.broadcast %248 : vector<1x128xf32> to vector<8x128xf32>
    %250 = arith.mulf %246, %249 : vector<8x128xf32>
    %c124_i32 = arith.constant 124 : i32
    %251 = tpu.dynamic_rotate %216 by %c124_i32 dim 1 : vector<8x128xf32>, i32 -> vector<8x128xf32>
    %c7_135 = arith.constant 7 : index
    %c0_136 = arith.constant 0 : index
    %c0_137 = arith.constant 0 : index
    %252 = vector.load %arg4[%c7_135, %c0_136, %c0_137] : memref<9x1x128xf32, #tpu.memory_space<vmem>>, vector<1x1x128xf32>
    %253 = vector.shape_cast %252 : vector<1x1x128xf32> to vector<1x128xf32>
    %254 = vector.broadcast %253 : vector<1x128xf32> to vector<8x128xf32>
    %255 = arith.mulf %251, %254 : vector<8x128xf32>
    %c123_i32 = arith.constant 123 : i32
    %256 = tpu.dynamic_rotate %216 by %c123_i32 dim 1 : vector<8x128xf32>, i32 -> vector<8x128xf32>
    %c8_138 = arith.constant 8 : index
    %c0_139 = arith.constant 0 : index
    %c0_140 = arith.constant 0 : index
    %257 = vector.load %arg4[%c8_138, %c0_139, %c0_140] : memref<9x1x128xf32, #tpu.memory_space<vmem>>, vector<1x1x128xf32>
    %258 = vector.shape_cast %257 : vector<1x1x128xf32> to vector<1x128xf32>
    %259 = vector.broadcast %258 : vector<1x128xf32> to vector<8x128xf32>
    %260 = arith.mulf %256, %259 : vector<8x128xf32>
    %261 = tpu.concatenate %221, %226, %231, %236, %240, %245, %250, %255, %260 in 0 : vector<8x128xf32>, vector<8x128xf32>, vector<8x128xf32>, vector<8x128xf32>, vector<8x128xf32>, vector<8x128xf32>, vector<8x128xf32>, vector<8x128xf32>, vector<8x128xf32> -> vector<72x128xf32>
    %c0_141 = arith.constant 0 : index
    %c0_142 = arith.constant 0 : index
    %262 = vector.load %arg14[%c0_141, %c0_142] : memref<8x72xbf16, #tpu.memory_space<vmem>>, vector<8x72xbf16>
    %263 = arith.truncf %261 : vector<72x128xf32> to vector<72x128xbf16>
    %cst_143 = arith.constant dense<0.000000e+00> : vector<8x128xf32>
    %264 = tpu.matmul %262, %263, %cst_143 {dimension_numbers = #tpu.dot_dimension_numbers<[1], [0], [0], [1], [0, 0, 1, 1], [], []>} : vector<8x72xbf16>, vector<72x128xbf16>, vector<8x128xf32> -> vector<8x128xf32>
    %cst_144 = arith.constant 0.000000e+00 : f32
    %265 = vector.broadcast %cst_144 : f32 to vector<8x128xf32>
    %c0_145 = arith.constant 0 : index
    %c0_146 = arith.constant 0 : index
    %c0_147 = arith.constant 0 : index
    %266 = vector.load %arg7[%c0_145, %c0_146, %c0_147] : memref<2x1x128xf32, #tpu.memory_space<vmem>>, vector<1x1x128xf32>
    %267 = vector.shape_cast %266 : vector<1x1x128xf32> to vector<1x128xf32>
    %268 = vector.broadcast %267 : vector<1x128xf32> to vector<8x128xf32>
    %269 = arith.mulf %264, %268 : vector<8x128xf32>
    %cst_148 = arith.constant dense<0.000000e+00> : vector<8xf32>
    %270 = vector.multi_reduction <add>, %269, %cst_148 [1] : vector<8x128xf32> to vector<8xf32>
    %271 = vector.shape_cast %270 : vector<8xf32> to vector<8x1xf32>
    %cst_149 = arith.constant 6.250000e-02 : f32
    %272 = vector.broadcast %cst_149 : f32 to vector<8x1xf32>
    %273 = arith.mulf %271, %272 : vector<8x1xf32>
    %274 = vector.broadcast %273 : vector<8x1xf32> to vector<8x128xf32>
    %275 = vector.broadcast %267 : vector<1x128xf32> to vector<8x128xf32>
    %276 = arith.mulf %274, %275 : vector<8x128xf32>
    %277 = arith.addf %265, %276 : vector<8x128xf32>
    %c1_150 = arith.constant 1 : index
    %c0_151 = arith.constant 0 : index
    %c0_152 = arith.constant 0 : index
    %278 = vector.load %arg7[%c1_150, %c0_151, %c0_152] : memref<2x1x128xf32, #tpu.memory_space<vmem>>, vector<1x1x128xf32>
    %279 = vector.shape_cast %278 : vector<1x1x128xf32> to vector<1x128xf32>
    %280 = vector.broadcast %279 : vector<1x128xf32> to vector<8x128xf32>
    %281 = arith.mulf %264, %280 : vector<8x128xf32>
    %cst_153 = arith.constant dense<0.000000e+00> : vector<8xf32>
    %282 = vector.multi_reduction <add>, %281, %cst_153 [1] : vector<8x128xf32> to vector<8xf32>
    %283 = vector.shape_cast %282 : vector<8xf32> to vector<8x1xf32>
    %cst_154 = arith.constant 6.250000e-02 : f32
    %284 = vector.broadcast %cst_154 : f32 to vector<8x1xf32>
    %285 = arith.mulf %283, %284 : vector<8x1xf32>
    %286 = vector.broadcast %285 : vector<8x1xf32> to vector<8x128xf32>
    %287 = vector.broadcast %279 : vector<1x128xf32> to vector<8x128xf32>
    %288 = arith.mulf %286, %287 : vector<8x128xf32>
    %289 = arith.addf %277, %288 : vector<8x128xf32>
    %290 = arith.subf %264, %289 : vector<8x128xf32>
    %291 = arith.mulf %290, %290 : vector<8x128xf32>
    %cst_155 = arith.constant 0.000000e+00 : f32
    %292 = vector.broadcast %cst_155 : f32 to vector<8x128xf32>
    %c0_156 = arith.constant 0 : index
    %c0_157 = arith.constant 0 : index
    %c0_158 = arith.constant 0 : index
    %293 = vector.load %arg7[%c0_156, %c0_157, %c0_158] : memref<2x1x128xf32, #tpu.memory_space<vmem>>, vector<1x1x128xf32>
    %294 = vector.shape_cast %293 : vector<1x1x128xf32> to vector<1x128xf32>
    %295 = vector.broadcast %294 : vector<1x128xf32> to vector<8x128xf32>
    %296 = arith.mulf %291, %295 : vector<8x128xf32>
    %cst_159 = arith.constant dense<0.000000e+00> : vector<8xf32>
    %297 = vector.multi_reduction <add>, %296, %cst_159 [1] : vector<8x128xf32> to vector<8xf32>
    %298 = vector.shape_cast %297 : vector<8xf32> to vector<8x1xf32>
    %cst_160 = arith.constant 6.250000e-02 : f32
    %299 = vector.broadcast %cst_160 : f32 to vector<8x1xf32>
    %300 = arith.mulf %298, %299 : vector<8x1xf32>
    %301 = vector.broadcast %300 : vector<8x1xf32> to vector<8x128xf32>
    %302 = vector.broadcast %294 : vector<1x128xf32> to vector<8x128xf32>
    %303 = arith.mulf %301, %302 : vector<8x128xf32>
    %304 = arith.addf %292, %303 : vector<8x128xf32>
    %c1_161 = arith.constant 1 : index
    %c0_162 = arith.constant 0 : index
    %c0_163 = arith.constant 0 : index
    %305 = vector.load %arg7[%c1_161, %c0_162, %c0_163] : memref<2x1x128xf32, #tpu.memory_space<vmem>>, vector<1x1x128xf32>
    %306 = vector.shape_cast %305 : vector<1x1x128xf32> to vector<1x128xf32>
    %307 = vector.broadcast %306 : vector<1x128xf32> to vector<8x128xf32>
    %308 = arith.mulf %291, %307 : vector<8x128xf32>
    %cst_164 = arith.constant dense<0.000000e+00> : vector<8xf32>
    %309 = vector.multi_reduction <add>, %308, %cst_164 [1] : vector<8x128xf32> to vector<8xf32>
    %310 = vector.shape_cast %309 : vector<8xf32> to vector<8x1xf32>
    %cst_165 = arith.constant 6.250000e-02 : f32
    %311 = vector.broadcast %cst_165 : f32 to vector<8x1xf32>
    %312 = arith.mulf %310, %311 : vector<8x1xf32>
    %313 = vector.broadcast %312 : vector<8x1xf32> to vector<8x128xf32>
    %314 = vector.broadcast %306 : vector<1x128xf32> to vector<8x128xf32>
    %315 = arith.mulf %313, %314 : vector<8x128xf32>
    %316 = arith.addf %304, %315 : vector<8x128xf32>
    %cst_166 = arith.constant 9.99999974E-6 : f32
    %317 = vector.broadcast %cst_166 : f32 to vector<8x128xf32>
    %318 = arith.addf %316, %317 : vector<8x128xf32>
    %319 = math.rsqrt %318 : vector<8x128xf32>
    %320 = arith.mulf %290, %319 : vector<8x128xf32>
    %cst_167 = arith.constant 0.000000e+00 : f32
    %321 = vector.broadcast %cst_167 : f32 to vector<8x128xf32>
    %322 = arith.maximumf %320, %321 : vector<8x128xf32>
    %c0_168 = arith.constant 0 : index
    %c0_169 = arith.constant 0 : index
    %323 = vector.load %arg11[%c0_168, %c0_169] : memref<128x128xf32, #tpu.memory_space<vmem>>, vector<128x128xf32>
    %cst_170 = arith.constant dense<0.000000e+00> : vector<8x128xf32>
    %324 = tpu.matmul %322, %323, %cst_170 {dimension_numbers = #tpu.dot_dimension_numbers<[1], [0], [0], [1], [0, 0, 1, 1], [], []>} : vector<8x128xf32>, vector<128x128xf32>, vector<8x128xf32> -> vector<8x128xf32>
    %325 = tpu.concatenate %324, %210 in 0 : vector<8x128xf32>, vector<8x128xf32> -> vector<16x128xf32>
    %c9_i32_171 = arith.constant 9 : i32
    %326 = tpu.dynamic_rotate %325 by %c9_i32_171 dim 1 : vector<16x128xf32>, i32 -> vector<16x128xf32>
    %c0_172 = arith.constant 0 : index
    %c0_173 = arith.constant 0 : index
    %c0_174 = arith.constant 0 : index
    %327 = vector.load %arg3[%c0_172, %c0_173, %c0_174] : memref<9x1x128xf32, #tpu.memory_space<vmem>>, vector<1x1x128xf32>
    %328 = vector.shape_cast %327 : vector<1x1x128xf32> to vector<1x128xf32>
    %329 = vector.broadcast %328 : vector<1x128xf32> to vector<16x128xf32>
    %330 = arith.mulf %326, %329 : vector<16x128xf32>
    %c8_i32_175 = arith.constant 8 : i32
    %331 = tpu.dynamic_rotate %325 by %c8_i32_175 dim 1 : vector<16x128xf32>, i32 -> vector<16x128xf32>
    %c1_176 = arith.constant 1 : index
    %c0_177 = arith.constant 0 : index
    %c0_178 = arith.constant 0 : index
    %332 = vector.load %arg3[%c1_176, %c0_177, %c0_178] : memref<9x1x128xf32, #tpu.memory_space<vmem>>, vector<1x1x128xf32>
    %333 = vector.shape_cast %332 : vector<1x1x128xf32> to vector<1x128xf32>
    %334 = vector.broadcast %333 : vector<1x128xf32> to vector<16x128xf32>
    %335 = arith.mulf %331, %334 : vector<16x128xf32>
    %c7_i32_179 = arith.constant 7 : i32
    %336 = tpu.dynamic_rotate %325 by %c7_i32_179 dim 1 : vector<16x128xf32>, i32 -> vector<16x128xf32>
    %c2_180 = arith.constant 2 : index
    %c0_181 = arith.constant 0 : index
    %c0_182 = arith.constant 0 : index
    %337 = vector.load %arg3[%c2_180, %c0_181, %c0_182] : memref<9x1x128xf32, #tpu.memory_space<vmem>>, vector<1x1x128xf32>
    %338 = vector.shape_cast %337 : vector<1x1x128xf32> to vector<1x128xf32>
    %339 = vector.broadcast %338 : vector<1x128xf32> to vector<16x128xf32>
    %340 = arith.mulf %336, %339 : vector<16x128xf32>
    %c1_i32_183 = arith.constant 1 : i32
    %341 = tpu.dynamic_rotate %325 by %c1_i32_183 dim 1 : vector<16x128xf32>, i32 -> vector<16x128xf32>
    %c3_184 = arith.constant 3 : index
    %c0_185 = arith.constant 0 : index
    %c0_186 = arith.constant 0 : index
    %342 = vector.load %arg3[%c3_184, %c0_185, %c0_186] : memref<9x1x128xf32, #tpu.memory_space<vmem>>, vector<1x1x128xf32>
    %343 = vector.shape_cast %342 : vector<1x1x128xf32> to vector<1x128xf32>
    %344 = vector.broadcast %343 : vector<1x128xf32> to vector<16x128xf32>
    %345 = arith.mulf %341, %344 : vector<16x128xf32>
    %c4_187 = arith.constant 4 : index
    %c0_188 = arith.constant 0 : index
    %c0_189 = arith.constant 0 : index
    %346 = vector.load %arg3[%c4_187, %c0_188, %c0_189] : memref<9x1x128xf32, #tpu.memory_space<vmem>>, vector<1x1x128xf32>
    %347 = vector.shape_cast %346 : vector<1x1x128xf32> to vector<1x128xf32>
    %348 = vector.broadcast %347 : vector<1x128xf32> to vector<16x128xf32>
    %349 = arith.mulf %325, %348 : vector<16x128xf32>
    %c127_i32_190 = arith.constant 127 : i32
    %350 = tpu.dynamic_rotate %325 by %c127_i32_190 dim 1 : vector<16x128xf32>, i32 -> vector<16x128xf32>
    %c5_191 = arith.constant 5 : index
    %c0_192 = arith.constant 0 : index
    %c0_193 = arith.constant 0 : index
    %351 = vector.load %arg3[%c5_191, %c0_192, %c0_193] : memref<9x1x128xf32, #tpu.memory_space<vmem>>, vector<1x1x128xf32>
    %352 = vector.shape_cast %351 : vector<1x1x128xf32> to vector<1x128xf32>
    %353 = vector.broadcast %352 : vector<1x128xf32> to vector<16x128xf32>
    %354 = arith.mulf %350, %353 : vector<16x128xf32>
    %c121_i32_194 = arith.constant 121 : i32
    %355 = tpu.dynamic_rotate %325 by %c121_i32_194 dim 1 : vector<16x128xf32>, i32 -> vector<16x128xf32>
    %c6_195 = arith.constant 6 : index
    %c0_196 = arith.constant 0 : index
    %c0_197 = arith.constant 0 : index
    %356 = vector.load %arg3[%c6_195, %c0_196, %c0_197] : memref<9x1x128xf32, #tpu.memory_space<vmem>>, vector<1x1x128xf32>
    %357 = vector.shape_cast %356 : vector<1x1x128xf32> to vector<1x128xf32>
    %358 = vector.broadcast %357 : vector<1x128xf32> to vector<16x128xf32>
    %359 = arith.mulf %355, %358 : vector<16x128xf32>
    %c120_i32_198 = arith.constant 120 : i32
    %360 = tpu.dynamic_rotate %325 by %c120_i32_198 dim 1 : vector<16x128xf32>, i32 -> vector<16x128xf32>
    %c7_199 = arith.constant 7 : index
    %c0_200 = arith.constant 0 : index
    %c0_201 = arith.constant 0 : index
    %361 = vector.load %arg3[%c7_199, %c0_200, %c0_201] : memref<9x1x128xf32, #tpu.memory_space<vmem>>, vector<1x1x128xf32>
    %362 = vector.shape_cast %361 : vector<1x1x128xf32> to vector<1x128xf32>
    %363 = vector.broadcast %362 : vector<1x128xf32> to vector<16x128xf32>
    %364 = arith.mulf %360, %363 : vector<16x128xf32>
    %c119_i32_202 = arith.constant 119 : i32
    %365 = tpu.dynamic_rotate %325 by %c119_i32_202 dim 1 : vector<16x128xf32>, i32 -> vector<16x128xf32>
    %c8_203 = arith.constant 8 : index
    %c0_204 = arith.constant 0 : index
    %c0_205 = arith.constant 0 : index
    %366 = vector.load %arg3[%c8_203, %c0_204, %c0_205] : memref<9x1x128xf32, #tpu.memory_space<vmem>>, vector<1x1x128xf32>
    %367 = vector.shape_cast %366 : vector<1x1x128xf32> to vector<1x128xf32>
    %368 = vector.broadcast %367 : vector<1x128xf32> to vector<16x128xf32>
    %369 = arith.mulf %365, %368 : vector<16x128xf32>
    %370 = tpu.concatenate %330, %335, %340, %345, %349, %354, %359, %364, %369 in 0 : vector<16x128xf32>, vector<16x128xf32>, vector<16x128xf32>, vector<16x128xf32>, vector<16x128xf32>, vector<16x128xf32>, vector<16x128xf32>, vector<16x128xf32>, vector<16x128xf32> -> vector<144x128xf32>
    %c0_206 = arith.constant 0 : index
    %c0_207 = arith.constant 0 : index
    %371 = vector.load %arg15[%c0_206, %c0_207] : memref<4x144xbf16, #tpu.memory_space<vmem>>, vector<4x144xbf16>
    %372 = arith.truncf %370 : vector<144x128xf32> to vector<144x128xbf16>
    %cst_208 = arith.constant dense<0.000000e+00> : vector<4x128xf32>
    %373 = tpu.matmul %371, %372, %cst_208 {dimension_numbers = #tpu.dot_dimension_numbers<[1], [0], [0], [1], [0, 0, 1, 1], [], []>} : vector<4x144xbf16>, vector<144x128xbf16>, vector<4x128xf32> -> vector<4x128xf32>
    %cst_209 = arith.constant 0.000000e+00 : f32
    %374 = vector.broadcast %cst_209 : f32 to vector<4x128xf32>
    %c0_210 = arith.constant 0 : index
    %c0_211 = arith.constant 0 : index
    %c0_212 = arith.constant 0 : index
    %375 = vector.load %arg6[%c0_210, %c0_211, %c0_212] : memref<2x1x128xf32, #tpu.memory_space<vmem>>, vector<1x1x128xf32>
    %376 = vector.shape_cast %375 : vector<1x1x128xf32> to vector<1x128xf32>
    %377 = vector.broadcast %376 : vector<1x128xf32> to vector<4x128xf32>
    %378 = arith.mulf %373, %377 : vector<4x128xf32>
    %cst_213 = arith.constant dense<0.000000e+00> : vector<4xf32>
    %379 = vector.multi_reduction <add>, %378, %cst_213 [1] : vector<4x128xf32> to vector<4xf32>
    %380 = vector.shape_cast %379 : vector<4xf32> to vector<4x1xf32>
    %cst_214 = arith.constant 1.562500e-02 : f32
    %381 = vector.broadcast %cst_214 : f32 to vector<4x1xf32>
    %382 = arith.mulf %380, %381 : vector<4x1xf32>
    %383 = vector.broadcast %382 : vector<4x1xf32> to vector<4x128xf32>
    %384 = vector.broadcast %376 : vector<1x128xf32> to vector<4x128xf32>
    %385 = arith.mulf %383, %384 : vector<4x128xf32>
    %386 = arith.addf %374, %385 : vector<4x128xf32>
    %c1_215 = arith.constant 1 : index
    %c0_216 = arith.constant 0 : index
    %c0_217 = arith.constant 0 : index
    %387 = vector.load %arg6[%c1_215, %c0_216, %c0_217] : memref<2x1x128xf32, #tpu.memory_space<vmem>>, vector<1x1x128xf32>
    %388 = vector.shape_cast %387 : vector<1x1x128xf32> to vector<1x128xf32>
    %389 = vector.broadcast %388 : vector<1x128xf32> to vector<4x128xf32>
    %390 = arith.mulf %373, %389 : vector<4x128xf32>
    %cst_218 = arith.constant dense<0.000000e+00> : vector<4xf32>
    %391 = vector.multi_reduction <add>, %390, %cst_218 [1] : vector<4x128xf32> to vector<4xf32>
    %392 = vector.shape_cast %391 : vector<4xf32> to vector<4x1xf32>
    %cst_219 = arith.constant 1.562500e-02 : f32
    %393 = vector.broadcast %cst_219 : f32 to vector<4x1xf32>
    %394 = arith.mulf %392, %393 : vector<4x1xf32>
    %395 = vector.broadcast %394 : vector<4x1xf32> to vector<4x128xf32>
    %396 = vector.broadcast %388 : vector<1x128xf32> to vector<4x128xf32>
    %397 = arith.mulf %395, %396 : vector<4x128xf32>
    %398 = arith.addf %386, %397 : vector<4x128xf32>
    %399 = arith.subf %373, %398 : vector<4x128xf32>
    %400 = arith.mulf %399, %399 : vector<4x128xf32>
    %cst_220 = arith.constant 0.000000e+00 : f32
    %401 = vector.broadcast %cst_220 : f32 to vector<4x128xf32>
    %c0_221 = arith.constant 0 : index
    %c0_222 = arith.constant 0 : index
    %c0_223 = arith.constant 0 : index
    %402 = vector.load %arg6[%c0_221, %c0_222, %c0_223] : memref<2x1x128xf32, #tpu.memory_space<vmem>>, vector<1x1x128xf32>
    %403 = vector.shape_cast %402 : vector<1x1x128xf32> to vector<1x128xf32>
    %404 = vector.broadcast %403 : vector<1x128xf32> to vector<4x128xf32>
    %405 = arith.mulf %400, %404 : vector<4x128xf32>
    %cst_224 = arith.constant dense<0.000000e+00> : vector<4xf32>
    %406 = vector.multi_reduction <add>, %405, %cst_224 [1] : vector<4x128xf32> to vector<4xf32>
    %407 = vector.shape_cast %406 : vector<4xf32> to vector<4x1xf32>
    %cst_225 = arith.constant 1.562500e-02 : f32
    %408 = vector.broadcast %cst_225 : f32 to vector<4x1xf32>
    %409 = arith.mulf %407, %408 : vector<4x1xf32>
    %410 = vector.broadcast %409 : vector<4x1xf32> to vector<4x128xf32>
    %411 = vector.broadcast %403 : vector<1x128xf32> to vector<4x128xf32>
    %412 = arith.mulf %410, %411 : vector<4x128xf32>
    %413 = arith.addf %401, %412 : vector<4x128xf32>
    %c1_226 = arith.constant 1 : index
    %c0_227 = arith.constant 0 : index
    %c0_228 = arith.constant 0 : index
    %414 = vector.load %arg6[%c1_226, %c0_227, %c0_228] : memref<2x1x128xf32, #tpu.memory_space<vmem>>, vector<1x1x128xf32>
    %415 = vector.shape_cast %414 : vector<1x1x128xf32> to vector<1x128xf32>
    %416 = vector.broadcast %415 : vector<1x128xf32> to vector<4x128xf32>
    %417 = arith.mulf %400, %416 : vector<4x128xf32>
    %cst_229 = arith.constant dense<0.000000e+00> : vector<4xf32>
    %418 = vector.multi_reduction <add>, %417, %cst_229 [1] : vector<4x128xf32> to vector<4xf32>
    %419 = vector.shape_cast %418 : vector<4xf32> to vector<4x1xf32>
    %cst_230 = arith.constant 1.562500e-02 : f32
    %420 = vector.broadcast %cst_230 : f32 to vector<4x1xf32>
    %421 = arith.mulf %419, %420 : vector<4x1xf32>
    %422 = vector.broadcast %421 : vector<4x1xf32> to vector<4x128xf32>
    %423 = vector.broadcast %415 : vector<1x128xf32> to vector<4x128xf32>
    %424 = arith.mulf %422, %423 : vector<4x128xf32>
    %425 = arith.addf %413, %424 : vector<4x128xf32>
    %cst_231 = arith.constant 9.99999974E-6 : f32
    %426 = vector.broadcast %cst_231 : f32 to vector<4x128xf32>
    %427 = arith.addf %425, %426 : vector<4x128xf32>
    %428 = math.rsqrt %427 : vector<4x128xf32>
    %429 = arith.mulf %399, %428 : vector<4x128xf32>
    %cst_232 = arith.constant 0.000000e+00 : f32
    %430 = vector.broadcast %cst_232 : f32 to vector<4x128xf32>
    %431 = arith.maximumf %429, %430 : vector<4x128xf32>
    %c0_233 = arith.constant 0 : index
    %c0_234 = arith.constant 0 : index
    %432 = vector.load %arg10[%c0_233, %c0_234] : memref<128x512xf32, #tpu.memory_space<vmem>>, vector<128x512xf32>
    %cst_235 = arith.constant dense<0.000000e+00> : vector<4x512xf32>
    %433 = tpu.matmul %431, %432, %cst_235 {dimension_numbers = #tpu.dot_dimension_numbers<[1], [0], [0], [1], [0, 0, 1, 1], [], []>} : vector<4x128xf32>, vector<128x512xf32>, vector<4x512xf32> -> vector<4x512xf32>
    %434 = tpu.concatenate %433, %98 in 0 : vector<4x512xf32>, vector<4x512xf32> -> vector<8x512xf32>
    %c17_i32_236 = arith.constant 17 : i32
    %435 = tpu.dynamic_rotate %434 by %c17_i32_236 dim 1 : vector<8x512xf32>, i32 -> vector<8x512xf32>
    %c0_237 = arith.constant 0 : index
    %c0_238 = arith.constant 0 : index
    %c0_239 = arith.constant 0 : index
    %436 = vector.load %arg2[%c0_237, %c0_238, %c0_239] : memref<9x1x512xf32, #tpu.memory_space<vmem>>, vector<1x1x512xf32>
    %437 = vector.shape_cast %436 : vector<1x1x512xf32> to vector<1x512xf32>
    %438 = vector.broadcast %437 : vector<1x512xf32> to vector<8x512xf32>
    %439 = arith.mulf %435, %438 : vector<8x512xf32>
    %c16_i32_240 = arith.constant 16 : i32
    %440 = tpu.dynamic_rotate %434 by %c16_i32_240 dim 1 : vector<8x512xf32>, i32 -> vector<8x512xf32>
    %c1_241 = arith.constant 1 : index
    %c0_242 = arith.constant 0 : index
    %c0_243 = arith.constant 0 : index
    %441 = vector.load %arg2[%c1_241, %c0_242, %c0_243] : memref<9x1x512xf32, #tpu.memory_space<vmem>>, vector<1x1x512xf32>
    %442 = vector.shape_cast %441 : vector<1x1x512xf32> to vector<1x512xf32>
    %443 = vector.broadcast %442 : vector<1x512xf32> to vector<8x512xf32>
    %444 = arith.mulf %440, %443 : vector<8x512xf32>
    %c15_i32_244 = arith.constant 15 : i32
    %445 = tpu.dynamic_rotate %434 by %c15_i32_244 dim 1 : vector<8x512xf32>, i32 -> vector<8x512xf32>
    %c2_245 = arith.constant 2 : index
    %c0_246 = arith.constant 0 : index
    %c0_247 = arith.constant 0 : index
    %446 = vector.load %arg2[%c2_245, %c0_246, %c0_247] : memref<9x1x512xf32, #tpu.memory_space<vmem>>, vector<1x1x512xf32>
    %447 = vector.shape_cast %446 : vector<1x1x512xf32> to vector<1x512xf32>
    %448 = vector.broadcast %447 : vector<1x512xf32> to vector<8x512xf32>
    %449 = arith.mulf %445, %448 : vector<8x512xf32>
    %c1_i32_248 = arith.constant 1 : i32
    %450 = tpu.dynamic_rotate %434 by %c1_i32_248 dim 1 : vector<8x512xf32>, i32 -> vector<8x512xf32>
    %c3_249 = arith.constant 3 : index
    %c0_250 = arith.constant 0 : index
    %c0_251 = arith.constant 0 : index
    %451 = vector.load %arg2[%c3_249, %c0_250, %c0_251] : memref<9x1x512xf32, #tpu.memory_space<vmem>>, vector<1x1x512xf32>
    %452 = vector.shape_cast %451 : vector<1x1x512xf32> to vector<1x512xf32>
    %453 = vector.broadcast %452 : vector<1x512xf32> to vector<8x512xf32>
    %454 = arith.mulf %450, %453 : vector<8x512xf32>
    %c4_252 = arith.constant 4 : index
    %c0_253 = arith.constant 0 : index
    %c0_254 = arith.constant 0 : index
    %455 = vector.load %arg2[%c4_252, %c0_253, %c0_254] : memref<9x1x512xf32, #tpu.memory_space<vmem>>, vector<1x1x512xf32>
    %456 = vector.shape_cast %455 : vector<1x1x512xf32> to vector<1x512xf32>
    %457 = vector.broadcast %456 : vector<1x512xf32> to vector<8x512xf32>
    %458 = arith.mulf %434, %457 : vector<8x512xf32>
    %c511_i32_255 = arith.constant 511 : i32
    %459 = tpu.dynamic_rotate %434 by %c511_i32_255 dim 1 : vector<8x512xf32>, i32 -> vector<8x512xf32>
    %c5_256 = arith.constant 5 : index
    %c0_257 = arith.constant 0 : index
    %c0_258 = arith.constant 0 : index
    %460 = vector.load %arg2[%c5_256, %c0_257, %c0_258] : memref<9x1x512xf32, #tpu.memory_space<vmem>>, vector<1x1x512xf32>
    %461 = vector.shape_cast %460 : vector<1x1x512xf32> to vector<1x512xf32>
    %462 = vector.broadcast %461 : vector<1x512xf32> to vector<8x512xf32>
    %463 = arith.mulf %459, %462 : vector<8x512xf32>
    %c497_i32_259 = arith.constant 497 : i32
    %464 = tpu.dynamic_rotate %434 by %c497_i32_259 dim 1 : vector<8x512xf32>, i32 -> vector<8x512xf32>
    %c6_260 = arith.constant 6 : index
    %c0_261 = arith.constant 0 : index
    %c0_262 = arith.constant 0 : index
    %465 = vector.load %arg2[%c6_260, %c0_261, %c0_262] : memref<9x1x512xf32, #tpu.memory_space<vmem>>, vector<1x1x512xf32>
    %466 = vector.shape_cast %465 : vector<1x1x512xf32> to vector<1x512xf32>
    %467 = vector.broadcast %466 : vector<1x512xf32> to vector<8x512xf32>
    %468 = arith.mulf %464, %467 : vector<8x512xf32>
    %c496_i32_263 = arith.constant 496 : i32
    %469 = tpu.dynamic_rotate %434 by %c496_i32_263 dim 1 : vector<8x512xf32>, i32 -> vector<8x512xf32>
    %c7_264 = arith.constant 7 : index
    %c0_265 = arith.constant 0 : index
    %c0_266 = arith.constant 0 : index
    %470 = vector.load %arg2[%c7_264, %c0_265, %c0_266] : memref<9x1x512xf32, #tpu.memory_space<vmem>>, vector<1x1x512xf32>
    %471 = vector.shape_cast %470 : vector<1x1x512xf32> to vector<1x512xf32>
    %472 = vector.broadcast %471 : vector<1x512xf32> to vector<8x512xf32>
    %473 = arith.mulf %469, %472 : vector<8x512xf32>
    %c495_i32_267 = arith.constant 495 : i32
    %474 = tpu.dynamic_rotate %434 by %c495_i32_267 dim 1 : vector<8x512xf32>, i32 -> vector<8x512xf32>
    %c8_268 = arith.constant 8 : index
    %c0_269 = arith.constant 0 : index
    %c0_270 = arith.constant 0 : index
    %475 = vector.load %arg2[%c8_268, %c0_269, %c0_270] : memref<9x1x512xf32, #tpu.memory_space<vmem>>, vector<1x1x512xf32>
    %476 = vector.shape_cast %475 : vector<1x1x512xf32> to vector<1x512xf32>
    %477 = vector.broadcast %476 : vector<1x512xf32> to vector<8x512xf32>
    %478 = arith.mulf %474, %477 : vector<8x512xf32>
    %479 = tpu.concatenate %439, %444, %449, %454, %458, %463, %468, %473, %478 in 0 : vector<8x512xf32>, vector<8x512xf32>, vector<8x512xf32>, vector<8x512xf32>, vector<8x512xf32>, vector<8x512xf32>, vector<8x512xf32>, vector<8x512xf32>, vector<8x512xf32> -> vector<72x512xf32>
    %c0_271 = arith.constant 0 : index
    %c0_272 = arith.constant 0 : index
    %480 = vector.load %arg16[%c0_271, %c0_272] : memref<4x72xbf16, #tpu.memory_space<vmem>>, vector<4x72xbf16>
    %481 = arith.truncf %479 : vector<72x512xf32> to vector<72x512xbf16>
    %cst_273 = arith.constant dense<0.000000e+00> : vector<4x512xf32>
    %482 = tpu.matmul %480, %481, %cst_273 {dimension_numbers = #tpu.dot_dimension_numbers<[1], [0], [0], [1], [0, 0, 1, 1], [], []>} : vector<4x72xbf16>, vector<72x512xbf16>, vector<4x512xf32> -> vector<4x512xf32>
    %cst_274 = arith.constant 0.000000e+00 : f32
    %483 = vector.broadcast %cst_274 : f32 to vector<4x512xf32>
    %c0_275 = arith.constant 0 : index
    %c0_276 = arith.constant 0 : index
    %c0_277 = arith.constant 0 : index
    %484 = vector.load %arg5[%c0_275, %c0_276, %c0_277] : memref<2x1x512xf32, #tpu.memory_space<vmem>>, vector<1x1x512xf32>
    %485 = vector.shape_cast %484 : vector<1x1x512xf32> to vector<1x512xf32>
    %486 = vector.broadcast %485 : vector<1x512xf32> to vector<4x512xf32>
    %487 = arith.mulf %482, %486 : vector<4x512xf32>
    %cst_278 = arith.constant dense<0.000000e+00> : vector<4xf32>
    %488 = vector.multi_reduction <add>, %487, %cst_278 [1] : vector<4x512xf32> to vector<4xf32>
    %489 = vector.shape_cast %488 : vector<4xf32> to vector<4x1xf32>
    %cst_279 = arith.constant 3.906250e-03 : f32
    %490 = vector.broadcast %cst_279 : f32 to vector<4x1xf32>
    %491 = arith.mulf %489, %490 : vector<4x1xf32>
    %492 = vector.broadcast %491 : vector<4x1xf32> to vector<4x512xf32>
    %493 = vector.broadcast %485 : vector<1x512xf32> to vector<4x512xf32>
    %494 = arith.mulf %492, %493 : vector<4x512xf32>
    %495 = arith.addf %483, %494 : vector<4x512xf32>
    %c1_280 = arith.constant 1 : index
    %c0_281 = arith.constant 0 : index
    %c0_282 = arith.constant 0 : index
    %496 = vector.load %arg5[%c1_280, %c0_281, %c0_282] : memref<2x1x512xf32, #tpu.memory_space<vmem>>, vector<1x1x512xf32>
    %497 = vector.shape_cast %496 : vector<1x1x512xf32> to vector<1x512xf32>
    %498 = vector.broadcast %497 : vector<1x512xf32> to vector<4x512xf32>
    %499 = arith.mulf %482, %498 : vector<4x512xf32>
    %cst_283 = arith.constant dense<0.000000e+00> : vector<4xf32>
    %500 = vector.multi_reduction <add>, %499, %cst_283 [1] : vector<4x512xf32> to vector<4xf32>
    %501 = vector.shape_cast %500 : vector<4xf32> to vector<4x1xf32>
    %cst_284 = arith.constant 3.906250e-03 : f32
    %502 = vector.broadcast %cst_284 : f32 to vector<4x1xf32>
    %503 = arith.mulf %501, %502 : vector<4x1xf32>
    %504 = vector.broadcast %503 : vector<4x1xf32> to vector<4x512xf32>
    %505 = vector.broadcast %497 : vector<1x512xf32> to vector<4x512xf32>
    %506 = arith.mulf %504, %505 : vector<4x512xf32>
    %507 = arith.addf %495, %506 : vector<4x512xf32>
    %508 = arith.subf %482, %507 : vector<4x512xf32>
    %509 = arith.mulf %508, %508 : vector<4x512xf32>
    %cst_285 = arith.constant 0.000000e+00 : f32
    %510 = vector.broadcast %cst_285 : f32 to vector<4x512xf32>
    %c0_286 = arith.constant 0 : index
    %c0_287 = arith.constant 0 : index
    %c0_288 = arith.constant 0 : index
    %511 = vector.load %arg5[%c0_286, %c0_287, %c0_288] : memref<2x1x512xf32, #tpu.memory_space<vmem>>, vector<1x1x512xf32>
    %512 = vector.shape_cast %511 : vector<1x1x512xf32> to vector<1x512xf32>
    %513 = vector.broadcast %512 : vector<1x512xf32> to vector<4x512xf32>
    %514 = arith.mulf %509, %513 : vector<4x512xf32>
    %cst_289 = arith.constant dense<0.000000e+00> : vector<4xf32>
    %515 = vector.multi_reduction <add>, %514, %cst_289 [1] : vector<4x512xf32> to vector<4xf32>
    %516 = vector.shape_cast %515 : vector<4xf32> to vector<4x1xf32>
    %cst_290 = arith.constant 3.906250e-03 : f32
    %517 = vector.broadcast %cst_290 : f32 to vector<4x1xf32>
    %518 = arith.mulf %516, %517 : vector<4x1xf32>
    %519 = vector.broadcast %518 : vector<4x1xf32> to vector<4x512xf32>
    %520 = vector.broadcast %512 : vector<1x512xf32> to vector<4x512xf32>
    %521 = arith.mulf %519, %520 : vector<4x512xf32>
    %522 = arith.addf %510, %521 : vector<4x512xf32>
    %c1_291 = arith.constant 1 : index
    %c0_292 = arith.constant 0 : index
    %c0_293 = arith.constant 0 : index
    %523 = vector.load %arg5[%c1_291, %c0_292, %c0_293] : memref<2x1x512xf32, #tpu.memory_space<vmem>>, vector<1x1x512xf32>
    %524 = vector.shape_cast %523 : vector<1x1x512xf32> to vector<1x512xf32>
    %525 = vector.broadcast %524 : vector<1x512xf32> to vector<4x512xf32>
    %526 = arith.mulf %509, %525 : vector<4x512xf32>
    %cst_294 = arith.constant dense<0.000000e+00> : vector<4xf32>
    %527 = vector.multi_reduction <add>, %526, %cst_294 [1] : vector<4x512xf32> to vector<4xf32>
    %528 = vector.shape_cast %527 : vector<4xf32> to vector<4x1xf32>
    %cst_295 = arith.constant 3.906250e-03 : f32
    %529 = vector.broadcast %cst_295 : f32 to vector<4x1xf32>
    %530 = arith.mulf %528, %529 : vector<4x1xf32>
    %531 = vector.broadcast %530 : vector<4x1xf32> to vector<4x512xf32>
    %532 = vector.broadcast %524 : vector<1x512xf32> to vector<4x512xf32>
    %533 = arith.mulf %531, %532 : vector<4x512xf32>
    %534 = arith.addf %522, %533 : vector<4x512xf32>
    %cst_296 = arith.constant 9.99999974E-6 : f32
    %535 = vector.broadcast %cst_296 : f32 to vector<4x512xf32>
    %536 = arith.addf %534, %535 : vector<4x512xf32>
    %537 = math.rsqrt %536 : vector<4x512xf32>
    %538 = arith.mulf %508, %537 : vector<4x512xf32>
    %cst_297 = arith.constant 0.000000e+00 : f32
    %539 = vector.broadcast %cst_297 : f32 to vector<4x512xf32>
    %540 = arith.maximumf %538, %539 : vector<4x512xf32>
    %c0_298 = arith.constant 0 : index
    %c0_299 = arith.constant 0 : index
    %541 = vector.load %arg17[%c0_298, %c0_299] : memref<1x4xbf16, #tpu.memory_space<vmem>>, vector<1x4xbf16>
    %542 = arith.truncf %540 : vector<4x512xf32> to vector<4x512xbf16>
    %cst_300 = arith.constant dense<0.000000e+00> : vector<1x512xf32>
    %543 = tpu.matmul %541, %542, %cst_300 {dimension_numbers = #tpu.dot_dimension_numbers<[1], [0], [0], [1], [0, 0, 1, 1], [], []>} : vector<1x4xbf16>, vector<4x512xbf16>, vector<1x512xf32> -> vector<1x512xf32>
    %c0_301 = arith.constant 0 : index
    %c0_302 = arith.constant 0 : index
    %544 = vector.load %arg18[%c0_301, %c0_302] : memref<1x1xf32, #tpu.memory_space<vmem>>, vector<1x1xf32>
    %545 = vector.broadcast %544 : vector<1x1xf32> to vector<1x512xf32>
    %546 = arith.addf %543, %545 : vector<1x512xf32>
    %547 = arith.addf %546, %1 : vector<1x512xf32>
    %c0_303 = arith.constant 0 : index
    %c0_304 = arith.constant 0 : index
    %c0_305 = arith.constant 0 : index
    %548 = vector.load %arg19[%c0_303, %c0_304, %c0_305] : memref<1x1x512xf32, #tpu.memory_space<vmem>>, vector<1x1x512xf32>
    %549 = vector.shape_cast %548 : vector<1x1x512xf32> to vector<1x512xf32>
    %550 = vector.shape_cast %547 : vector<1x512xf32> to vector<1x1x512xf32>
    tpu.vector_store %arg19[%c0_303, %c0_304, %c0_305], %550 {strides = array<i32>} : memref<1x1x512xf32, #tpu.memory_space<vmem>>, vector<1x1x512xf32>,
    return
  }
  func.func @transform_0(%arg0: i32) -> (i32, i32, i32) {
    %c0_i32 = arith.constant 0 : i32
    %c0_i32_0 = arith.constant 0 : i32
    %c0_i32_1 = arith.constant 0 : i32
    return %arg0, %c0_i32, %c0_i32_0 : i32, i32, i32
  }
  func.func @transform_1(%arg0: i32) -> (i32, i32, i32) {
    %c0_i32 = arith.constant 0 : i32
    %c0_i32_0 = arith.constant 0 : i32
    %c0_i32_1 = arith.constant 0 : i32
    %c0_i32_2 = arith.constant 0 : i32
    return %c0_i32, %c0_i32_0, %c0_i32_1 : i32, i32, i32
  }
  func.func @transform_2(%arg0: i32) -> (i32, i32, i32) {
    %c0_i32 = arith.constant 0 : i32
    %c0_i32_0 = arith.constant 0 : i32
    %c0_i32_1 = arith.constant 0 : i32
    %c0_i32_2 = arith.constant 0 : i32
    return %c0_i32, %c0_i32_0, %c0_i32_1 : i32, i32, i32
  }
  func.func @transform_3(%arg0: i32) -> (i32, i32, i32) {
    %c0_i32 = arith.constant 0 : i32
    %c0_i32_0 = arith.constant 0 : i32
    %c0_i32_1 = arith.constant 0 : i32
    %c0_i32_2 = arith.constant 0 : i32
    return %c0_i32, %c0_i32_0, %c0_i32_1 : i32, i32, i32
  }
  func.func @transform_4(%arg0: i32) -> (i32, i32, i32) {
    %c0_i32 = arith.constant 0 : i32
    %c0_i32_0 = arith.constant 0 : i32
    %c0_i32_1 = arith.constant 0 : i32
    %c0_i32_2 = arith.constant 0 : i32
    return %c0_i32, %c0_i32_0, %c0_i32_1 : i32, i32, i32
  }
  func.func @transform_5(%arg0: i32) -> (i32, i32, i32) {
    %c0_i32 = arith.constant 0 : i32
    %c0_i32_0 = arith.constant 0 : i32
    %c0_i32_1 = arith.constant 0 : i32
    %c0_i32_2 = arith.constant 0 : i32
    return %c0_i32, %c0_i32_0, %c0_i32_1 : i32, i32, i32
  }
  func.func @transform_6(%arg0: i32) -> (i32, i32, i32) {
    %c0_i32 = arith.constant 0 : i32
    %c0_i32_0 = arith.constant 0 : i32
    %c0_i32_1 = arith.constant 0 : i32
    %c0_i32_2 = arith.constant 0 : i32
    return %c0_i32, %c0_i32_0, %c0_i32_1 : i32, i32, i32
  }
  func.func @transform_7(%arg0: i32) -> (i32, i32) {
    %c0_i32 = arith.constant 0 : i32
    %c0_i32_0 = arith.constant 0 : i32
    %c0_i32_1 = arith.constant 0 : i32
    return %c0_i32, %c0_i32_0 : i32, i32
  }
  func.func @transform_8(%arg0: i32) -> (i32, i32) {
    %c0_i32 = arith.constant 0 : i32
    %c0_i32_0 = arith.constant 0 : i32
    %c0_i32_1 = arith.constant 0 : i32
    return %c0_i32, %c0_i32_0 : i32, i32
  }
  func.func @transform_9(%arg0: i32) -> (i32, i32) {
    %c0_i32 = arith.constant 0 : i32
    %c0_i32_0 = arith.constant 0 : i32
    %c0_i32_1 = arith.constant 0 : i32
    return %c0_i32, %c0_i32_0 : i32, i32
  }
  func.func @transform_10(%arg0: i32) -> (i32, i32) {
    %c0_i32 = arith.constant 0 : i32
    %c0_i32_0 = arith.constant 0 : i32
    %c0_i32_1 = arith.constant 0 : i32
    return %c0_i32, %c0_i32_0 : i32, i32
  }
  func.func @transform_11(%arg0: i32) -> (i32, i32) {
    %c0_i32 = arith.constant 0 : i32
    %c0_i32_0 = arith.constant 0 : i32
    %c0_i32_1 = arith.constant 0 : i32
    return %c0_i32, %c0_i32_0 : i32, i32
  }
  func.func @transform_12(%arg0: i32) -> (i32, i32) {
    %c0_i32 = arith.constant 0 : i32
    %c0_i32_0 = arith.constant 0 : i32
    %c0_i32_1 = arith.constant 0 : i32
    return %c0_i32, %c0_i32_0 : i32, i32
  }
  func.func @transform_13(%arg0: i32) -> (i32, i32) {
    %c0_i32 = arith.constant 0 : i32
    %c0_i32_0 = arith.constant 0 : i32
    %c0_i32_1 = arith.constant 0 : i32
    return %c0_i32, %c0_i32_0 : i32, i32
  }
  func.func @transform_14(%arg0: i32) -> (i32, i32) {
    %c0_i32 = arith.constant 0 : i32
    %c0_i32_0 = arith.constant 0 : i32
    %c0_i32_1 = arith.constant 0 : i32
    return %c0_i32, %c0_i32_0 : i32, i32
  }
  func.func @transform_15(%arg0: i32) -> (i32, i32) {
    %c0_i32 = arith.constant 0 : i32
    %c0_i32_0 = arith.constant 0 : i32
    %c0_i32_1 = arith.constant 0 : i32
    return %c0_i32, %c0_i32_0 : i32, i32
  }
  func.func @transform_16(%arg0: i32) -> (i32, i32) {
    %c0_i32 = arith.constant 0 : i32
    %c0_i32_0 = arith.constant 0 : i32
    %c0_i32_1 = arith.constant 0 : i32
    return %c0_i32, %c0_i32_0 : i32, i32
  }
  func.func @transform_17(%arg0: i32) -> (i32, i32) {
    %c0_i32 = arith.constant 0 : i32
    %c0_i32_0 = arith.constant 0 : i32
    %c0_i32_1 = arith.constant 0 : i32
    return %c0_i32, %c0_i32_0 : i32, i32
  }
  func.func @transform_18(%arg0: i32) -> (i32, i32, i32) {
    %c0_i32 = arith.constant 0 : i32
    %c0_i32_0 = arith.constant 0 : i32
    %c0_i32_1 = arith.constant 0 : i32
    return %arg0, %c0_i32, %c0_i32_0 : i32, i32, i32
  }
}

</mosaic_0001>

<llo_original>
// kernel: forward.1
$region0: #{forward.1}
  #allocation0 [shape = 'u32[]', space=smem, size = 0x4, offset = 0x4, fixed_abs, tag = 'smem constant byte address 0x4 - core index']
  #allocation1 [shape = 'u32[144,128]{1,0:T(1,128)}', space=vmem, size = 0x12000, scoped, tag = 'internal scratch']
  #allocation2 [shape = 'f32[1,1]{1,0:T(1,128)S(1)}', space=vmem, size = 0x200, scoped, tag = 'scoped memory for forward.1']
  %s0 = inlined_call_operand.vmem [shape: f32[1,1,512], index: 0, kind: input, shape index: {}]
  %s1 = inlined_call_operand.vmem [shape: f32[9,1,512], index: 1, kind: input, shape index: {}]
  %s2 = inlined_call_operand.vmem [shape: f32[9,1,128], index: 2, kind: input, shape index: {}]
  %s3 = inlined_call_operand.hbm [shape: f32[9,1,128], index: 3, kind: input, shape index: {}]
  %s4 = inlined_call_operand.hbm [shape: f32[2,1,512], index: 4, kind: input, shape index: {}]
  %s5 = inlined_call_operand.hbm [shape: f32[2,1,128], index: 5, kind: input, shape index: {}]
  %s6 = inlined_call_operand.hbm [shape: f32[2,1,128], index: 6, kind: input, shape index: {}]
  %s7 = inlined_call_operand.hbm [shape: f32[512,128], index: 7, kind: input, shape index: {}]
  %s8 = inlined_call_operand.hbm [shape: f32[128,128], index: 8, kind: input, shape index: {}]
  %s9 = inlined_call_operand.hbm [shape: f32[128,512], index: 9, kind: input, shape index: {}]
  %s10 = inlined_call_operand.hbm [shape: f32[128,128], index: 10, kind: input, shape index: {}]
  %s11 = inlined_call_operand.vmem [shape: bf16[4,9], index: 11, kind: input, shape index: {}]
  %s12 = inlined_call_operand.vmem [shape: bf16[8,36], index: 12, kind: input, shape index: {}]
  %s13 = inlined_call_operand.vmem [shape: bf16[8,72], index: 13, kind: input, shape index: {}]
  %s14 = inlined_call_operand.vmem [shape: bf16[4,144], index: 14, kind: input, shape index: {}]
  %s15 = inlined_call_operand.vmem [shape: bf16[4,72], index: 15, kind: input, shape index: {}]
  %s16 = inlined_call_operand.vmem [shape: bf16[1,4], index: 16, kind: input, shape index: {}]
  %s17 = inlined_call_operand.<no memory space> [shape: f32[1,1], index: 17, kind: input, shape index: {}]
  %s18 = inlined_call_operand.vmem [shape: f32[1,1,512], index: 18, kind: output, shape index: {}]
  %s19 = sld [smem:[#allocation0]]
  $region114: #{forward.1} parent=0
    _
  %s21 = ssub.s32 1, %s19
  %s22 = scalar_select 0, %s21, %s19
  %v23 = vstv %s17
  %24 = vst [vmem:[#allocation2] sm:$0x1] %v23
  $region1: #{forward.1} parent=0
    #allocation3 [shape = 'u8[4608]{0}', space=vmem, size = 0x1400, scoped, tag = 'input window, operand 3, single buffered']
    #allocation4 [shape = 's32[1]{0}', space=sflag, size = 0x4, scoped, tag = 'scoped memory for forward.1']
    #allocation5 [shape = 'u8[4096]{0}', space=vmem, size = 0x1000, scoped, tag = 'input window, operand 4, single buffered']
    #allocation6 [shape = 's32[1]{0}', space=sflag, size = 0x4, scoped, tag = 'scoped memory for forward.1']
    #allocation7 [shape = 'u8[1024]{0}', space=vmem, size = 0x400, scoped, tag = 'input window, operand 5, single buffered']
    #allocation8 [shape = 'u8[1024]{0}', space=vmem, size = 0x400, scoped, tag = 'input window, operand 6, single buffered']
    #allocation9 [shape = 's32[1]{0}', space=sflag, size = 0x4, scoped, tag = 'scoped memory for forward.1']
    #allocation10 [shape = 'u8[262144]{0}', space=vmem, size = 0x40000, scoped, tag = 'input window, operand 7, single buffered']
    #allocation11 [shape = 'u8[65536]{0}', space=vmem, size = 0x10000, scoped, tag = 'input window, operand 8, single buffered']
    #allocation12 [shape = 's32[1]{0}', space=sflag, size = 0x4, scoped, tag = 'scoped memory for forward.1']
    #allocation13 [shape = 'u8[262144]{0}', space=vmem, size = 0x40000, scoped, tag = 'input window, operand 9, single buffered']
    #allocation14 [shape = 'u8[65536]{0}', space=vmem, size = 0x10000, scoped, tag = 'input window, operand 10, single buffered']
    #allocation15 [shape = 's32[1]{0}', space=sflag, size = 0x4, scoped, tag = 'scoped memory for forward.1']
    %25 = vsyncpa [#allocation4], 0
    %26 = vsyncpa [#allocation6], 0
    %27 = vsyncpa [#allocation9], 0
    %28 = vsyncpa [#allocation12], 0
    %29 = vsyncpa [#allocation15], 0
    // Predicated region
    $region2: #{forward.1} parent=1 // pred_check
      _
    $region3: #{forward.1} parent=1 // pred_check_branch
      %31 = sbr.rel (0) target = $region5
    $region4: #{forward.1} parent=1 // pred_region
      _
    $region5: #{forward.1} parent=1 // pred_fallthru
      _
    // Predicated region
    $region6: #{forward.1} parent=1 // pred_check
      _
    $region7: #{forward.1} parent=1 // pred_check_branch
      %33 = sbr.rel (0) target = $region9
    $region8: #{forward.1} parent=1 // pred_region
      _
    $region9: #{forward.1} parent=1 // pred_fallthru
      _
    // Predicated region
    $region10: #{forward.1} parent=1 // pred_check
      _
    $region11: #{forward.1} parent=1 // pred_check_branch
      %35 = sbr.rel (0) target = $region13
    $region12: #{forward.1} parent=1 // pred_region
      _
    $region13: #{forward.1} parent=1 // pred_fallthru
      _
    // Predicated region
    $region14: #{forward.1} parent=1 // pred_check
      _
    $region15: #{forward.1} parent=1 // pred_check_branch
      %37 = sbr.rel (0) target = $region17
    $region16: #{forward.1} parent=1 // pred_region
      %s39 = ssub.s32 144, 144
      %40 = vsyncadd [#allocation4], %s39
      %s41 = sshll.u32 [#allocation3], 4
      %s42 = int_to_ptr.vmem [resolvable:$true] %s41
      %47 = dma.hbm_to_vmem [thread:$0]  %s3, 144, %s42, [#allocation4], 16, 16, 1
    $region17: #{forward.1} parent=1 // pred_fallthru
      _
    // Predicated region
    $region18: #{forward.1} parent=1 // pred_check
      _
    $region19: #{forward.1} parent=1 // pred_check_branch
      %49 = sbr.rel (0) target = $region21
    $region20: #{forward.1} parent=1 // pred_region
      %s51 = ssub.s32 128, 128
      %52 = vsyncadd [#allocation6], %s51
      %s53 = sshll.u32 [#allocation5], 4
      %s54 = int_to_ptr.vmem [resolvable:$true] %s53
      %59 = dma.hbm_to_vmem [thread:$0]  %s4, 128, %s54, [#allocation6], 64, 64, 4
    $region21: #{forward.1} parent=1 // pred_fallthru
      _
    // Predicated region
    $region22: #{forward.1} parent=1 // pred_check
      _
    $region23: #{forward.1} parent=1 // pred_check_branch
      %61 = sbr.rel (0) target = $region25
    $region24: #{forward.1} parent=1 // pred_region
      %s63 = ssub.s32 32, 32
      %64 = vsyncadd [#allocation6], %s63
      %s65 = sshll.u32 [#allocation7], 4
      %s66 = int_to_ptr.vmem [resolvable:$true] %s65
      %71 = dma.hbm_to_vmem [thread:$0]  %s5, 32, %s66, [#allocation6], 16, 16, 1
    $region25: #{forward.1} parent=1 // pred_fallthru
      _
    // Predicated region
    $region26: #{forward.1} parent=1 // pred_check
      _
    $region27: #{forward.1} parent=1 // pred_check_branch
      %73 = sbr.rel (0) target = $region29
    $region28: #{forward.1} parent=1 // pred_region
      %s75 = ssub.s32 32, 32
      %76 = vsyncadd [#allocation9], %s75
      %s77 = sshll.u32 [#allocation8], 4
      %s78 = int_to_ptr.vmem [resolvable:$true] %s77
      %83 = dma.hbm_to_vmem [thread:$0]  %s6, 32, %s78, [#allocation9], 16, 16, 1
    $region29: #{forward.1} parent=1 // pred_fallthru
      _
    // Predicated region
    $region30: #{forward.1} parent=1 // pred_check
      _
    $region31: #{forward.1} parent=1 // pred_check_branch
      %85 = sbr.rel (0) target = $region33
    $region32: #{forward.1} parent=1 // pred_region
      %s87 = ssub.s32 8192, 8192
      %88 = vsyncadd [#allocation9], %s87
      %s89 = sshll.u32 [#allocation10], 4
      %s90 = int_to_ptr.vmem [resolvable:$true] %s89
      %95 = dma.hbm_to_vmem [thread:$0]  %s7, 8192, %s90, [#allocation9], 128, 128, 8
    $region33: #{forward.1} parent=1 // pred_fallthru
      _
    // Predicated region
    $region34: #{forward.1} parent=1 // pred_check
      _
    $region35: #{forward.1} parent=1 // pred_check_branch
      %97 = sbr.rel (0) target = $region37
    $region36: #{forward.1} parent=1 // pred_region
      %s99 = ssub.s32 2048, 2048
      %100 = vsyncadd [#allocation12], %s99
      %s101 = sshll.u32 [#allocation11], 4
      %s102 = int_to_ptr.vmem [resolvable:$true] %s101
      %107 = dma.hbm_to_vmem [thread:$0]  %s8, 2048, %s102, [#allocation12], 128, 128, 8
    $region37: #{forward.1} parent=1 // pred_fallthru
      _
    // Predicated region
    $region38: #{forward.1} parent=1 // pred_check
      _
    $region39: #{forward.1} parent=1 // pred_check_branch
      %109 = sbr.rel (0) target = $region41
    $region40: #{forward.1} parent=1 // pred_region
      %s111 = ssub.s32 8192, 8192
      %112 = vsyncadd [#allocation12], %s111
      %s113 = sshll.u32 [#allocation13], 4
      %s114 = int_to_ptr.vmem [resolvable:$true] %s113
      %119 = dma.hbm_to_vmem [thread:$0]  %s9, 8192, %s114, [#allocation12], 512, 512, 32
    $region41: #{forward.1} parent=1 // pred_fallthru
      _
    // Predicated region
    $region42: #{forward.1} parent=1 // pred_check
      _
    $region43: #{forward.1} parent=1 // pred_check_branch
      %121 = sbr.rel (0) target = $region45
    $region44: #{forward.1} parent=1 // pred_region
      %s123 = ssub.s32 2048, 2048
      %124 = vsyncadd [#allocation15], %s123
      %s125 = sshll.u32 [#allocation14], 4
      %s126 = int_to_ptr.vmem [resolvable:$true] %s125
      %131 = dma.hbm_to_vmem [thread:$0]  %s10, 2048, %s126, [#allocation15], 128, 128, 8
    $region45: #{forward.1} parent=1 // pred_fallthru
      _
    // Predicated region
    $region46: #{forward.1} parent=1 // pred_check
      _
    $region47: #{forward.1} parent=1 // pred_check_branch
      %133 = sbr.rel (0) target = $region49
    $region48: #{forward.1} parent=1 // pred_region
      _
    $region49: #{forward.1} parent=1 // pred_fallthru
      _
    // Predicated region
    $region50: #{forward.1} parent=1 // pred_check
      _
    $region51: #{forward.1} parent=1 // pred_check_branch
      %135 = sbr.rel (0) target = $region53
    $region52: #{forward.1} parent=1 // pred_region
      _
    $region53: #{forward.1} parent=1 // pred_fallthru
      _
    // Predicated region
    $region54: #{forward.1} parent=1 // pred_check
      _
    $region55: #{forward.1} parent=1 // pred_check_branch
      %137 = sbr.rel (0) target = $region57
    $region56: #{forward.1} parent=1 // pred_region
      _
    $region57: #{forward.1} parent=1 // pred_fallthru
      _
    // Predicated region
    $region58: #{forward.1} parent=1 // pred_check
      _
    $region59: #{forward.1} parent=1 // pred_check_branch
      %139 = sbr.rel (0) target = $region61
    $region60: #{forward.1} parent=1 // pred_region
      _
    $region61: #{forward.1} parent=1 // pred_fallthru
      _
    // Predicated region
    $region62: #{forward.1} parent=1 // pred_check
      _
    $region63: #{forward.1} parent=1 // pred_check_branch
      %141 = sbr.rel (0) target = $region65
    $region64: #{forward.1} parent=1 // pred_region
      _
    $region65: #{forward.1} parent=1 // pred_fallthru
      _
    // Predicated region
    $region66: #{forward.1} parent=1 // pred_check
      _
    $region67: #{forward.1} parent=1 // pred_check_branch
      %143 = sbr.rel (0) target = $region69
    $region68: #{forward.1} parent=1 // pred_region
      _
    $region69: #{forward.1} parent=1 // pred_fallthru
      _
    // Predicated region
    $region70: #{forward.1} parent=1 // pred_check
      _
    $region71: #{forward.1} parent=1 // pred_check_branch
      %145 = sbr.rel (0) target = $region73
    $region72: #{forward.1} parent=1 // pred_region
      _
    $region73: #{forward.1} parent=1 // pred_fallthru
      _
    // Predicated region
    $region74: #{forward.1} parent=1 // pred_check
      _
    $region75: #{forward.1} parent=1 // pred_check_branch
      %147 = sbr.rel (0) target = $region77
    $region76: #{forward.1} parent=1 // pred_region
      %148 = dma.done [#allocation4], 144
    $region77: #{forward.1} parent=1 // pred_fallthru
      _
    // Predicated region
    $region78: #{forward.1} parent=1 // pred_check
      _
    $region79: #{forward.1} parent=1 // pred_check_branch
      %150 = sbr.rel (0) target = $region81
    $region80: #{forward.1} parent=1 // pred_region
      %151 = dma.done [#allocation6], 128
    $region81: #{forward.1} parent=1 // pred_fallthru
      _
    // Predicated region
    $region82: #{forward.1} parent=1 // pred_check
      _
    $region83: #{forward.1} parent=1 // pred_check_branch
      %153 = sbr.rel (0) target = $region85
    $region84: #{forward.1} parent=1 // pred_region
      %154 = dma.done [#allocation6], 32
    $region85: #{forward.1} parent=1 // pred_fallthru
      _
    // Predicated region
    $region86: #{forward.1} parent=1 // pred_check
      _
    $region87: #{forward.1} parent=1 // pred_check_branch
      %156 = sbr.rel (0) target = $region89
    $region88: #{forward.1} parent=1 // pred_region
      %157 = dma.done [#allocation9], 32
    $region89: #{forward.1} parent=1 // pred_fallthru
      _
    // Predicated region
    $region90: #{forward.1} parent=1 // pred_check
      _
    $region91: #{forward.1} parent=1 // pred_check_branch
      %159 = sbr.rel (0) target = $region93
    $region92: #{forward.1} parent=1 // pred_region
      %160 = dma.done [#allocation9], 8192
    $region93: #{forward.1} parent=1 // pred_fallthru
      _
    // Predicated region
    $region94: #{forward.1} parent=1 // pred_check
      _
    $region95: #{forward.1} parent=1 // pred_check_branch
      %162 = sbr.rel (0) target = $region97
    $region96: #{forward.1} parent=1 // pred_region
      %163 = dma.done [#allocation12], 2048
    $region97: #{forward.1} parent=1 // pred_fallthru
      _
    // Predicated region
    $region98: #{forward.1} parent=1 // pred_check
      _
    $region99: #{forward.1} parent=1 // pred_check_branch
      %165 = sbr.rel (0) target = $region101
    $region100: #{forward.1} parent=1 // pred_region
      %166 = dma.done [#allocation12], 8192
    $region101: #{forward.1} parent=1 // pred_fallthru
      _
    // Predicated region
    $region102: #{forward.1} parent=1 // pred_check
      _
    $region103: #{forward.1} parent=1 // pred_check_branch
      %168 = sbr.rel (0) target = $region105
    $region104: #{forward.1} parent=1 // pred_region
      %169 = dma.done [#allocation15], 2048
    $region105: #{forward.1} parent=1 // pred_fallthru
      _
    %v171 = vld [vmem:[%s0] sm:$0xf]
    %v173 = vlaneseq
    %v174 = vshrl.u32 %v173, 7
    %v175 = vsub.s32 0, %v174
    %v176 = vrot.slane %v171, %v175
    %v177 = vlaneseq
    %v178 = vshrl.u32 %v177, 7
    %v179 = vsub.s32 1, %v178
    %v180 = vrot.slane %v171, %v179
    %v181 = vlaneseq
    %v182 = vshrl.u32 %v181, 7
    %v183 = vsub.s32 2, %v182
    %v184 = vrot.slane %v171, %v183
    %v185 = vlaneseq
    %v186 = vshrl.u32 %v185, 7
    %v187 = vsub.s32 3, %v186
    %v188 = vrot.slane %v171, %v187
    %193 = vrot.lane.b32.xlu0 %v176, 17
    %v194 = vpop.permute.xlu0 %193
    %195 = vrot.lane.b32.xlu0 %v180, 17
    %v196 = vpop.permute.xlu0 %195
    %197 = vrot.lane.b32.xlu0 %v184, 17
    %v198 = vpop.permute.xlu0 %197
    %199 = vrot.lane.b32.xlu0 %v188, 17
    %v200 = vpop.permute.xlu0 %199
    %v201 = vlaneseq
    %v202 = vand.u32 %v201, 127
    %vm203 = vcmp.lt.s32.totalorder %v202, 17
    %v204 = vsel %vm203, %v198, %v200
    %v205 = vsel %vm203, %v196, %v198
    %v206 = vsel %vm203, %v194, %v196
    %v207 = vsel %vm203, %v200, %v194
    %v208 = vld [vmem:[%s1] sm:$0xf]
    %v210 = vlaneseq
    %v211 = vshrl.u32 %v210, 7
    %v212 = vsub.s32 0, %v211
    %v213 = vrot.slane %v208, %v212
    %v214 = vlaneseq
    %v215 = vshrl.u32 %v214, 7
    %v216 = vsub.s32 1, %v215
    %v217 = vrot.slane %v208, %v216
    %v218 = vlaneseq
    %v219 = vshrl.u32 %v218, 7
    %v220 = vsub.s32 2, %v219
    %v221 = vrot.slane %v208, %v220
    %v222 = vlaneseq
    %v223 = vshrl.u32 %v222, 7
    %v224 = vsub.s32 3, %v223
    %v225 = vrot.slane %v208, %v224
    %v230 = vmul.f32 %v207, %v213
    %v231 = vmul.f32 %v206, %v217
    %v232 = vmul.f32 %v205, %v221
    %v233 = vmul.f32 %v204, %v225
    %234 = vrot.lane.b32.xlu0 %v176, 16
    %v235 = vpop.permute.xlu0 %234
    %236 = vrot.lane.b32.xlu0 %v180, 16
    %v237 = vpop.permute.xlu0 %236
    %238 = vrot.lane.b32.xlu0 %v184, 16
    %v239 = vpop.permute.xlu0 %238
    %240 = vrot.lane.b32.xlu0 %v188, 16
    %v241 = vpop.permute.xlu0 %240
    %vm242 = vcmp.lt.s32.totalorder %v202, 16
    %v243 = vsel %vm242, %v239, %v241
    %v244 = vsel %vm242, %v237, %v239
    %v245 = vsel %vm242, %v235, %v237
    %v246 = vsel %vm242, %v241, %v235
    %s247 = scalar_lea.vmem %s1, 4
    %v248 = vld [vmem:[%s247] sm:$0xf]
    %v250 = vlaneseq
    %v251 = vshrl.u32 %v250, 7
    %v252 = vsub.s32 0, %v251
    %v253 = vrot.slane %v248, %v252
    %v254 = vlaneseq
    %v255 = vshrl.u32 %v254, 7
    %v256 = vsub.s32 1, %v255
    %v257 = vrot.slane %v248, %v256
    %v258 = vlaneseq
    %v259 = vshrl.u32 %v258, 7
    %v260 = vsub.s32 2, %v259
    %v261 = vrot.slane %v248, %v260
    %v262 = vlaneseq
    %v263 = vshrl.u32 %v262, 7
    %v264 = vsub.s32 3, %v263
    %v265 = vrot.slane %v248, %v264
    %v270 = vmul.f32 %v246, %v253
    %v271 = vmul.f32 %v245, %v257
    %v272 = vmul.f32 %v244, %v261
    %v273 = vmul.f32 %v243, %v265
    %274 = vrot.lane.b32.xlu0 %v176, 15
    %v275 = vpop.permute.xlu0 %274
    %276 = vrot.lane.b32.xlu0 %v180, 15
    %v277 = vpop.permute.xlu0 %276
    %278 = vrot.lane.b32.xlu0 %v184, 15
    %v279 = vpop.permute.xlu0 %278
    %280 = vrot.lane.b32.xlu0 %v188, 15
    %v281 = vpop.permute.xlu0 %280
    %vm282 = vcmp.lt.s32.totalorder %v202, 15
    %v283 = vsel %vm282, %v279, %v281
    %v284 = vsel %vm282, %v277, %v279
    %v285 = vsel %vm282, %v275, %v277
    %v286 = vsel %vm282, %v281, %v275
    %s287 = scalar_lea.vmem %s1, 8
    %v288 = vld [vmem:[%s287] sm:$0xf]
    %v290 = vlaneseq
    %v291 = vshrl.u32 %v290, 7
    %v292 = vsub.s32 0, %v291
    %v293 = vrot.slane %v288, %v292
    %v294 = vlaneseq
    %v295 = vshrl.u32 %v294, 7
    %v296 = vsub.s32 1, %v295
    %v297 = vrot.slane %v288, %v296
    %v298 = vlaneseq
    %v299 = vshrl.u32 %v298, 7
    %v300 = vsub.s32 2, %v299
    %v301 = vrot.slane %v288, %v300
    %v302 = vlaneseq
    %v303 = vshrl.u32 %v302, 7
    %v304 = vsub.s32 3, %v303
    %v305 = vrot.slane %v288, %v304
    %v310 = vmul.f32 %v286, %v293
    %v311 = vmul.f32 %v285, %v297
    %v312 = vmul.f32 %v284, %v301
    %v313 = vmul.f32 %v283, %v305
    %314 = vrot.lane.b32.xlu0 %v176, 1
    %v315 = vpop.permute.xlu0 %314
    %316 = vrot.lane.b32.xlu0 %v180, 1
    %v317 = vpop.permute.xlu0 %316
    %318 = vrot.lane.b32.xlu0 %v184, 1
    %v319 = vpop.permute.xlu0 %318
    %320 = vrot.lane.b32.xlu0 %v188, 1
    %v321 = vpop.permute.xlu0 %320
    %vm322 = vcmp.lt.s32.totalorder %v202, 1
    %v323 = vsel %vm322, %v319, %v321
    %v324 = vsel %vm322, %v317, %v319
    %v325 = vsel %vm322, %v315, %v317
    %v326 = vsel %vm322, %v321, %v315
    %s327 = scalar_lea.vmem %s1, 12
    %v328 = vld [vmem:[%s327] sm:$0xf]
    %v330 = vlaneseq
    %v331 = vshrl.u32 %v330, 7
    %v332 = vsub.s32 0, %v331
    %v333 = vrot.slane %v328, %v332
    %v334 = vlaneseq
    %v335 = vshrl.u32 %v334, 7
    %v336 = vsub.s32 1, %v335
    %v337 = vrot.slane %v328, %v336
    %v338 = vlaneseq
    %v339 = vshrl.u32 %v338, 7
    %v340 = vsub.s32 2, %v339
    %v341 = vrot.slane %v328, %v340
    %v342 = vlaneseq
    %v343 = vshrl.u32 %v342, 7
    %v344 = vsub.s32 3, %v343
    %v345 = vrot.slane %v328, %v344
    %v350 = vmul.f32 %v326, %v333
    %v351 = vmul.f32 %v325, %v337
    %v352 = vmul.f32 %v324, %v341
    %v353 = vmul.f32 %v323, %v345
    %s354 = scalar_lea.vmem %s1, 16
    %v355 = vld [vmem:[%s354] sm:$0xf]
    %v356 = vmul.f32 %v171, %v355
    %357 = vrot.lane.b32.xlu0 %v176, 127
    %v358 = vpop.permute.xlu0 %357
    %359 = vrot.lane.b32.xlu0 %v180, 127
    %v360 = vpop.permute.xlu0 %359
    %361 = vrot.lane.b32.xlu0 %v184, 127
    %v362 = vpop.permute.xlu0 %361
    %363 = vrot.lane.b32.xlu0 %v188, 127
    %v364 = vpop.permute.xlu0 %363
    %vm365 = vcmp.lt.s32.totalorder %v202, 127
    %v366 = vsel %vm365, %v362, %v364
    %v367 = vsel %vm365, %v360, %v362
    %v368 = vsel %vm365, %v358, %v360
    %v369 = vsel %vm365, %v364, %v358
    %s370 = scalar_lea.vmem %s1, 20
    %v371 = vld [vmem:[%s370] sm:$0xf]
    %v373 = vlaneseq
    %v374 = vshrl.u32 %v373, 7
    %v375 = vsub.s32 0, %v374
    %v376 = vrot.slane %v371, %v375
    %v377 = vlaneseq
    %v378 = vshrl.u32 %v377, 7
    %v379 = vsub.s32 1, %v378
    %v380 = vrot.slane %v371, %v379
    %v381 = vlaneseq
    %v382 = vshrl.u32 %v381, 7
    %v383 = vsub.s32 2, %v382
    %v384 = vrot.slane %v371, %v383
    %v385 = vlaneseq
    %v386 = vshrl.u32 %v385, 7
    %v387 = vsub.s32 3, %v386
    %v388 = vrot.slane %v371, %v387
    %v393 = vmul.f32 %v368, %v376
    %v394 = vmul.f32 %v367, %v380
    %v395 = vmul.f32 %v366, %v384
    %v396 = vmul.f32 %v369, %v388
    %397 = vrot.lane.b32.xlu0 %v176, 113
    %v398 = vpop.permute.xlu0 %397
    %399 = vrot.lane.b32.xlu0 %v180, 113
    %v400 = vpop.permute.xlu0 %399
    %401 = vrot.lane.b32.xlu0 %v184, 113
    %v402 = vpop.permute.xlu0 %401
    %403 = vrot.lane.b32.xlu0 %v188, 113
    %v404 = vpop.permute.xlu0 %403
    %vm405 = vcmp.lt.s32.totalorder %v202, 113
    %v406 = vsel %vm405, %v402, %v404
    %v407 = vsel %vm405, %v400, %v402
    %v408 = vsel %vm405, %v398, %v400
    %v409 = vsel %vm405, %v404, %v398
    %s410 = scalar_lea.vmem %s1, 24
    %v411 = vld [vmem:[%s410] sm:$0xf]
    %v413 = vlaneseq
    %v414 = vshrl.u32 %v413, 7
    %v415 = vsub.s32 0, %v414
    %v416 = vrot.slane %v411, %v415
    %v417 = vlaneseq
    %v418 = vshrl.u32 %v417, 7
    %v419 = vsub.s32 1, %v418
    %v420 = vrot.slane %v411, %v419
    %v421 = vlaneseq
    %v422 = vshrl.u32 %v421, 7
    %v423 = vsub.s32 2, %v422
    %v424 = vrot.slane %v411, %v423
    %v425 = vlaneseq
    %v426 = vshrl.u32 %v425, 7
    %v427 = vsub.s32 3, %v426
    %v428 = vrot.slane %v411, %v427
    %v433 = vmul.f32 %v408, %v416
    %v434 = vmul.f32 %v407, %v420
    %v435 = vmul.f32 %v406, %v424
    %v436 = vmul.f32 %v409, %v428
    %437 = vrot.lane.b32.xlu0 %v176, 112
    %v438 = vpop.permute.xlu0 %437
    %439 = vrot.lane.b32.xlu0 %v180, 112
    %v440 = vpop.permute.xlu0 %439
    %441 = vrot.lane.b32.xlu0 %v184, 112
    %v442 = vpop.permute.xlu0 %441
    %443 = vrot.lane.b32.xlu0 %v188, 112
    %v444 = vpop.permute.xlu0 %443
    %vm445 = vcmp.lt.s32.totalorder %v202, 112
    %v446 = vsel %vm445, %v442, %v444
    %v447 = vsel %vm445, %v440, %v442
    %v448 = vsel %vm445, %v438, %v440
    %v449 = vsel %vm445, %v444, %v438
    %s450 = scalar_lea.vmem %s1, 28
    %v451 = vld [vmem:[%s450] sm:$0xf]
    %v453 = vlaneseq
    %v454 = vshrl.u32 %v453, 7
    %v455 = vsub.s32 0, %v454
    %v456 = vrot.slane %v451, %v455
    %v457 = vlaneseq
    %v458 = vshrl.u32 %v457, 7
    %v459 = vsub.s32 1, %v458
    %v460 = vrot.slane %v451, %v459
    %v461 = vlaneseq
    %v462 = vshrl.u32 %v461, 7
    %v463 = vsub.s32 2, %v462
    %v464 = vrot.slane %v451, %v463
    %v465 = vlaneseq
    %v466 = vshrl.u32 %v465, 7
    %v467 = vsub.s32 3, %v466
    %v468 = vrot.slane %v451, %v467
    %v473 = vmul.f32 %v448, %v456
    %v474 = vmul.f32 %v447, %v460
    %v475 = vmul.f32 %v446, %v464
    %v476 = vmul.f32 %v449, %v468
    %477 = vrot.lane.b32.xlu0 %v176, 111
    %v478 = vpop.permute.xlu0 %477
    %479 = vrot.lane.b32.xlu0 %v180, 111
    %v480 = vpop.permute.xlu0 %479
    %481 = vrot.lane.b32.xlu0 %v184, 111
    %v482 = vpop.permute.xlu0 %481
    %483 = vrot.lane.b32.xlu0 %v188, 111
    %v484 = vpop.permute.xlu0 %483
    %vm485 = vcmp.lt.s32.totalorder %v202, 111
    %v486 = vsel %vm485, %v482, %v484
    %v487 = vsel %vm485, %v480, %v482
    %v488 = vsel %vm485, %v478, %v480
    %v489 = vsel %vm485, %v484, %v478
    %s490 = scalar_lea.vmem %s1, 32
    %v491 = vld [vmem:[%s490] sm:$0xf]
    %v493 = vlaneseq
    %v494 = vshrl.u32 %v493, 7
    %v495 = vsub.s32 0, %v494
    %v496 = vrot.slane %v491, %v495
    %v497 = vlaneseq
    %v498 = vshrl.u32 %v497, 7
    %v499 = vsub.s32 1, %v498
    %v500 = vrot.slane %v491, %v499
    %v501 = vlaneseq
    %v502 = vshrl.u32 %v501, 7
    %v503 = vsub.s32 2, %v502
    %v504 = vrot.slane %v491, %v503
    %v505 = vlaneseq
    %v506 = vshrl.u32 %v505, 7
    %v507 = vsub.s32 3, %v506
    %v508 = vrot.slane %v491, %v507
    %v513 = vmul.f32 %v488, %v496
    %v514 = vmul.f32 %v487, %v500
    %v515 = vmul.f32 %v486, %v504
    %v516 = vmul.f32 %v489, %v508
    %v521 = vrot.slane %v270, 7
    %v522 = vrot.slane %v271, 7
    %v523 = vrot.slane %v272, 7
    %v524 = vrot.slane %v273, 7
    %v533 = vrot.slane %v310, 6
    %v534 = vrot.slane %v311, 6
    %v535 = vrot.slane %v312, 6
    %v536 = vrot.slane %v313, 6
    %v545 = vrot.slane %v350, 5
    %v546 = vrot.slane %v351, 5
    %v547 = vrot.slane %v352, 5
    %v548 = vrot.slane %v353, 5
    %v554 = vlaneseq
    %v555 = vshrl.u32 %v554, 7
    %v556 = vsub.s32 0, %v555
    %v557 = vrot.slane %v356, %v556
    %v558 = vlaneseq
    %v559 = vshrl.u32 %v558, 7
    %v560 = vsub.s32 1, %v559
    %v561 = vrot.slane %v356, %v560
    %v562 = vlaneseq
    %v563 = vshrl.u32 %v562, 7
    %v564 = vsub.s32 2, %v563
    %v565 = vrot.slane %v356, %v564
    %v566 = vlaneseq
    %v567 = vshrl.u32 %v566, 7
    %v568 = vsub.s32 3, %v567
    %v569 = vrot.slane %v356, %v568
    %v578 = vrot.slane %v393, 3
    %v579 = vrot.slane %v394, 3
    %v580 = vrot.slane %v395, 3
    %v581 = vrot.slane %v396, 3
    %v590 = vrot.slane %v433, 2
    %v591 = vrot.slane %v434, 2
    %v592 = vrot.slane %v435, 2
    %v593 = vrot.slane %v436, 2
    %v602 = vrot.slane %v473, 1
    %v603 = vrot.slane %v474, 1
    %v604 = vrot.slane %v475, 1
    %v605 = vrot.slane %v476, 1
    %vm610 = vcmask 1040384
    %v611 = vsel %vm610, %v230, %v521
    %v612 = vsel %vm610, %v231, %v522
    %v613 = vsel %vm610, %v232, %v523
    %v614 = vsel %vm610, %v233, %v524
    %vm615 = vcmask 1041408
    %v616 = vsel %vm615, %v611, %v533
    %v617 = vsel %vm615, %v612, %v534
    %v618 = vsel %vm615, %v613, %v535
    %v619 = vsel %vm615, %v614, %v536
    %vm620 = vcmask 1042432
    %v621 = vsel %vm620, %v616, %v545
    %v622 = vsel %vm620, %v617, %v546
    %v623 = vsel %vm620, %v618, %v547
    %v624 = vsel %vm620, %v619, %v548
    %vm625 = vcmask 1043456
    %v626 = vsel %vm625, %v621, %v557
    %v627 = vsel %vm625, %v622, %v561
    %v628 = vsel %vm625, %v623, %v565
    %v629 = vsel %vm625, %v624, %v569
    %vm630 = vcmask 1044480
    %v631 = vsel %vm630, %v626, %v578
    %v632 = vsel %vm630, %v627, %v579
    %v633 = vsel %vm630, %v628, %v580
    %v634 = vsel %vm630, %v629, %v581
    %vm635 = vcmask 1045504
    %v636 = vsel %vm635, %v631, %v590
    %v637 = vsel %vm635, %v632, %v591
    %v638 = vsel %vm635, %v633, %v592
    %v639 = vsel %vm635, %v634, %v593
    %vm640 = vcmask 1046528
    %v641 = vsel %vm640, %v636, %v602
    %v642 = vsel %vm640, %v637, %v603
    %v643 = vsel %vm640, %v638, %v604
    %v644 = vsel %vm640, %v639, %v605
    %v645 = vld [vmem:[%s11] sm:$0x3]
    %v646 = vpack.c.bf16 %v513, %v641
    %v647 = vpack.c.bf16 %v514, %v642
    %v648 = vpack.c.bf16 %v515, %v643
    %v649 = vpack.c.bf16 %v516, %v644
    %vm650 = vcmask 72704
    %v652 = vsel %vm650, %v645, 0
    %v654 = vsel %vm625, 4294967295, 65535
    %v655 = vsel %vm630, %v654, 0
    %v657 = vand.u32 %v646, %v655
    %v660 = vand.u32 %v647, %v655
    %v663 = vand.u32 %v648, %v655
    %v666 = vand.u32 %v649, %v655
    %668 = vmatprep.subr.bf16.mxu0 0
    %669 = vmatpush1.bf16.msra.mxu0 0
    %670 = vmatprep.subr.bf16.mxu0 0
    %671 = vmatpush1.bf16.msra.mxu0 0
    %672 = vmatprep.subr.bf16.mxu0 0
    %673 = vmatpush1.bf16.msra.mxu0 0
    %674 = vmatprep.subr.bf16.mxu0 0
    %675 = vmatpush1.bf16.msra.mxu0 0
    %676 = vmatprep.subr.bf16.mxu0 0
    %677 = vmatpush1.bf16.msra.mxu0 0
    %678 = vmatprep.subr.bf16.mxu0 0
    %679 = vmatpush1.bf16.msra.mxu0 0
    %680 = vmatprep.subr.bf16.mxu0 0
    %681 = vmatpush1.bf16.msra.mxu0 0
    %682 = vmatprep.subr.bf16.mxu0 %v660
    %683 = vmatpush1.bf16.msra.mxu0 %v657
    %684 = vmatprep.subr.bf16.mxu0 0
    %685 = vmatpush2.bf16.msra.mxu0 0
    %686 = vmatprep.subr.bf16.mxu0 0
    %687 = vmatpush2.bf16.msra.mxu0 0
    %688 = vmatprep.subr.bf16.mxu0 0
    %689 = vmatpush2.bf16.msra.mxu0 0
    %690 = vmatprep.subr.bf16.mxu0 0
    %691 = vmatpush2.bf16.msra.mxu0 0
    %692 = vmatprep.subr.bf16.mxu0 0
    %693 = vmatpush2.bf16.msra.mxu0 0
    %694 = vmatprep.subr.bf16.mxu0 0
    %695 = vmatpush2.bf16.msra.mxu0 0
    %696 = vmatprep.subr.bf16.mxu0 0
    %697 = vmatpush2.bf16.msra.mxu0 0
    %698 = vmatprep.subr.bf16.mxu0 0
    %699 = vmatpush2.bf16.msra.mxu0 0
    %700 = vmatprep.mubr.bf16.mxu0 0
    %701 = vmatmul.mubr.bf16.gmra.mxu0 %v652
    %v702 = vpop.f32.mrf.mxu0
    %v703 = vadd.f32 0.0, %v702
    %v704 = vpop.f32.mrf.mxu0
    %v705 = vadd.f32 0.0, %v704
    %v706 = vpop.f32.mrf.mxu0
    %v707 = vpop.f32.mrf.mxu0
    %708 = vdwg.mxu0
    %709 = vmatprep.subr.bf16.mxu0 0
    %710 = vmatpush1.bf16.msra.mxu0 0
    %711 = vmatprep.subr.bf16.mxu0 0
    %712 = vmatpush1.bf16.msra.mxu0 0
    %713 = vmatprep.subr.bf16.mxu0 0
    %714 = vmatpush1.bf16.msra.mxu0 0
    %715 = vmatprep.subr.bf16.mxu0 0
    %716 = vmatpush1.bf16.msra.mxu0 0
    %717 = vmatprep.subr.bf16.mxu0 0
    %718 = vmatpush1.bf16.msra.mxu0 0
    %719 = vmatprep.subr.bf16.mxu0 0
    %720 = vmatpush1.bf16.msra.mxu0 0
    %721 = vmatprep.subr.bf16.mxu0 0
    %722 = vmatpush1.bf16.msra.mxu0 0
    %723 = vmatprep.subr.bf16.mxu0 %v666
    %724 = vmatpush1.bf16.msra.mxu0 %v663
    %725 = vmatprep.subr.bf16.mxu0 0
    %726 = vmatpush2.bf16.msra.mxu0 0
    %727 = vmatprep.subr.bf16.mxu0 0
    %728 = vmatpush2.bf16.msra.mxu0 0
    %729 = vmatprep.subr.bf16.mxu0 0
    %730 = vmatpush2.bf16.msra.mxu0 0
    %731 = vmatprep.subr.bf16.mxu0 0
    %732 = vmatpush2.bf16.msra.mxu0 0
    %733 = vmatprep.subr.bf16.mxu0 0
    %734 = vmatpush2.bf16.msra.mxu0 0
    %735 = vmatprep.subr.bf16.mxu0 0
    %736 = vmatpush2.bf16.msra.mxu0 0
    %737 = vmatprep.subr.bf16.mxu0 0
    %738 = vmatpush2.bf16.msra.mxu0 0
    %739 = vmatprep.subr.bf16.mxu0 0
    %740 = vmatpush2.bf16.msra.mxu0 0
    %741 = vmatprep.mubr.bf16.mxu0 0
    %742 = vmatmul.mubr.bf16.gmra.mxu0 %v652
    %v743 = vpop.f32.mrf.mxu0
    %v744 = vadd.f32 0.0, %v743
    %v745 = vpop.f32.mrf.mxu0
    %v746 = vadd.f32 0.0, %v745
    %v747 = vpop.f32.mrf.mxu0
    %v748 = vpop.f32.mrf.mxu0
    %749 = vdwg.mxu0
    %v750 = vld [vmem:[#allocation5] sm:$0xf]
    %v752 = vlaneseq
    %v753 = vshrl.u32 %v752, 7
    %v754 = vsub.s32 0, %v753
    %v755 = vrot.slane %v750, %v754
    %v756 = vlaneseq
    %v757 = vshrl.u32 %v756, 7
    %v758 = vsub.s32 1, %v757
    %v759 = vrot.slane %v750, %v758
    %v760 = vlaneseq
    %v761 = vshrl.u32 %v760, 7
    %v762 = vsub.s32 2, %v761
    %v763 = vrot.slane %v750, %v762
    %v764 = vlaneseq
    %v765 = vshrl.u32 %v764, 7
    %v766 = vsub.s32 3, %v765
    %v767 = vrot.slane %v750, %v766
    %v772 = vmul.f32 %v703, %v755
    %v773 = vmul.f32 %v705, %v759
    %v774 = vmul.f32 %v744, %v763
    %v775 = vmul.f32 %v746, %v767
    %v776 = vsel %vm625, %v772, 0.0
    %v777 = vsel %vm625, %v773, 0.0
    %v778 = vadd.f32 %v776, %v777
    %v779 = vsel %vm625, %v774, 0.0
    %v780 = vadd.f32 %v778, %v779
    %v781 = vsel %vm625, %v775, 0.0
    %v782 = vadd.f32 %v780, %v781
    %783 = vadd.xlane.f32.xlu0 %v782
    %v784 = vpop.xlane.xlu0 %783
    %v785 = vmul.f32 %v784, 0.00390625
    %v786 = vmul.f32 %v785, %v755
    %v787 = vmul.f32 %v785, %v759
    %v788 = vmul.f32 %v785, %v763
    %v789 = vmul.f32 %v785, %v767
    %v790 = vadd.f32 %v786, 0.0
    %v791 = vadd.f32 %v787, 0.0
    %v792 = vadd.f32 %v788, 0.0
    %v793 = vadd.f32 %v789, 0.0
    %s794 = scalar_lea.vmem [#allocation5], 4
    %v795 = vld [vmem:[%s794] sm:$0xf]
    %v797 = vlaneseq
    %v798 = vshrl.u32 %v797, 7
    %v799 = vsub.s32 0, %v798
    %v800 = vrot.slane %v795, %v799
    %v801 = vlaneseq
    %v802 = vshrl.u32 %v801, 7
    %v803 = vsub.s32 1, %v802
    %v804 = vrot.slane %v795, %v803
    %v805 = vlaneseq
    %v806 = vshrl.u32 %v805, 7
    %v807 = vsub.s32 2, %v806
    %v808 = vrot.slane %v795, %v807
    %v809 = vlaneseq
    %v810 = vshrl.u32 %v809, 7
    %v811 = vsub.s32 3, %v810
    %v812 = vrot.slane %v795, %v811
    %v817 = vmul.f32 %v703, %v800
    %v818 = vmul.f32 %v705, %v804
    %v819 = vmul.f32 %v744, %v808
    %v820 = vmul.f32 %v746, %v812
    %v821 = vsel %vm625, %v817, 0.0
    %v822 = vsel %vm625, %v818, 0.0
    %v823 = vadd.f32 %v821, %v822
    %v824 = vsel %vm625, %v819, 0.0
    %v825 = vadd.f32 %v823, %v824
    %v826 = vsel %vm625, %v820, 0.0
    %v827 = vadd.f32 %v825, %v826
    %828 = vadd.xlane.f32.xlu0 %v827
    %v829 = vpop.xlane.xlu0 %828
    %v830 = vmul.f32 %v829, 0.00390625
    %v831 = vmul.f32 %v830, %v800
    %v832 = vmul.f32 %v830, %v804
    %v833 = vmul.f32 %v830, %v808
    %v834 = vmul.f32 %v830, %v812
    %v835 = vadd.f32 %v790, %v831
    %v836 = vadd.f32 %v791, %v832
    %v837 = vadd.f32 %v792, %v833
    %v838 = vadd.f32 %v793, %v834
    %v839 = vsub.f32 %v703, %v835
    %v840 = vsub.f32 %v705, %v836
    %v841 = vsub.f32 %v744, %v837
    %v842 = vsub.f32 %v746, %v838
    %v843 = vmul.f32 %v839, %v839
    %v844 = vmul.f32 %v840, %v840
    %v845 = vmul.f32 %v841, %v841
    %v846 = vmul.f32 %v842, %v842
    %v847 = vmul.f32 %v843, %v755
    %v848 = vmul.f32 %v844, %v759
    %v849 = vmul.f32 %v845, %v763
    %v850 = vmul.f32 %v846, %v767
    %v851 = vsel %vm625, %v847, 0.0
    %v852 = vsel %vm625, %v848, 0.0
    %v853 = vadd.f32 %v851, %v852
    %v854 = vsel %vm625, %v849, 0.0
    %v855 = vadd.f32 %v853, %v854
    %v856 = vsel %vm625, %v850, 0.0
    %v857 = vadd.f32 %v855, %v856
    %858 = vadd.xlane.f32.xlu0 %v857
    %v859 = vpop.xlane.xlu0 %858
    %v860 = vmul.f32 %v859, 0.00390625
    %v861 = vmul.f32 %v860, %v755
    %v862 = vmul.f32 %v860, %v759
    %v863 = vmul.f32 %v860, %v763
    %v864 = vmul.f32 %v860, %v767
    %v865 = vadd.f32 %v861, 0.0
    %v866 = vadd.f32 %v862, 0.0
    %v867 = vadd.f32 %v863, 0.0
    %v868 = vadd.f32 %v864, 0.0
    %v869 = vmul.f32 %v843, %v800
    %v870 = vmul.f32 %v844, %v804
    %v871 = vmul.f32 %v845, %v808
    %v872 = vmul.f32 %v846, %v812
    %v873 = vsel %vm625, %v869, 0.0
    %v874 = vsel %vm625, %v870, 0.0
    %v875 = vadd.f32 %v873, %v874
    %v876 = vsel %vm625, %v871, 0.0
    %v877 = vadd.f32 %v875, %v876
    %v878 = vsel %vm625, %v872, 0.0
    %v879 = vadd.f32 %v877, %v878
    %880 = vadd.xlane.f32.xlu0 %v879
    %v881 = vpop.xlane.xlu0 %880
    %v882 = vmul.f32 %v881, 0.00390625
    %v883 = vmul.f32 %v882, %v800
    %v884 = vmul.f32 %v882, %v804
    %v885 = vmul.f32 %v882, %v808
    %v886 = vmul.f32 %v882, %v812
    %v887 = vadd.f32 %v865, %v883
    %v888 = vadd.f32 %v866, %v884
    %v889 = vadd.f32 %v867, %v885
    %v890 = vadd.f32 %v868, %v886
    %v891 = vadd.f32 %v887, 1e-05
    %v892 = vadd.f32 %v888, 1e-05
    %v893 = vadd.f32 %v889, 1e-05
    %v894 = vadd.f32 %v890, 1e-05
    %v895 = vrsqrt.pop %v891
    %v896 = vrsqrt.pop %v892
    %v897 = vrsqrt.pop %v893
    %v898 = vrsqrt.pop %v894
    %v899 = vmul.f32 %v839, %v895
    %v900 = vmul.f32 %v840, %v896
    %v901 = vmul.f32 %v841, %v897
    %v902 = vmul.f32 %v842, %v898
    %v903 = vmax.f32 %v899, 0.0
    %v904 = vmax.f32 %v900, 0.0
    %v905 = vmax.f32 %v901, 0.0
    %v906 = vmax.f32 %v902, 0.0
    %907 = vrot.lane.b32.xlu0 %v903, 127
    %v908 = vpop.permute.xlu0 %907
    %909 = vrot.lane.b32.xlu0 %v904, 127
    %v910 = vpop.permute.xlu0 %909
    %911 = vrot.lane.b32.xlu0 %v905, 127
    %v912 = vpop.permute.xlu0 %911
    %913 = vrot.lane.b32.xlu0 %v906, 127
    %v914 = vpop.permute.xlu0 %913
    %v915 = vsel %vm365, %v912, %v914
    %v916 = vsel %vm365, %v910, %v912
    %v917 = vsel %vm365, %v908, %v910
    %v918 = vsel %vm365, %v914, %v908
    %v919 = vmax.f32 %v903, %v917
    %v920 = vmax.f32 %v904, %v916
    %v921 = vmax.f32 %v905, %v915
    %v922 = vmax.f32 %v906, %v918
    %923 = vrot.lane.b32.xlu0 %v919, 112
    %v924 = vpop.permute.xlu0 %923
    %925 = vrot.lane.b32.xlu0 %v920, 112
    %v926 = vpop.permute.xlu0 %925
    %927 = vrot.lane.b32.xlu0 %v921, 112
    %v928 = vpop.permute.xlu0 %927
    %929 = vrot.lane.b32.xlu0 %v922, 112
    %v930 = vpop.permute.xlu0 %929
    %v931 = vsel %vm445, %v928, %v930
    %v932 = vsel %vm445, %v926, %v928
    %v933 = vsel %vm445, %v924, %v926
    %v934 = vsel %vm445, %v930, %v924
    %v935 = vmax.f32 %v919, %v933
    %v936 = vmax.f32 %v920, %v932
    %v937 = vmax.f32 %v921, %v931
    %v938 = vmax.f32 %v922, %v934
    %v939 = vld [vmem:[#allocation10] sm:$0xff]
    %v940 = vld [vmem:[#allocation10 + $0x8] sm:$0xff]
    %v941 = vld [vmem:[#allocation10 + $0x10] sm:$0xff]
    %v942 = vld [vmem:[#allocation10 + $0x18] sm:$0xff]
    %v943 = vld [vmem:[#allocation10 + $0x20] sm:$0xff]
    %v944 = vld [vmem:[#allocation10 + $0x28] sm:$0xff]
    %v945 = vld [vmem:[#allocation10 + $0x30] sm:$0xff]
    %v946 = vld [vmem:[#allocation10 + $0x38] sm:$0xff]
    %v947 = vld [vmem:[#allocation10 + $0x40] sm:$0xff]
    %v948 = vld [vmem:[#allocation10 + $0x48] sm:$0xff]
    %v949 = vld [vmem:[#allocation10 + $0x50] sm:$0xff]
    %v950 = vld [vmem:[#allocation10 + $0x58] sm:$0xff]
    %v951 = vld [vmem:[#allocation10 + $0x60] sm:$0xff]
    %v952 = vld [vmem:[#allocation10 + $0x68] sm:$0xff]
    %v953 = vld [vmem:[#allocation10 + $0x70] sm:$0xff]
    %v954 = vld [vmem:[#allocation10 + $0x78] sm:$0xff]
    %v955 = vld [vmem:[#allocation10 + $0x80] sm:$0xff]
    %v956 = vld [vmem:[#allocation10 + $0x88] sm:$0xff]
    %v957 = vld [vmem:[#allocation10 + $0x90] sm:$0xff]
    %v958 = vld [vmem:[#allocation10 + $0x98] sm:$0xff]
    %v959 = vld [vmem:[#allocation10 + $0xa0] sm:$0xff]
    %v960 = vld [vmem:[#allocation10 + $0xa8] sm:$0xff]
    %v961 = vld [vmem:[#allocation10 + $0xb0] sm:$0xff]
    %v962 = vld [vmem:[#allocation10 + $0xb8] sm:$0xff]
    %v963 = vld [vmem:[#allocation10 + $0xc0] sm:$0xff]
    %v964 = vld [vmem:[#allocation10 + $0xc8] sm:$0xff]
    %v965 = vld [vmem:[#allocation10 + $0xd0] sm:$0xff]
    %v966 = vld [vmem:[#allocation10 + $0xd8] sm:$0xff]
    %v967 = vld [vmem:[#allocation10 + $0xe0] sm:$0xff]
    %v968 = vld [vmem:[#allocation10 + $0xe8] sm:$0xff]
    %v969 = vld [vmem:[#allocation10 + $0xf0] sm:$0xff]
    %v970 = vld [vmem:[#allocation10 + $0xf8] sm:$0xff]
    %v971 = vld [vmem:[#allocation10 + $0x100] sm:$0xff]
    %v972 = vld [vmem:[#allocation10 + $0x108] sm:$0xff]
    %v973 = vld [vmem:[#allocation10 + $0x110] sm:$0xff]
    %v974 = vld [vmem:[#allocation10 + $0x118] sm:$0xff]
    %v975 = vld [vmem:[#allocation10 + $0x120] sm:$0xff]
    %v976 = vld [vmem:[#allocation10 + $0x128] sm:$0xff]
    %v977 = vld [vmem:[#allocation10 + $0x130] sm:$0xff]
    %v978 = vld [vmem:[#allocation10 + $0x138] sm:$0xff]
    %v979 = vld [vmem:[#allocation10 + $0x140] sm:$0xff]
    %v980 = vld [vmem:[#allocation10 + $0x148] sm:$0xff]
    %v981 = vld [vmem:[#allocation10 + $0x150] sm:$0xff]
    %v982 = vld [vmem:[#allocation10 + $0x158] sm:$0xff]
    %v983 = vld [vmem:[#allocation10 + $0x160] sm:$0xff]
    %v984 = vld [vmem:[#allocation10 + $0x168] sm:$0xff]
    %v985 = vld [vmem:[#allocation10 + $0x170] sm:$0xff]
    %v986 = vld [vmem:[#allocation10 + $0x178] sm:$0xff]
    %v987 = vld [vmem:[#allocation10 + $0x180] sm:$0xff]
    %v988 = vld [vmem:[#allocation10 + $0x188] sm:$0xff]
    %v989 = vld [vmem:[#allocation10 + $0x190] sm:$0xff]
    %v990 = vld [vmem:[#allocation10 + $0x198] sm:$0xff]
    %v991 = vld [vmem:[#allocation10 + $0x1a0] sm:$0xff]
    %v992 = vld [vmem:[#allocation10 + $0x1a8] sm:$0xff]
    %v993 = vld [vmem:[#allocation10 + $0x1b0] sm:$0xff]
    %v994 = vld [vmem:[#allocation10 + $0x1b8] sm:$0xff]
    %v995 = vld [vmem:[#allocation10 + $0x1c0] sm:$0xff]
    %v996 = vld [vmem:[#allocation10 + $0x1c8] sm:$0xff]
    %v997 = vld [vmem:[#allocation10 + $0x1d0] sm:$0xff]
    %v998 = vld [vmem:[#allocation10 + $0x1d8] sm:$0xff]
    %v999 = vld [vmem:[#allocation10 + $0x1e0] sm:$0xff]
    %v1000 = vld [vmem:[#allocation10 + $0x1e8] sm:$0xff]
    %v1001 = vld [vmem:[#allocation10 + $0x1f0] sm:$0xff]
    %v1002 = vld [vmem:[#allocation10 + $0x1f8] sm:$0xff]
    %1003 = vmatprep.subr.mxu0 0.0
    %1004 = vmatpush1.msra.mxu0 %v954
    %1005 = vmatprep.subr.mxu0 0.0
    %1006 = vmatpush1.msra.mxu0 %v953
    %1007 = vmatprep.subr.mxu0 0.0
    %1008 = vmatpush1.msra.mxu0 %v952
    %1009 = vmatprep.subr.mxu0 0.0
    %1010 = vmatpush1.msra.mxu0 %v951
    %1011 = vmatprep.subr.mxu0 0.0
    %1012 = vmatpush1.msra.mxu0 %v950
    %1013 = vmatprep.subr.mxu0 0.0
    %1014 = vmatpush1.msra.mxu0 %v949
    %1015 = vmatprep.subr.mxu0 0.0
    %1016 = vmatpush1.msra.mxu0 %v948
    %1017 = vmatprep.subr.mxu0 0.0
    %1018 = vmatpush1.msra.mxu0 %v947
    %1019 = vmatprep.subr.mxu0 0.0
    %1020 = vmatpush1.msra.mxu0 %v946
    %1021 = vmatprep.subr.mxu0 0.0
    %1022 = vmatpush1.msra.mxu0 %v945
    %1023 = vmatprep.subr.mxu0 0.0
    %1024 = vmatpush1.msra.mxu0 %v944
    %1025 = vmatprep.subr.mxu0 0.0
    %1026 = vmatpush1.msra.mxu0 %v943
    %1027 = vmatprep.subr.mxu0 0.0
    %1028 = vmatpush1.msra.mxu0 %v942
    %1029 = vmatprep.subr.mxu0 0.0
    %1030 = vmatpush1.msra.mxu0 %v941
    %1031 = vmatprep.subr.mxu0 0.0
    %1032 = vmatpush1.msra.mxu0 %v940
    %1033 = vmatprep.subr.mxu0 0.0
    %1034 = vmatpush1.msra.mxu0 %v939
    %1035 = vmatprep.subr.mxu0 0.0
    %1036 = vmatpush2.msra.mxu0 %v970
    %1037 = vmatprep.subr.mxu0 0.0
    %1038 = vmatpush2.msra.mxu0 %v969
    %1039 = vmatprep.subr.mxu0 0.0
    %1040 = vmatpush2.msra.mxu0 %v968
    %1041 = vmatprep.subr.mxu0 0.0
    %1042 = vmatpush2.msra.mxu0 %v967
    %1043 = vmatprep.subr.mxu0 0.0
    %1044 = vmatpush2.msra.mxu0 %v966
    %1045 = vmatprep.subr.mxu0 0.0
    %1046 = vmatpush2.msra.mxu0 %v965
    %1047 = vmatprep.subr.mxu0 0.0
    %1048 = vmatpush2.msra.mxu0 %v964
    %1049 = vmatprep.subr.mxu0 0.0
    %1050 = vmatpush2.msra.mxu0 %v963
    %1051 = vmatprep.subr.mxu0 0.0
    %1052 = vmatpush2.msra.mxu0 %v962
    %1053 = vmatprep.subr.mxu0 0.0
    %1054 = vmatpush2.msra.mxu0 %v961
    %1055 = vmatprep.subr.mxu0 0.0
    %1056 = vmatpush2.msra.mxu0 %v960
    %1057 = vmatprep.subr.mxu0 0.0
    %1058 = vmatpush2.msra.mxu0 %v959
    %1059 = vmatprep.subr.mxu0 0.0
    %1060 = vmatpush2.msra.mxu0 %v958
    %1061 = vmatprep.subr.mxu0 0.0
    %1062 = vmatpush2.msra.mxu0 %v957
    %1063 = vmatprep.subr.mxu0 0.0
    %1064 = vmatpush2.msra.mxu0 %v956
    %1065 = vmatprep.subr.mxu0 0.0
    %1066 = vmatpush2.msra.mxu0 %v955
    %1067 = vmatprep.mubr.f32.mxu0 %v936
    %1068 = vmatmul.mubr.f32.gmra.mxu0 %v935
    %v1069 = vpop.f32.mrf.mxu0
    %v1070 = vadd.f32 0.0, %v1069
    %v1071 = vpop.f32.mrf.mxu0
    %1072 = vdwg.mxu0
    %1073 = vmatprep.subr.mxu0 0.0
    %1074 = vmatpush1.msra.mxu0 %v986
    %1075 = vmatprep.subr.mxu0 0.0
    %1076 = vmatpush1.msra.mxu0 %v985
    %1077 = vmatprep.subr.mxu0 0.0
    %1078 = vmatpush1.msra.mxu0 %v984
    %1079 = vmatprep.subr.mxu0 0.0
    %1080 = vmatpush1.msra.mxu0 %v983
    %1081 = vmatprep.subr.mxu0 0.0
    %1082 = vmatpush1.msra.mxu0 %v982
    %1083 = vmatprep.subr.mxu0 0.0
    %1084 = vmatpush1.msra.mxu0 %v981
    %1085 = vmatprep.subr.mxu0 0.0
    %1086 = vmatpush1.msra.mxu0 %v980
    %1087 = vmatprep.subr.mxu0 0.0
    %1088 = vmatpush1.msra.mxu0 %v979
    %1089 = vmatprep.subr.mxu0 0.0
    %1090 = vmatpush1.msra.mxu0 %v978
    %1091 = vmatprep.subr.mxu0 0.0
    %1092 = vmatpush1.msra.mxu0 %v977
    %1093 = vmatprep.subr.mxu0 0.0
    %1094 = vmatpush1.msra.mxu0 %v976
    %1095 = vmatprep.subr.mxu0 0.0
    %1096 = vmatpush1.msra.mxu0 %v975
    %1097 = vmatprep.subr.mxu0 0.0
    %1098 = vmatpush1.msra.mxu0 %v974
    %1099 = vmatprep.subr.mxu0 0.0
    %1100 = vmatpush1.msra.mxu0 %v973
    %1101 = vmatprep.subr.mxu0 0.0
    %1102 = vmatpush1.msra.mxu0 %v972
    %1103 = vmatprep.subr.mxu0 0.0
    %1104 = vmatpush1.msra.mxu0 %v971
    %1105 = vmatprep.subr.mxu0 0.0
    %1106 = vmatpush2.msra.mxu0 %v1002
    %1107 = vmatprep.subr.mxu0 0.0
    %1108 = vmatpush2.msra.mxu0 %v1001
    %1109 = vmatprep.subr.mxu0 0.0
    %1110 = vmatpush2.msra.mxu0 %v1000
    %1111 = vmatprep.subr.mxu0 0.0
    %1112 = vmatpush2.msra.mxu0 %v999
    %1113 = vmatprep.subr.mxu0 0.0
    %1114 = vmatpush2.msra.mxu0 %v998
    %1115 = vmatprep.subr.mxu0 0.0
    %1116 = vmatpush2.msra.mxu0 %v997
    %1117 = vmatprep.subr.mxu0 0.0
    %1118 = vmatpush2.msra.mxu0 %v996
    %1119 = vmatprep.subr.mxu0 0.0
    %1120 = vmatpush2.msra.mxu0 %v995
    %1121 = vmatprep.subr.mxu0 0.0
    %1122 = vmatpush2.msra.mxu0 %v994
    %1123 = vmatprep.subr.mxu0 0.0
    %1124 = vmatpush2.msra.mxu0 %v993
    %1125 = vmatprep.subr.mxu0 0.0
    %1126 = vmatpush2.msra.mxu0 %v992
    %1127 = vmatprep.subr.mxu0 0.0
    %1128 = vmatpush2.msra.mxu0 %v991
    %1129 = vmatprep.subr.mxu0 0.0
    %1130 = vmatpush2.msra.mxu0 %v990
    %1131 = vmatprep.subr.mxu0 0.0
    %1132 = vmatpush2.msra.mxu0 %v989
    %1133 = vmatprep.subr.mxu0 0.0
    %1134 = vmatpush2.msra.mxu0 %v988
    %1135 = vmatprep.subr.mxu0 0.0
    %1136 = vmatpush2.msra.mxu0 %v987
    %1137 = vmatprep.mubr.f32.mxu0 %v938
    %1138 = vmatmul.mubr.f32.gmra.mxu0 %v937
    %v1139 = vpop.f32.mrf.mxu0
    %v1140 = vadd.f32 %v1070, %v1139
    %v1141 = vpop.f32.mrf.mxu0
    %1142 = vdwg.mxu0
    %1143 = vrot.lane.b32.xlu0 %v1140, 9
    %v1144 = vpop.permute.xlu0 %1143
    %v1145 = vld [vmem:[%s2] sm:$0x1]
    %v1147 = vlaneseq
    %v1148 = vshrl.u32 %v1147, 7
    %v1149 = vsub.s32 0, %v1148
    %v1150 = vrot.slane %v1145, %v1149
    %v1152 = vmul.f32 %v1144, %v1150
    %1153 = vrot.lane.b32.xlu0 %v1140, 8
    %v1154 = vpop.permute.xlu0 %1153
    %s1155 = scalar_lea.vmem %s2, 1
    %v1156 = vld [vmem:[%s1155] sm:$0x1]
    %v1158 = vlaneseq
    %v1159 = vshrl.u32 %v1158, 7
    %v1160 = vsub.s32 0, %v1159
    %v1161 = vrot.slane %v1156, %v1160
    %v1163 = vmul.f32 %v1154, %v1161
    %1164 = vrot.lane.b32.xlu0 %v1140, 7
    %v1165 = vpop.permute.xlu0 %1164
    %s1166 = scalar_lea.vmem %s2, 2
    %v1167 = vld [vmem:[%s1166] sm:$0x1]
    %v1169 = vlaneseq
    %v1170 = vshrl.u32 %v1169, 7
    %v1171 = vsub.s32 0, %v1170
    %v1172 = vrot.slane %v1167, %v1171
    %v1174 = vmul.f32 %v1165, %v1172
    %1175 = vrot.lane.b32.xlu0 %v1140, 1
    %v1176 = vpop.permute.xlu0 %1175
    %s1177 = scalar_lea.vmem %s2, 3
    %v1178 = vld [vmem:[%s1177] sm:$0x1]
    %v1180 = vlaneseq
    %v1181 = vshrl.u32 %v1180, 7
    %v1182 = vsub.s32 0, %v1181
    %v1183 = vrot.slane %v1178, %v1182
    %v1185 = vmul.f32 %v1176, %v1183
    %s1186 = scalar_lea.vmem %s2, 4
    %v1187 = vld [vmem:[%s1186] sm:$0x1]
    %v1189 = vlaneseq
    %v1190 = vshrl.u32 %v1189, 7
    %v1191 = vsub.s32 0, %v1190
    %v1192 = vrot.slane %v1187, %v1191
    %v1194 = vmul.f32 %v1140, %v1192
    %1195 = vrot.lane.b32.xlu0 %v1140, 127
    %v1196 = vpop.permute.xlu0 %1195
    %s1197 = scalar_lea.vmem %s2, 5
    %v1198 = vld [vmem:[%s1197] sm:$0x1]
    %v1200 = vlaneseq
    %v1201 = vshrl.u32 %v1200, 7
    %v1202 = vsub.s32 0, %v1201
    %v1203 = vrot.slane %v1198, %v1202
    %v1205 = vmul.f32 %v1196, %v1203
    %1206 = vrot.lane.b32.xlu0 %v1140, 121
    %v1207 = vpop.permute.xlu0 %1206
    %s1208 = scalar_lea.vmem %s2, 6
    %v1209 = vld [vmem:[%s1208] sm:$0x1]
    %v1211 = vlaneseq
    %v1212 = vshrl.u32 %v1211, 7
    %v1213 = vsub.s32 0, %v1212
    %v1214 = vrot.slane %v1209, %v1213
    %v1216 = vmul.f32 %v1207, %v1214
    %1217 = vrot.lane.b32.xlu0 %v1140, 120
    %v1218 = vpop.permute.xlu0 %1217
    %s1219 = scalar_lea.vmem %s2, 7
    %v1220 = vld [vmem:[%s1219] sm:$0x1]
    %v1222 = vlaneseq
    %v1223 = vshrl.u32 %v1222, 7
    %v1224 = vsub.s32 0, %v1223
    %v1225 = vrot.slane %v1220, %v1224
    %v1227 = vmul.f32 %v1218, %v1225
    %1228 = vrot.lane.b32.xlu0 %v1140, 119
    %v1229 = vpop.permute.xlu0 %1228
    %s1230 = scalar_lea.vmem %s2, 8
    %v1231 = vld [vmem:[%s1230] sm:$0x1]
    %v1233 = vlaneseq
    %v1234 = vshrl.u32 %v1233, 7
    %v1235 = vsub.s32 0, %v1234
    %v1236 = vrot.slane %v1231, %v1235
    %v1238 = vmul.f32 %v1229, %v1236
    %v1240 = vrot.slane %v1163, 4
    %v1243 = vrot.slane %v1185, 4
    %v1246 = vrot.slane %v1205, 4
    %v1249 = vrot.slane %v1227, 4
    %v1251 = vsel %vm625, %v1152, %v1240
    %v1252 = vsel %vm625, %v1174, %v1243
    %v1253 = vsel %vm625, %v1194, %v1246
    %v1254 = vsel %vm625, %v1216, %v1249
    %v1255 = vld [vmem:[%s12] sm:$0xf]
    %v1256 = vpack.c.bf16 %v1252, %v1251
    %v1257 = vpack.c.bf16 %v1254, %v1253
    %v1258 = vpack.c.bf16 %v1238, %v1238
    %vm1259 = vcmask 293888
    %v1261 = vsel %vm1259, %v1255, 0
    %v1264 = vsel %vm615, %v1258, 0
    %1266 = vmatprep.subr.bf16.mxu0 0
    %1267 = vmatpush1.bf16.msra.mxu0 0
    %1268 = vmatprep.subr.bf16.mxu0 0
    %1269 = vmatpush1.bf16.msra.mxu0 0
    %1270 = vmatprep.subr.bf16.mxu0 0
    %1271 = vmatpush1.bf16.msra.mxu0 0
    %1272 = vmatprep.subr.bf16.mxu0 0
    %1273 = vmatpush1.bf16.msra.mxu0 0
    %1274 = vmatprep.subr.bf16.mxu0 0
    %1275 = vmatpush1.bf16.msra.mxu0 0
    %1276 = vmatprep.subr.bf16.mxu0 0
    %1277 = vmatpush1.bf16.msra.mxu0 %v1264
    %1278 = vmatprep.subr.bf16.mxu0 0
    %1279 = vmatpush1.bf16.msra.mxu0 %v1257
    %1280 = vmatprep.subr.bf16.mxu0 0
    %1281 = vmatpush1.bf16.msra.mxu0 %v1256
    %1282 = vmatprep.subr.bf16.mxu0 0
    %1283 = vmatpush2.bf16.msra.mxu0 0
    %1284 = vmatprep.subr.bf16.mxu0 0
    %1285 = vmatpush2.bf16.msra.mxu0 0
    %1286 = vmatprep.subr.bf16.mxu0 0
    %1287 = vmatpush2.bf16.msra.mxu0 0
    %1288 = vmatprep.subr.bf16.mxu0 0
    %1289 = vmatpush2.bf16.msra.mxu0 0
    %1290 = vmatprep.subr.bf16.mxu0 0
    %1291 = vmatpush2.bf16.msra.mxu0 0
    %1292 = vmatprep.subr.bf16.mxu0 0
    %1293 = vmatpush2.bf16.msra.mxu0 0
    %1294 = vmatprep.subr.bf16.mxu0 0
    %1295 = vmatpush2.bf16.msra.mxu0 0
    %1296 = vmatprep.subr.bf16.mxu0 0
    %1297 = vmatpush2.bf16.msra.mxu0 0
    %1298 = vmatprep.mubr.bf16.mxu0 0
    %1299 = vmatmul.mubr.bf16.gmra.mxu0 %v1261
    %v1300 = vpop.f32.mrf.mxu0
    %v1301 = vadd.f32 0.0, %v1300
    %v1302 = vpop.f32.mrf.mxu0
    %v1303 = vpop.f32.mrf.mxu0
    %v1304 = vpop.f32.mrf.mxu0
    %1305 = vdwg.mxu0
    %v1306 = vld [vmem:[#allocation7] sm:$0x1]
    %v1308 = vlaneseq
    %v1309 = vshrl.u32 %v1308, 7
    %v1310 = vsub.s32 0, %v1309
    %v1311 = vrot.slane %v1306, %v1310
    %v1313 = vmul.f32 %v1301, %v1311
    %1314 = vadd.xlane.f32.xlu0 %v1313
    %v1315 = vpop.xlane.xlu0 %1314
    %v1316 = vmul.f32 %v1315, 0.015625
    %v1317 = vmul.f32 %v1316, %v1311
    %v1318 = vadd.f32 %v1317, 0.0
    %s1319 = scalar_lea.vmem [#allocation7], 1
    %v1320 = vld [vmem:[%s1319] sm:$0x1]
    %v1322 = vlaneseq
    %v1323 = vshrl.u32 %v1322, 7
    %v1324 = vsub.s32 0, %v1323
    %v1325 = vrot.slane %v1320, %v1324
    %v1327 = vmul.f32 %v1301, %v1325
    %1328 = vadd.xlane.f32.xlu0 %v1327
    %v1329 = vpop.xlane.xlu0 %1328
    %v1330 = vmul.f32 %v1329, 0.015625
    %v1331 = vmul.f32 %v1330, %v1325
    %v1332 = vadd.f32 %v1318, %v1331
    %v1333 = vsub.f32 %v1301, %v1332
    %v1334 = vmul.f32 %v1333, %v1333
    %v1335 = vmul.f32 %v1334, %v1311
    %1336 = vadd.xlane.f32.xlu0 %v1335
    %v1337 = vpop.xlane.xlu0 %1336
    %v1338 = vmul.f32 %v1337, 0.015625
    %v1339 = vmul.f32 %v1338, %v1311
    %v1340 = vadd.f32 %v1339, 0.0
    %v1341 = vmul.f32 %v1334, %v1325
    %1342 = vadd.xlane.f32.xlu0 %v1341
    %v1343 = vpop.xlane.xlu0 %1342
    %v1344 = vmul.f32 %v1343, 0.015625
    %v1345 = vmul.f32 %v1344, %v1325
    %v1346 = vadd.f32 %v1340, %v1345
    %v1347 = vadd.f32 %v1346, 1e-05
    %v1348 = vrsqrt.pop %v1347
    %v1349 = vmul.f32 %v1333, %v1348
    %v1350 = vmax.f32 %v1349, 0.0
    %1351 = vrot.lane.b32.xlu0 %v1350, 127
    %v1352 = vpop.permute.xlu0 %1351
    %v1353 = vmax.f32 %v1350, %v1352
    %1354 = vrot.lane.b32.xlu0 %v1353, 120
    %v1355 = vpop.permute.xlu0 %1354
    %v1356 = vmax.f32 %v1353, %v1355
    %v1357 = vld [vmem:[#allocation11] sm:$0xff]
    %v1358 = vld [vmem:[#allocation11 + $0x8] sm:$0xff]
    %v1359 = vld [vmem:[#allocation11 + $0x10] sm:$0xff]
    %v1360 = vld [vmem:[#allocation11 + $0x18] sm:$0xff]
    %v1361 = vld [vmem:[#allocation11 + $0x20] sm:$0xff]
    %v1362 = vld [vmem:[#allocation11 + $0x28] sm:$0xff]
    %v1363 = vld [vmem:[#allocation11 + $0x30] sm:$0xff]
    %v1364 = vld [vmem:[#allocation11 + $0x38] sm:$0xff]
    %v1365 = vld [vmem:[#allocation11 + $0x40] sm:$0xff]
    %v1366 = vld [vmem:[#allocation11 + $0x48] sm:$0xff]
    %v1367 = vld [vmem:[#allocation11 + $0x50] sm:$0xff]
    %v1368 = vld [vmem:[#allocation11 + $0x58] sm:$0xff]
    %v1369 = vld [vmem:[#allocation11 + $0x60] sm:$0xff]
    %v1370 = vld [vmem:[#allocation11 + $0x68] sm:$0xff]
    %v1371 = vld [vmem:[#allocation11 + $0x70] sm:$0xff]
    %v1372 = vld [vmem:[#allocation11 + $0x78] sm:$0xff]
    %1373 = vmatprep.subr.mxu0 0.0
    %1374 = vmatpush1.msra.mxu0 %v1372
    %1375 = vmatprep.subr.mxu0 0.0
    %1376 = vmatpush1.msra.mxu0 %v1371
    %1377 = vmatprep.subr.mxu0 0.0
    %1378 = vmatpush1.msra.mxu0 %v1370
    %1379 = vmatprep.subr.mxu0 0.0
    %1380 = vmatpush1.msra.mxu0 %v1369
    %1381 = vmatprep.subr.mxu0 0.0
    %1382 = vmatpush1.msra.mxu0 %v1368
    %1383 = vmatprep.subr.mxu0 0.0
    %1384 = vmatpush1.msra.mxu0 %v1367
    %1385 = vmatprep.subr.mxu0 0.0
    %1386 = vmatpush1.msra.mxu0 %v1366
    %1387 = vmatprep.subr.mxu0 0.0
    %1388 = vmatpush1.msra.mxu0 %v1365
    %1389 = vmatprep.subr.mxu0 0.0
    %1390 = vmatpush1.msra.mxu0 %v1364
    %1391 = vmatprep.subr.mxu0 0.0
    %1392 = vmatpush1.msra.mxu0 %v1363
    %1393 = vmatprep.subr.mxu0 0.0
    %1394 = vmatpush1.msra.mxu0 %v1362
    %1395 = vmatprep.subr.mxu0 0.0
    %1396 = vmatpush1.msra.mxu0 %v1361
    %1397 = vmatprep.subr.mxu0 0.0
    %1398 = vmatpush1.msra.mxu0 %v1360
    %1399 = vmatprep.subr.mxu0 0.0
    %1400 = vmatpush1.msra.mxu0 %v1359
    %1401 = vmatprep.subr.mxu0 0.0
    %1402 = vmatpush1.msra.mxu0 %v1358
    %1403 = vmatprep.subr.mxu0 0.0
    %1404 = vmatpush1.msra.mxu0 %v1357
    %1405 = vmatprep.subr.mxu0 0.0
    %1406 = vmatpush2.msra.mxu0 0.0
    %1407 = vmatprep.subr.mxu0 0.0
    %1408 = vmatpush2.msra.mxu0 0.0
    %1409 = vmatprep.subr.mxu0 0.0
    %1410 = vmatpush2.msra.mxu0 0.0
    %1411 = vmatprep.subr.mxu0 0.0
    %1412 = vmatpush2.msra.mxu0 0.0
    %1413 = vmatprep.subr.mxu0 0.0
    %1414 = vmatpush2.msra.mxu0 0.0
    %1415 = vmatprep.subr.mxu0 0.0
    %1416 = vmatpush2.msra.mxu0 0.0
    %1417 = vmatprep.subr.mxu0 0.0
    %1418 = vmatpush2.msra.mxu0 0.0
    %1419 = vmatprep.subr.mxu0 0.0
    %1420 = vmatpush2.msra.mxu0 0.0
    %1421 = vmatprep.subr.mxu0 0.0
    %1422 = vmatpush2.msra.mxu0 0.0
    %1423 = vmatprep.subr.mxu0 0.0
    %1424 = vmatpush2.msra.mxu0 0.0
    %1425 = vmatprep.subr.mxu0 0.0
    %1426 = vmatpush2.msra.mxu0 0.0
    %1427 = vmatprep.subr.mxu0 0.0
    %1428 = vmatpush2.msra.mxu0 0.0
    %1429 = vmatprep.subr.mxu0 0.0
    %1430 = vmatpush2.msra.mxu0 0.0
    %1431 = vmatprep.subr.mxu0 0.0
    %1432 = vmatpush2.msra.mxu0 0.0
    %1433 = vmatprep.subr.mxu0 0.0
    %1434 = vmatpush2.msra.mxu0 0.0
    %1435 = vmatprep.subr.mxu0 0.0
    %1436 = vmatpush2.msra.mxu0 0.0
    %1437 = vmatprep.mubr.f32.mxu0 0.0
    %1438 = vmatmul.mubr.f32.gmra.mxu0 %v1356
    %v1439 = vpop.f32.mrf.mxu0
    %v1440 = vadd.f32 0.0, %v1439
    %v1441 = vpop.f32.mrf.mxu0
    %1442 = vdwg.mxu0
    %1443 = vrot.lane.b32.xlu0 %v1440, 5
    %v1444 = vpop.permute.xlu0 %1443
    %v1445 = vld [vmem:[#allocation3] sm:$0x1]
    %v1447 = vlaneseq
    %v1448 = vshrl.u32 %v1447, 7
    %v1449 = vsub.s32 0, %v1448
    %v1450 = vrot.slane %v1445, %v1449
    %v1452 = vmul.f32 %v1444, %v1450
    %1453 = vrot.lane.b32.xlu0 %v1440, 4
    %v1454 = vpop.permute.xlu0 %1453
    %s1455 = scalar_lea.vmem [#allocation3], 1
    %v1456 = vld [vmem:[%s1455] sm:$0x1]
    %v1458 = vlaneseq
    %v1459 = vshrl.u32 %v1458, 7
    %v1460 = vsub.s32 0, %v1459
    %v1461 = vrot.slane %v1456, %v1460
    %v1463 = vmul.f32 %v1454, %v1461
    %1464 = vrot.lane.b32.xlu0 %v1440, 3
    %v1465 = vpop.permute.xlu0 %1464
    %s1466 = scalar_lea.vmem [#allocation3], 2
    %v1467 = vld [vmem:[%s1466] sm:$0x1]
    %v1469 = vlaneseq
    %v1470 = vshrl.u32 %v1469, 7
    %v1471 = vsub.s32 0, %v1470
    %v1472 = vrot.slane %v1467, %v1471
    %v1474 = vmul.f32 %v1465, %v1472
    %1475 = vrot.lane.b32.xlu0 %v1440, 1
    %v1476 = vpop.permute.xlu0 %1475
    %s1477 = scalar_lea.vmem [#allocation3], 3
    %v1478 = vld [vmem:[%s1477] sm:$0x1]
    %v1480 = vlaneseq
    %v1481 = vshrl.u32 %v1480, 7
    %v1482 = vsub.s32 0, %v1481
    %v1483 = vrot.slane %v1478, %v1482
    %v1485 = vmul.f32 %v1476, %v1483
    %s1486 = scalar_lea.vmem [#allocation3], 4
    %v1487 = vld [vmem:[%s1486] sm:$0x1]
    %v1489 = vlaneseq
    %v1490 = vshrl.u32 %v1489, 7
    %v1491 = vsub.s32 0, %v1490
    %v1492 = vrot.slane %v1487, %v1491
    %v1494 = vmul.f32 %v1440, %v1492
    %1495 = vrot.lane.b32.xlu0 %v1440, 127
    %v1496 = vpop.permute.xlu0 %1495
    %s1497 = scalar_lea.vmem [#allocation3], 5
    %v1498 = vld [vmem:[%s1497] sm:$0x1]
    %v1500 = vlaneseq
    %v1501 = vshrl.u32 %v1500, 7
    %v1502 = vsub.s32 0, %v1501
    %v1503 = vrot.slane %v1498, %v1502
    %v1505 = vmul.f32 %v1496, %v1503
    %1506 = vrot.lane.b32.xlu0 %v1440, 125
    %v1507 = vpop.permute.xlu0 %1506
    %s1508 = scalar_lea.vmem [#allocation3], 6
    %v1509 = vld [vmem:[%s1508] sm:$0x1]
    %v1511 = vlaneseq
    %v1512 = vshrl.u32 %v1511, 7
    %v1513 = vsub.s32 0, %v1512
    %v1514 = vrot.slane %v1509, %v1513
    %v1516 = vmul.f32 %v1507, %v1514
    %1517 = vrot.lane.b32.xlu0 %v1440, 124
    %v1518 = vpop.permute.xlu0 %1517
    %s1519 = scalar_lea.vmem [#allocation3], 7
    %v1520 = vld [vmem:[%s1519] sm:$0x1]
    %v1522 = vlaneseq
    %v1523 = vshrl.u32 %v1522, 7
    %v1524 = vsub.s32 0, %v1523
    %v1525 = vrot.slane %v1520, %v1524
    %v1527 = vmul.f32 %v1518, %v1525
    %1528 = vrot.lane.b32.xlu0 %v1440, 123
    %v1529 = vpop.permute.xlu0 %1528
    %s1530 = scalar_lea.vmem [#allocation3], 8
    %v1531 = vld [vmem:[%s1530] sm:$0x1]
    %v1533 = vlaneseq
    %v1534 = vshrl.u32 %v1533, 7
    %v1535 = vsub.s32 0, %v1534
    %v1536 = vrot.slane %v1531, %v1535
    %v1538 = vmul.f32 %v1529, %v1536
    %v1539 = vld [vmem:[%s13] sm:$0xf]
    %v1540 = vpack.c.bf16 %v1463, %v1452
    %v1541 = vpack.c.bf16 %v1485, %v1474
    %v1542 = vpack.c.bf16 %v1505, %v1494
    %v1543 = vpack.c.bf16 %v1527, %v1516
    %v1544 = vpack.c.bf16 %v1538, %v1538
    %vm1545 = vcmask 588800
    %v1547 = vsel %vm1545, %v1539, 0
    %v1550 = vsel %vm625, %v1544, 0
    %1552 = vmatprep.subr.bf16.mxu0 0
    %1553 = vmatpush1.bf16.msra.mxu0 0
    %1554 = vmatprep.subr.bf16.mxu0 0
    %1555 = vmatpush1.bf16.msra.mxu0 0
    %1556 = vmatprep.subr.bf16.mxu0 0
    %1557 = vmatpush1.bf16.msra.mxu0 0
    %1558 = vmatprep.subr.bf16.mxu0 0
    %1559 = vmatpush1.bf16.msra.mxu0 %v1550
    %1560 = vmatprep.subr.bf16.mxu0 0
    %1561 = vmatpush1.bf16.msra.mxu0 %v1543
    %1562 = vmatprep.subr.bf16.mxu0 0
    %1563 = vmatpush1.bf16.msra.mxu0 %v1542
    %1564 = vmatprep.subr.bf16.mxu0 0
    %1565 = vmatpush1.bf16.msra.mxu0 %v1541
    %1566 = vmatprep.subr.bf16.mxu0 0
    %1567 = vmatpush1.bf16.msra.mxu0 %v1540
    %1568 = vmatprep.subr.bf16.mxu0 0
    %1569 = vmatpush2.bf16.msra.mxu0 0
    %1570 = vmatprep.subr.bf16.mxu0 0
    %1571 = vmatpush2.bf16.msra.mxu0 0
    %1572 = vmatprep.subr.bf16.mxu0 0
    %1573 = vmatpush2.bf16.msra.mxu0 0
    %1574 = vmatprep.subr.bf16.mxu0 0
    %1575 = vmatpush2.bf16.msra.mxu0 0
    %1576 = vmatprep.subr.bf16.mxu0 0
    %1577 = vmatpush2.bf16.msra.mxu0 0
    %1578 = vmatprep.subr.bf16.mxu0 0
    %1579 = vmatpush2.bf16.msra.mxu0 0
    %1580 = vmatprep.subr.bf16.mxu0 0
    %1581 = vmatpush2.bf16.msra.mxu0 0
    %1582 = vmatprep.subr.bf16.mxu0 0
    %1583 = vmatpush2.bf16.msra.mxu0 0
    %1584 = vmatprep.mubr.bf16.mxu0 0
    %1585 = vmatmul.mubr.bf16.gmra.mxu0 %v1547
    %v1586 = vpop.f32.mrf.mxu0
    %v1587 = vadd.f32 0.0, %v1586
    %v1588 = vpop.f32.mrf.mxu0
    %v1589 = vpop.f32.mrf.mxu0
    %v1590 = vpop.f32.mrf.mxu0
    %1591 = vdwg.mxu0
    %v1592 = vld [vmem:[#allocation8] sm:$0x1]
    %v1594 = vlaneseq
    %v1595 = vshrl.u32 %v1594, 7
    %v1596 = vsub.s32 0, %v1595
    %v1597 = vrot.slane %v1592, %v1596
    %v1599 = vmul.f32 %v1587, %v1597
    %1600 = vadd.xlane.f32.xlu0 %v1599
    %v1601 = vpop.xlane.xlu0 %1600
    %v1602 = vmul.f32 %v1601, 0.0625
    %v1603 = vmul.f32 %v1602, %v1597
    %v1604 = vadd.f32 %v1603, 0.0
    %s1605 = scalar_lea.vmem [#allocation8], 1
    %v1606 = vld [vmem:[%s1605] sm:$0x1]
    %v1608 = vlaneseq
    %v1609 = vshrl.u32 %v1608, 7
    %v1610 = vsub.s32 0, %v1609
    %v1611 = vrot.slane %v1606, %v1610
    %v1613 = vmul.f32 %v1587, %v1611
    %1614 = vadd.xlane.f32.xlu0 %v1613
    %v1615 = vpop.xlane.xlu0 %1614
    %v1616 = vmul.f32 %v1615, 0.0625
    %v1617 = vmul.f32 %v1616, %v1611
    %v1618 = vadd.f32 %v1604, %v1617
    %v1619 = vsub.f32 %v1587, %v1618
    %v1620 = vmul.f32 %v1619, %v1619
    %v1621 = vmul.f32 %v1620, %v1597
    %1622 = vadd.xlane.f32.xlu0 %v1621
    %v1623 = vpop.xlane.xlu0 %1622
    %v1624 = vmul.f32 %v1623, 0.0625
    %v1625 = vmul.f32 %v1624, %v1597
    %v1626 = vadd.f32 %v1625, 0.0
    %v1627 = vmul.f32 %v1620, %v1611
    %1628 = vadd.xlane.f32.xlu0 %v1627
    %v1629 = vpop.xlane.xlu0 %1628
    %v1630 = vmul.f32 %v1629, 0.0625
    %v1631 = vmul.f32 %v1630, %v1611
    %v1632 = vadd.f32 %v1626, %v1631
    %v1633 = vadd.f32 %v1632, 1e-05
    %v1634 = vrsqrt.pop %v1633
    %v1635 = vmul.f32 %v1619, %v1634
    %v1636 = vmax.f32 %v1635, 0.0
    %v1637 = vld [vmem:[#allocation14] sm:$0xff]
    %v1638 = vld [vmem:[#allocation14 + $0x8] sm:$0xff]
    %v1639 = vld [vmem:[#allocation14 + $0x10] sm:$0xff]
    %v1640 = vld [vmem:[#allocation14 + $0x18] sm:$0xff]
    %v1641 = vld [vmem:[#allocation14 + $0x20] sm:$0xff]
    %v1642 = vld [vmem:[#allocation14 + $0x28] sm:$0xff]
    %v1643 = vld [vmem:[#allocation14 + $0x30] sm:$0xff]
    %v1644 = vld [vmem:[#allocation14 + $0x38] sm:$0xff]
    %v1645 = vld [vmem:[#allocation14 + $0x40] sm:$0xff]
    %v1646 = vld [vmem:[#allocation14 + $0x48] sm:$0xff]
    %v1647 = vld [vmem:[#allocation14 + $0x50] sm:$0xff]
    %v1648 = vld [vmem:[#allocation14 + $0x58] sm:$0xff]
    %v1649 = vld [vmem:[#allocation14 + $0x60] sm:$0xff]
    %v1650 = vld [vmem:[#allocation14 + $0x68] sm:$0xff]
    %v1651 = vld [vmem:[#allocation14 + $0x70] sm:$0xff]
    %v1652 = vld [vmem:[#allocation14 + $0x78] sm:$0xff]
    %1653 = vmatprep.subr.mxu0 0.0
    %1654 = vmatpush1.msra.mxu0 %v1652
    %1655 = vmatprep.subr.mxu0 0.0
    %1656 = vmatpush1.msra.mxu0 %v1651
    %1657 = vmatprep.subr.mxu0 0.0
    %1658 = vmatpush1.msra.mxu0 %v1650
    %1659 = vmatprep.subr.mxu0 0.0
    %1660 = vmatpush1.msra.mxu0 %v1649
    %1661 = vmatprep.subr.mxu0 0.0
    %1662 = vmatpush1.msra.mxu0 %v1648
    %1663 = vmatprep.subr.mxu0 0.0
    %1664 = vmatpush1.msra.mxu0 %v1647
    %1665 = vmatprep.subr.mxu0 0.0
    %1666 = vmatpush1.msra.mxu0 %v1646
    %1667 = vmatprep.subr.mxu0 0.0
    %1668 = vmatpush1.msra.mxu0 %v1645
    %1669 = vmatprep.subr.mxu0 0.0
    %1670 = vmatpush1.msra.mxu0 %v1644
    %1671 = vmatprep.subr.mxu0 0.0
    %1672 = vmatpush1.msra.mxu0 %v1643
    %1673 = vmatprep.subr.mxu0 0.0
    %1674 = vmatpush1.msra.mxu0 %v1642
    %1675 = vmatprep.subr.mxu0 0.0
    %1676 = vmatpush1.msra.mxu0 %v1641
    %1677 = vmatprep.subr.mxu0 0.0
    %1678 = vmatpush1.msra.mxu0 %v1640
    %1679 = vmatprep.subr.mxu0 0.0
    %1680 = vmatpush1.msra.mxu0 %v1639
    %1681 = vmatprep.subr.mxu0 0.0
    %1682 = vmatpush1.msra.mxu0 %v1638
    %1683 = vmatprep.subr.mxu0 0.0
    %1684 = vmatpush1.msra.mxu0 %v1637
    %1685 = vmatprep.subr.mxu0 0.0
    %1686 = vmatpush2.msra.mxu0 0.0
    %1687 = vmatprep.subr.mxu0 0.0
    %1688 = vmatpush2.msra.mxu0 0.0
    %1689 = vmatprep.subr.mxu0 0.0
    %1690 = vmatpush2.msra.mxu0 0.0
    %1691 = vmatprep.subr.mxu0 0.0
    %1692 = vmatpush2.msra.mxu0 0.0
    %1693 = vmatprep.subr.mxu0 0.0
    %1694 = vmatpush2.msra.mxu0 0.0
    %1695 = vmatprep.subr.mxu0 0.0
    %1696 = vmatpush2.msra.mxu0 0.0
    %1697 = vmatprep.subr.mxu0 0.0
    %1698 = vmatpush2.msra.mxu0 0.0
    %1699 = vmatprep.subr.mxu0 0.0
    %1700 = vmatpush2.msra.mxu0 0.0
    %1701 = vmatprep.subr.mxu0 0.0
    %1702 = vmatpush2.msra.mxu0 0.0
    %1703 = vmatprep.subr.mxu0 0.0
    %1704 = vmatpush2.msra.mxu0 0.0
    %1705 = vmatprep.subr.mxu0 0.0
    %1706 = vmatpush2.msra.mxu0 0.0
    %1707 = vmatprep.subr.mxu0 0.0
    %1708 = vmatpush2.msra.mxu0 0.0
    %1709 = vmatprep.subr.mxu0 0.0
    %1710 = vmatpush2.msra.mxu0 0.0
    %1711 = vmatprep.subr.mxu0 0.0
    %1712 = vmatpush2.msra.mxu0 0.0
    %1713 = vmatprep.subr.mxu0 0.0
    %1714 = vmatpush2.msra.mxu0 0.0
    %1715 = vmatprep.subr.mxu0 0.0
    %1716 = vmatpush2.msra.mxu0 0.0
    %1717 = vmatprep.mubr.f32.mxu0 0.0
    %1718 = vmatmul.mubr.f32.gmra.mxu0 %v1636
    %v1719 = vpop.f32.mrf.mxu0
    %v1720 = vadd.f32 0.0, %v1719
    %v1721 = vpop.f32.mrf.mxu0
    %1722 = vdwg.mxu0
    %1723 = vrot.lane.b32.xlu0 %v1720, 9
    %v1724 = vpop.permute.xlu0 %1723
    %1725 = vrot.lane.b32.xlu0 %v1350, 9
    %v1726 = vpop.permute.xlu0 %1725
    %v1727 = vmul.f32 %v1724, %v1150
    %v1728 = vmul.f32 %v1726, %v1150
    %1729 = vrot.lane.b32.xlu0 %v1720, 8
    %v1730 = vpop.permute.xlu0 %1729
    %1731 = vrot.lane.b32.xlu0 %v1350, 8
    %v1732 = vpop.permute.xlu0 %1731
    %v1733 = vmul.f32 %v1730, %v1161
    %v1734 = vmul.f32 %v1732, %v1161
    %1735 = vrot.lane.b32.xlu0 %v1720, 7
    %v1736 = vpop.permute.xlu0 %1735
    %1737 = vrot.lane.b32.xlu0 %v1350, 7
    %v1738 = vpop.permute.xlu0 %1737
    %v1739 = vmul.f32 %v1736, %v1172
    %v1740 = vmul.f32 %v1738, %v1172
    %1741 = vrot.lane.b32.xlu0 %v1720, 1
    %v1742 = vpop.permute.xlu0 %1741
    %1743 = vrot.lane.b32.xlu0 %v1350, 1
    %v1744 = vpop.permute.xlu0 %1743
    %v1745 = vmul.f32 %v1742, %v1183
    %v1746 = vmul.f32 %v1744, %v1183
    %v1747 = vmul.f32 %v1720, %v1192
    %v1748 = vmul.f32 %v1350, %v1192
    %1749 = vrot.lane.b32.xlu0 %v1720, 127
    %v1750 = vpop.permute.xlu0 %1749
    %v1751 = vmul.f32 %v1750, %v1203
    %v1752 = vmul.f32 %v1352, %v1203
    %1753 = vrot.lane.b32.xlu0 %v1720, 121
    %v1754 = vpop.permute.xlu0 %1753
    %1755 = vrot.lane.b32.xlu0 %v1350, 121
    %v1756 = vpop.permute.xlu0 %1755
    %v1757 = vmul.f32 %v1754, %v1214
    %v1758 = vmul.f32 %v1756, %v1214
    %1759 = vrot.lane.b32.xlu0 %v1720, 120
    %v1760 = vpop.permute.xlu0 %1759
    %1761 = vrot.lane.b32.xlu0 %v1350, 120
    %v1762 = vpop.permute.xlu0 %1761
    %v1763 = vmul.f32 %v1760, %v1225
    %v1764 = vmul.f32 %v1762, %v1225
    %1765 = vrot.lane.b32.xlu0 %v1720, 119
    %v1766 = vpop.permute.xlu0 %1765
    %1767 = vrot.lane.b32.xlu0 %v1350, 119
    %v1768 = vpop.permute.xlu0 %1767
    %v1769 = vmul.f32 %v1766, %v1236
    %v1770 = vmul.f32 %v1768, %v1236
    %v1771 = vld [vmem:[%s14] sm:$0xf]
    %v1772 = vpack.c.bf16 %v1728, %v1727
    %v1773 = vpack.c.bf16 %v1734, %v1733
    %v1774 = vpack.c.bf16 %v1740, %v1739
    %v1775 = vpack.c.bf16 %v1746, %v1745
    %v1776 = vpack.c.bf16 %v1748, %v1747
    %v1777 = vpack.c.bf16 %v1752, %v1751
    %v1778 = vpack.c.bf16 %v1758, %v1757
    %v1779 = vpack.c.bf16 %v1764, %v1763
    %v1780 = vpack.c.bf16 %v1770, %v1769
    %v1783 = vunpack.c.l.s4 1983009808
    %v1784 = vunpack.c.0.s8 %v1783
    %v1785 = vlaneseq
    %v1786 = vshrl.u32 %v1785, 7
    %v1787 = vsub.s32 %v1784, %v1786
    %v1788 = vrot.slane %v1771, %v1787
    %v1789 = vcombine.high %v1788, %v1788
    %vm1791 = vcmask 130048
    %v1793 = vsel %vm1791, %v1789, 0
    %1795 = vmatprep.subr.bf16.mxu0 0
    %1796 = vmatpush1.bf16.msra.mxu0 %v1779
    %1797 = vmatprep.subr.bf16.mxu0 0
    %1798 = vmatpush1.bf16.msra.mxu0 %v1778
    %1799 = vmatprep.subr.bf16.mxu0 0
    %1800 = vmatpush1.bf16.msra.mxu0 %v1777
    %1801 = vmatprep.subr.bf16.mxu0 0
    %1802 = vmatpush1.bf16.msra.mxu0 %v1776
    %1803 = vmatprep.subr.bf16.mxu0 0
    %1804 = vmatpush1.bf16.msra.mxu0 %v1775
    %1805 = vmatprep.subr.bf16.mxu0 0
    %1806 = vmatpush1.bf16.msra.mxu0 %v1774
    %1807 = vmatprep.subr.bf16.mxu0 0
    %1808 = vmatpush1.bf16.msra.mxu0 %v1773
    %1809 = vmatprep.subr.bf16.mxu0 0
    %1810 = vmatpush1.bf16.msra.mxu0 %v1772
    %1811 = vmatprep.subr.bf16.mxu0 0
    %1812 = vmatpush2.bf16.msra.mxu0 0
    %1813 = vmatprep.subr.bf16.mxu0 0
    %1814 = vmatpush2.bf16.msra.mxu0 0
    %1815 = vmatprep.subr.bf16.mxu0 0
    %1816 = vmatpush2.bf16.msra.mxu0 0
    %1817 = vmatprep.subr.bf16.mxu0 0
    %1818 = vmatpush2.bf16.msra.mxu0 0
    %1819 = vmatprep.subr.bf16.mxu0 0
    %1820 = vmatpush2.bf16.msra.mxu0 0
    %1821 = vmatprep.subr.bf16.mxu0 0
    %1822 = vmatpush2.bf16.msra.mxu0 0
    %1823 = vmatprep.subr.bf16.mxu0 0
    %1824 = vmatpush2.bf16.msra.mxu0 0
    %1825 = vmatprep.subr.bf16.mxu0 0
    %1826 = vmatpush2.bf16.msra.mxu0 %v1780
    %1827 = vmatprep.mubr.bf16.mxu0 %v1793
    %1828 = vmatmul.mubr.bf16.gmra.mxu0 %v1788
    %v1829 = vpop.f32.mrf.mxu0
    %v1830 = vadd.f32 0.0, %v1829
    %v1831 = vpop.f32.mrf.mxu0
    %v1832 = vpop.f32.mrf.mxu0
    %v1833 = vpop.f32.mrf.mxu0
    %1834 = vdwg.mxu0
    %v1835 = vmul.f32 %v1830, %v1311
    %v1836 = vsel %vm625, %v1835, 0.0
    %1837 = vadd.xlane.f32.xlu0 %v1836
    %v1838 = vpop.xlane.xlu0 %1837
    %v1839 = vmul.f32 %v1838, 0.015625
    %v1840 = vmul.f32 %v1839, %v1311
    %v1841 = vadd.f32 %v1840, 0.0
    %v1842 = vmul.f32 %v1830, %v1325
    %v1843 = vsel %vm625, %v1842, 0.0
    %1844 = vadd.xlane.f32.xlu0 %v1843
    %v1845 = vpop.xlane.xlu0 %1844
    %v1846 = vmul.f32 %v1845, 0.015625
    %v1847 = vmul.f32 %v1846, %v1325
    %v1848 = vadd.f32 %v1841, %v1847
    %v1849 = vsub.f32 %v1830, %v1848
    %v1850 = vmul.f32 %v1849, %v1849
    %v1851 = vmul.f32 %v1850, %v1311
    %v1852 = vsel %vm625, %v1851, 0.0
    %1853 = vadd.xlane.f32.xlu0 %v1852
    %v1854 = vpop.xlane.xlu0 %1853
    %v1855 = vmul.f32 %v1854, 0.015625
    %v1856 = vmul.f32 %v1855, %v1311
    %v1857 = vadd.f32 %v1856, 0.0
    %v1858 = vmul.f32 %v1850, %v1325
    %v1859 = vsel %vm625, %v1858, 0.0
    %1860 = vadd.xlane.f32.xlu0 %v1859
    %v1861 = vpop.xlane.xlu0 %1860
    %v1862 = vmul.f32 %v1861, 0.015625
    %v1863 = vmul.f32 %v1862, %v1325
    %v1864 = vadd.f32 %v1857, %v1863
    %v1865 = vadd.f32 %v1864, 1e-05
    %v1866 = vrsqrt.pop %v1865
    %v1867 = vmul.f32 %v1849, %v1866
    %v1868 = vmax.f32 %v1867, 0.0
    %v1869 = vld [vmem:[#allocation13] sm:$0xff]
    %v1870 = vld [vmem:[#allocation13 + $0x8] sm:$0xff]
    %v1871 = vld [vmem:[#allocation13 + $0x10] sm:$0xff]
    %v1872 = vld [vmem:[#allocation13 + $0x18] sm:$0xff]
    %v1873 = vld [vmem:[#allocation13 + $0x20] sm:$0xff]
    %v1874 = vld [vmem:[#allocation13 + $0x28] sm:$0xff]
    %v1875 = vld [vmem:[#allocation13 + $0x30] sm:$0xff]
    %v1876 = vld [vmem:[#allocation13 + $0x38] sm:$0xff]
    %v1877 = vld [vmem:[#allocation13 + $0x40] sm:$0xff]
    %v1878 = vld [vmem:[#allocation13 + $0x48] sm:$0xff]
    %v1879 = vld [vmem:[#allocation13 + $0x50] sm:$0xff]
    %v1880 = vld [vmem:[#allocation13 + $0x58] sm:$0xff]
    %v1881 = vld [vmem:[#allocation13 + $0x60] sm:$0xff]
    %v1882 = vld [vmem:[#allocation13 + $0x68] sm:$0xff]
    %v1883 = vld [vmem:[#allocation13 + $0x70] sm:$0xff]
    %v1884 = vld [vmem:[#allocation13 + $0x78] sm:$0xff]
    %v1885 = vld [vmem:[#allocation13 + $0x80] sm:$0xff]
    %v1886 = vld [vmem:[#allocation13 + $0x88] sm:$0xff]
    %v1887 = vld [vmem:[#allocation13 + $0x90] sm:$0xff]
    %v1888 = vld [vmem:[#allocation13 + $0x98] sm:$0xff]
    %v1889 = vld [vmem:[#allocation13 + $0xa0] sm:$0xff]
    %v1890 = vld [vmem:[#allocation13 + $0xa8] sm:$0xff]
    %v1891 = vld [vmem:[#allocation13 + $0xb0] sm:$0xff]
    %v1892 = vld [vmem:[#allocation13 + $0xb8] sm:$0xff]
    %v1893 = vld [vmem:[#allocation13 + $0xc0] sm:$0xff]
    %v1894 = vld [vmem:[#allocation13 + $0xc8] sm:$0xff]
    %v1895 = vld [vmem:[#allocation13 + $0xd0] sm:$0xff]
    %v1896 = vld [vmem:[#allocation13 + $0xd8] sm:$0xff]
    %v1897 = vld [vmem:[#allocation13 + $0xe0] sm:$0xff]
    %v1898 = vld [vmem:[#allocation13 + $0xe8] sm:$0xff]
    %v1899 = vld [vmem:[#allocation13 + $0xf0] sm:$0xff]
    %v1900 = vld [vmem:[#allocation13 + $0xf8] sm:$0xff]
    %v1901 = vld [vmem:[#allocation13 + $0x100] sm:$0xff]
    %v1902 = vld [vmem:[#allocation13 + $0x108] sm:$0xff]
    %v1903 = vld [vmem:[#allocation13 + $0x110] sm:$0xff]
    %v1904 = vld [vmem:[#allocation13 + $0x118] sm:$0xff]
    %v1905 = vld [vmem:[#allocation13 + $0x120] sm:$0xff]
    %v1906 = vld [vmem:[#allocation13 + $0x128] sm:$0xff]
    %v1907 = vld [vmem:[#allocation13 + $0x130] sm:$0xff]
    %v1908 = vld [vmem:[#allocation13 + $0x138] sm:$0xff]
    %v1909 = vld [vmem:[#allocation13 + $0x140] sm:$0xff]
    %v1910 = vld [vmem:[#allocation13 + $0x148] sm:$0xff]
    %v1911 = vld [vmem:[#allocation13 + $0x150] sm:$0xff]
    %v1912 = vld [vmem:[#allocation13 + $0x158] sm:$0xff]
    %v1913 = vld [vmem:[#allocation13 + $0x160] sm:$0xff]
    %v1914 = vld [vmem:[#allocation13 + $0x168] sm:$0xff]
    %v1915 = vld [vmem:[#allocation13 + $0x170] sm:$0xff]
    %v1916 = vld [vmem:[#allocation13 + $0x178] sm:$0xff]
    %v1917 = vld [vmem:[#allocation13 + $0x180] sm:$0xff]
    %v1918 = vld [vmem:[#allocation13 + $0x188] sm:$0xff]
    %v1919 = vld [vmem:[#allocation13 + $0x190] sm:$0xff]
    %v1920 = vld [vmem:[#allocation13 + $0x198] sm:$0xff]
    %v1921 = vld [vmem:[#allocation13 + $0x1a0] sm:$0xff]
    %v1922 = vld [vmem:[#allocation13 + $0x1a8] sm:$0xff]
    %v1923 = vld [vmem:[#allocation13 + $0x1b0] sm:$0xff]
    %v1924 = vld [vmem:[#allocation13 + $0x1b8] sm:$0xff]
    %v1925 = vld [vmem:[#allocation13 + $0x1c0] sm:$0xff]
    %v1926 = vld [vmem:[#allocation13 + $0x1c8] sm:$0xff]
    %v1927 = vld [vmem:[#allocation13 + $0x1d0] sm:$0xff]
    %v1928 = vld [vmem:[#allocation13 + $0x1d8] sm:$0xff]
    %v1929 = vld [vmem:[#allocation13 + $0x1e0] sm:$0xff]
    %v1930 = vld [vmem:[#allocation13 + $0x1e8] sm:$0xff]
    %v1931 = vld [vmem:[#allocation13 + $0x1f0] sm:$0xff]
    %v1932 = vld [vmem:[#allocation13 + $0x1f8] sm:$0xff]
    %1933 = vmatprep.subr.mxu0 %v1930
    %1934 = vmatpush1.msra.mxu0 %v1929
    %1935 = vmatprep.subr.mxu0 %v1926
    %1936 = vmatpush1.msra.mxu0 %v1925
    %1937 = vmatprep.subr.mxu0 %v1922
    %1938 = vmatpush1.msra.mxu0 %v1921
    %1939 = vmatprep.subr.mxu0 %v1918
    %1940 = vmatpush1.msra.mxu0 %v1917
    %1941 = vmatprep.subr.mxu0 %v1914
    %1942 = vmatpush1.msra.mxu0 %v1913
    %1943 = vmatprep.subr.mxu0 %v1910
    %1944 = vmatpush1.msra.mxu0 %v1909
    %1945 = vmatprep.subr.mxu0 %v1906
    %1946 = vmatpush1.msra.mxu0 %v1905
    %1947 = vmatprep.subr.mxu0 %v1902
    %1948 = vmatpush1.msra.mxu0 %v1901
    %1949 = vmatprep.subr.mxu0 %v1898
    %1950 = vmatpush1.msra.mxu0 %v1897
    %1951 = vmatprep.subr.mxu0 %v1894
    %1952 = vmatpush1.msra.mxu0 %v1893
    %1953 = vmatprep.subr.mxu0 %v1890
    %1954 = vmatpush1.msra.mxu0 %v1889
    %1955 = vmatprep.subr.mxu0 %v1886
    %1956 = vmatpush1.msra.mxu0 %v1885
    %1957 = vmatprep.subr.mxu0 %v1882
    %1958 = vmatpush1.msra.mxu0 %v1881
    %1959 = vmatprep.subr.mxu0 %v1878
    %1960 = vmatpush1.msra.mxu0 %v1877
    %1961 = vmatprep.subr.mxu0 %v1874
    %1962 = vmatpush1.msra.mxu0 %v1873
    %1963 = vmatprep.subr.mxu0 %v1870
    %1964 = vmatpush1.msra.mxu0 %v1869
    %1965 = vmatprep.subr.mxu0 0.0
    %1966 = vmatpush2.msra.mxu0 0.0
    %1967 = vmatprep.subr.mxu0 0.0
    %1968 = vmatpush2.msra.mxu0 0.0
    %1969 = vmatprep.subr.mxu0 0.0
    %1970 = vmatpush2.msra.mxu0 0.0
    %1971 = vmatprep.subr.mxu0 0.0
    %1972 = vmatpush2.msra.mxu0 0.0
    %1973 = vmatprep.subr.mxu0 0.0
    %1974 = vmatpush2.msra.mxu0 0.0
    %1975 = vmatprep.subr.mxu0 0.0
    %1976 = vmatpush2.msra.mxu0 0.0
    %1977 = vmatprep.subr.mxu0 0.0
    %1978 = vmatpush2.msra.mxu0 0.0
    %1979 = vmatprep.subr.mxu0 0.0
    %1980 = vmatpush2.msra.mxu0 0.0
    %1981 = vmatprep.subr.mxu0 0.0
    %1982 = vmatpush2.msra.mxu0 0.0
    %1983 = vmatprep.subr.mxu0 0.0
    %1984 = vmatpush2.msra.mxu0 0.0
    %1985 = vmatprep.subr.mxu0 0.0
    %1986 = vmatpush2.msra.mxu0 0.0
    %1987 = vmatprep.subr.mxu0 0.0
    %1988 = vmatpush2.msra.mxu0 0.0
    %1989 = vmatprep.subr.mxu0 0.0
    %1990 = vmatpush2.msra.mxu0 0.0
    %1991 = vmatprep.subr.mxu0 0.0
    %1992 = vmatpush2.msra.mxu0 0.0
    %1993 = vmatprep.subr.mxu0 0.0
    %1994 = vmatpush2.msra.mxu0 0.0
    %1995 = vmatprep.subr.mxu0 0.0
    %1996 = vmatpush2.msra.mxu0 0.0
    %1997 = vmatprep.mubr.f32.mxu0 0.0
    %1998 = vmatmul.mubr.f32.gmra.mxu0 %v1868
    %v1999 = vpop.f32.mrf.mxu0
    %v2000 = vadd.f32 0.0, %v1999
    %v2001 = vpop.f32.mrf.mxu0
    %v2002 = vadd.f32 0.0, %v2001
    %2003 = vdwg.mxu0
    %2004 = vmatprep.subr.mxu0 %v1932
    %2005 = vmatpush1.msra.mxu0 %v1931
    %2006 = vmatprep.subr.mxu0 %v1928
    %2007 = vmatpush1.msra.mxu0 %v1927
    %2008 = vmatprep.subr.mxu0 %v1924
    %2009 = vmatpush1.msra.mxu0 %v1923
    %2010 = vmatprep.subr.mxu0 %v1920
    %2011 = vmatpush1.msra.mxu0 %v1919
    %2012 = vmatprep.subr.mxu0 %v1916
    %2013 = vmatpush1.msra.mxu0 %v1915
    %2014 = vmatprep.subr.mxu0 %v1912
    %2015 = vmatpush1.msra.mxu0 %v1911
    %2016 = vmatprep.subr.mxu0 %v1908
    %2017 = vmatpush1.msra.mxu0 %v1907
    %2018 = vmatprep.subr.mxu0 %v1904
    %2019 = vmatpush1.msra.mxu0 %v1903
    %2020 = vmatprep.subr.mxu0 %v1900
    %2021 = vmatpush1.msra.mxu0 %v1899
    %2022 = vmatprep.subr.mxu0 %v1896
    %2023 = vmatpush1.msra.mxu0 %v1895
    %2024 = vmatprep.subr.mxu0 %v1892
    %2025 = vmatpush1.msra.mxu0 %v1891
    %2026 = vmatprep.subr.mxu0 %v1888
    %2027 = vmatpush1.msra.mxu0 %v1887
    %2028 = vmatprep.subr.mxu0 %v1884
    %2029 = vmatpush1.msra.mxu0 %v1883
    %2030 = vmatprep.subr.mxu0 %v1880
    %2031 = vmatpush1.msra.mxu0 %v1879
    %2032 = vmatprep.subr.mxu0 %v1876
    %2033 = vmatpush1.msra.mxu0 %v1875
    %2034 = vmatprep.subr.mxu0 %v1872
    %2035 = vmatpush1.msra.mxu0 %v1871
    %2036 = vmatprep.subr.mxu0 0.0
    %2037 = vmatpush2.msra.mxu0 0.0
    %2038 = vmatprep.subr.mxu0 0.0
    %2039 = vmatpush2.msra.mxu0 0.0
    %2040 = vmatprep.subr.mxu0 0.0
    %2041 = vmatpush2.msra.mxu0 0.0
    %2042 = vmatprep.subr.mxu0 0.0
    %2043 = vmatpush2.msra.mxu0 0.0
    %2044 = vmatprep.subr.mxu0 0.0
    %2045 = vmatpush2.msra.mxu0 0.0
    %2046 = vmatprep.subr.mxu0 0.0
    %2047 = vmatpush2.msra.mxu0 0.0
    %2048 = vmatprep.subr.mxu0 0.0
    %2049 = vmatpush2.msra.mxu0 0.0
    %2050 = vmatprep.subr.mxu0 0.0
    %2051 = vmatpush2.msra.mxu0 0.0
    %2052 = vmatprep.subr.mxu0 0.0
    %2053 = vmatpush2.msra.mxu0 0.0
    %2054 = vmatprep.subr.mxu0 0.0
    %2055 = vmatpush2.msra.mxu0 0.0
    %2056 = vmatprep.subr.mxu0 0.0
    %2057 = vmatpush2.msra.mxu0 0.0
    %2058 = vmatprep.subr.mxu0 0.0
    %2059 = vmatpush2.msra.mxu0 0.0
    %2060 = vmatprep.subr.mxu0 0.0
    %2061 = vmatpush2.msra.mxu0 0.0
    %2062 = vmatprep.subr.mxu0 0.0
    %2063 = vmatpush2.msra.mxu0 0.0
    %2064 = vmatprep.subr.mxu0 0.0
    %2065 = vmatpush2.msra.mxu0 0.0
    %2066 = vmatprep.subr.mxu0 0.0
    %2067 = vmatpush2.msra.mxu0 0.0
    %2068 = vmatprep.mubr.f32.mxu0 0.0
    %2069 = vmatmul.mubr.f32.gmra.mxu0 %v1868
    %v2070 = vpop.f32.mrf.mxu0
    %v2071 = vadd.f32 0.0, %v2070
    %v2072 = vpop.f32.mrf.mxu0
    %v2073 = vadd.f32 0.0, %v2072
    %2074 = vdwg.mxu0
    %v2079 = vrot.slane %v903, 4
    %v2080 = vrot.slane %v904, 4
    %v2081 = vrot.slane %v905, 4
    %v2082 = vrot.slane %v906, 4
    %v2087 = vsel %vm625, %v2000, %v2079
    %v2088 = vsel %vm625, %v2002, %v2080
    %v2089 = vsel %vm625, %v2071, %v2081
    %v2090 = vsel %vm625, %v2073, %v2082
    %2091 = vrot.lane.b32.xlu0 %v2087, 17
    %v2092 = vpop.permute.xlu0 %2091
    %2093 = vrot.lane.b32.xlu0 %v2088, 17
    %v2094 = vpop.permute.xlu0 %2093
    %2095 = vrot.lane.b32.xlu0 %v2089, 17
    %v2096 = vpop.permute.xlu0 %2095
    %2097 = vrot.lane.b32.xlu0 %v2090, 17
    %v2098 = vpop.permute.xlu0 %2097
    %v2099 = vsel %vm203, %v2096, %v2098
    %v2100 = vsel %vm203, %v2094, %v2096
    %v2101 = vsel %vm203, %v2092, %v2094
    %v2102 = vsel %vm203, %v2098, %v2092
    %v2103 = vmul.f32 %v2102, %v213
    %v2104 = vmul.f32 %v2101, %v217
    %v2105 = vmul.f32 %v2100, %v221
    %v2106 = vmul.f32 %v2099, %v225
    %2107 = vrot.lane.b32.xlu0 %v2087, 16
    %v2108 = vpop.permute.xlu0 %2107
    %2109 = vrot.lane.b32.xlu0 %v2088, 16
    %v2110 = vpop.permute.xlu0 %2109
    %2111 = vrot.lane.b32.xlu0 %v2089, 16
    %v2112 = vpop.permute.xlu0 %2111
    %2113 = vrot.lane.b32.xlu0 %v2090, 16
    %v2114 = vpop.permute.xlu0 %2113
    %v2115 = vsel %vm242, %v2112, %v2114
    %v2116 = vsel %vm242, %v2110, %v2112
    %v2117 = vsel %vm242, %v2108, %v2110
    %v2118 = vsel %vm242, %v2114, %v2108
    %v2119 = vmul.f32 %v2118, %v253
    %v2120 = vmul.f32 %v2117, %v257
    %v2121 = vmul.f32 %v2116, %v261
    %v2122 = vmul.f32 %v2115, %v265
    %2123 = vrot.lane.b32.xlu0 %v2087, 15
    %v2124 = vpop.permute.xlu0 %2123
    %2125 = vrot.lane.b32.xlu0 %v2088, 15
    %v2126 = vpop.permute.xlu0 %2125
    %2127 = vrot.lane.b32.xlu0 %v2089, 15
    %v2128 = vpop.permute.xlu0 %2127
    %2129 = vrot.lane.b32.xlu0 %v2090, 15
    %v2130 = vpop.permute.xlu0 %2129
    %v2131 = vsel %vm282, %v2128, %v2130
    %v2132 = vsel %vm282, %v2126, %v2128
    %v2133 = vsel %vm282, %v2124, %v2126
    %v2134 = vsel %vm282, %v2130, %v2124
    %v2135 = vmul.f32 %v2134, %v293
    %v2136 = vmul.f32 %v2133, %v297
    %v2137 = vmul.f32 %v2132, %v301
    %v2138 = vmul.f32 %v2131, %v305
    %2139 = vrot.lane.b32.xlu0 %v2087, 1
    %v2140 = vpop.permute.xlu0 %2139
    %2141 = vrot.lane.b32.xlu0 %v2088, 1
    %v2142 = vpop.permute.xlu0 %2141
    %2143 = vrot.lane.b32.xlu0 %v2089, 1
    %v2144 = vpop.permute.xlu0 %2143
    %2145 = vrot.lane.b32.xlu0 %v2090, 1
    %v2146 = vpop.permute.xlu0 %2145
    %v2147 = vsel %vm322, %v2144, %v2146
    %v2148 = vsel %vm322, %v2142, %v2144
    %v2149 = vsel %vm322, %v2140, %v2142
    %v2150 = vsel %vm322, %v2146, %v2140
    %v2151 = vmul.f32 %v2150, %v333
    %v2152 = vmul.f32 %v2149, %v337
    %v2153 = vmul.f32 %v2148, %v341
    %v2154 = vmul.f32 %v2147, %v345
    %v2156 = vlaneseq
    %v2157 = vshrl.u32 %v2156, 7
    %v2158 = vsub.s32 0, %v2157
    %v2159 = vrot.slane %v355, %v2158
    %v2160 = vlaneseq
    %v2161 = vshrl.u32 %v2160, 7
    %v2162 = vsub.s32 1, %v2161
    %v2163 = vrot.slane %v355, %v2162
    %v2164 = vlaneseq
    %v2165 = vshrl.u32 %v2164, 7
    %v2166 = vsub.s32 2, %v2165
    %v2167 = vrot.slane %v355, %v2166
    %v2168 = vlaneseq
    %v2169 = vshrl.u32 %v2168, 7
    %v2170 = vsub.s32 3, %v2169
    %v2171 = vrot.slane %v355, %v2170
    %v2176 = vmul.f32 %v2087, %v2159
    %v2177 = vmul.f32 %v2088, %v2163
    %v2178 = vmul.f32 %v2089, %v2167
    %v2179 = vmul.f32 %v2090, %v2171
    %2180 = vrot.lane.b32.xlu0 %v2087, 127
    %v2181 = vpop.permute.xlu0 %2180
    %2182 = vrot.lane.b32.xlu0 %v2088, 127
    %v2183 = vpop.permute.xlu0 %2182
    %2184 = vrot.lane.b32.xlu0 %v2089, 127
    %v2185 = vpop.permute.xlu0 %2184
    %2186 = vrot.lane.b32.xlu0 %v2090, 127
    %v2187 = vpop.permute.xlu0 %2186
    %v2188 = vsel %vm365, %v2185, %v2187
    %v2189 = vsel %vm365, %v2183, %v2185
    %v2190 = vsel %vm365, %v2181, %v2183
    %v2191 = vsel %vm365, %v2187, %v2181
    %v2192 = vmul.f32 %v2190, %v376
    %v2193 = vmul.f32 %v2189, %v380
    %v2194 = vmul.f32 %v2188, %v384
    %v2195 = vmul.f32 %v2191, %v388
    %2196 = vrot.lane.b32.xlu0 %v2087, 113
    %v2197 = vpop.permute.xlu0 %2196
    %2198 = vrot.lane.b32.xlu0 %v2088, 113
    %v2199 = vpop.permute.xlu0 %2198
    %2200 = vrot.lane.b32.xlu0 %v2089, 113
    %v2201 = vpop.permute.xlu0 %2200
    %2202 = vrot.lane.b32.xlu0 %v2090, 113
    %v2203 = vpop.permute.xlu0 %2202
    %v2204 = vsel %vm405, %v2201, %v2203
    %v2205 = vsel %vm405, %v2199, %v2201
    %v2206 = vsel %vm405, %v2197, %v2199
    %v2207 = vsel %vm405, %v2203, %v2197
    %v2208 = vmul.f32 %v2206, %v416
    %v2209 = vmul.f32 %v2205, %v420
    %v2210 = vmul.f32 %v2204, %v424
    %v2211 = vmul.f32 %v2207, %v428
    %2212 = vrot.lane.b32.xlu0 %v2087, 112
    %v2213 = vpop.permute.xlu0 %2212
    %2214 = vrot.lane.b32.xlu0 %v2088, 112
    %v2215 = vpop.permute.xlu0 %2214
    %2216 = vrot.lane.b32.xlu0 %v2089, 112
    %v2217 = vpop.permute.xlu0 %2216
    %2218 = vrot.lane.b32.xlu0 %v2090, 112
    %v2219 = vpop.permute.xlu0 %2218
    %v2220 = vsel %vm445, %v2217, %v2219
    %v2221 = vsel %vm445, %v2215, %v2217
    %v2222 = vsel %vm445, %v2213, %v2215
    %v2223 = vsel %vm445, %v2219, %v2213
    %v2224 = vmul.f32 %v2222, %v456
    %v2225 = vmul.f32 %v2221, %v460
    %v2226 = vmul.f32 %v2220, %v464
    %v2227 = vmul.f32 %v2223, %v468
    %2228 = vrot.lane.b32.xlu0 %v2087, 111
    %v2229 = vpop.permute.xlu0 %2228
    %2230 = vrot.lane.b32.xlu0 %v2088, 111
    %v2231 = vpop.permute.xlu0 %2230
    %2232 = vrot.lane.b32.xlu0 %v2089, 111
    %v2233 = vpop.permute.xlu0 %2232
    %2234 = vrot.lane.b32.xlu0 %v2090, 111
    %v2235 = vpop.permute.xlu0 %2234
    %v2236 = vsel %vm485, %v2233, %v2235
    %v2237 = vsel %vm485, %v2231, %v2233
    %v2238 = vsel %vm485, %v2229, %v2231
    %v2239 = vsel %vm485, %v2235, %v2229
    %v2240 = vmul.f32 %v2238, %v496
    %v2241 = vmul.f32 %v2237, %v500
    %v2242 = vmul.f32 %v2236, %v504
    %v2243 = vmul.f32 %v2239, %v508
    %v2244 = vld [vmem:[%s15] sm:$0x3]
    %v2245 = vpack.c.bf16 %v2119, %v2103
    %v2246 = vpack.c.bf16 %v2120, %v2104
    %v2247 = vpack.c.bf16 %v2121, %v2105
    %v2248 = vpack.c.bf16 %v2122, %v2106
    %v2249 = vpack.c.bf16 %v2151, %v2135
    %v2250 = vpack.c.bf16 %v2152, %v2136
    %v2251 = vpack.c.bf16 %v2153, %v2137
    %v2252 = vpack.c.bf16 %v2154, %v2138
    %v2253 = vpack.c.bf16 %v2192, %v2176
    %v2254 = vpack.c.bf16 %v2193, %v2177
    %v2255 = vpack.c.bf16 %v2194, %v2178
    %v2256 = vpack.c.bf16 %v2195, %v2179
    %v2257 = vpack.c.bf16 %v2224, %v2208
    %v2258 = vpack.c.bf16 %v2225, %v2209
    %v2259 = vpack.c.bf16 %v2226, %v2210
    %v2260 = vpack.c.bf16 %v2227, %v2211
    %v2261 = vpack.c.bf16 %v2240, %v2240
    %v2262 = vpack.c.bf16 %v2241, %v2241
    %v2263 = vpack.c.bf16 %v2242, %v2242
    %v2264 = vpack.c.bf16 %v2243, %v2243
    %v2266 = vsel %vm1545, %v2244, 0
    %v2269 = vsel %vm625, %v2261, 0
    %v2272 = vsel %vm625, %v2262, 0
    %v2275 = vsel %vm625, %v2263, 0
    %v2278 = vsel %vm625, %v2264, 0
    %2280 = vmatprep.subr.bf16.mxu0 0
    %2281 = vmatpush1.bf16.msra.mxu0 0
    %2282 = vmatprep.subr.bf16.mxu0 0
    %2283 = vmatpush1.bf16.msra.mxu0 0
    %2284 = vmatprep.subr.bf16.mxu0 0
    %2285 = vmatpush1.bf16.msra.mxu0 0
    %2286 = vmatprep.subr.bf16.mxu0 %v2272
    %2287 = vmatpush1.bf16.msra.mxu0 %v2269
    %2288 = vmatprep.subr.bf16.mxu0 %v2258
    %2289 = vmatpush1.bf16.msra.mxu0 %v2257
    %2290 = vmatprep.subr.bf16.mxu0 %v2254
    %2291 = vmatpush1.bf16.msra.mxu0 %v2253
    %2292 = vmatprep.subr.bf16.mxu0 %v2250
    %2293 = vmatpush1.bf16.msra.mxu0 %v2249
    %2294 = vmatprep.subr.bf16.mxu0 %v2246
    %2295 = vmatpush1.bf16.msra.mxu0 %v2245
    %2296 = vmatprep.subr.bf16.mxu0 0
    %2297 = vmatpush2.bf16.msra.mxu0 0
    %2298 = vmatprep.subr.bf16.mxu0 0
    %2299 = vmatpush2.bf16.msra.mxu0 0
    %2300 = vmatprep.subr.bf16.mxu0 0
    %2301 = vmatpush2.bf16.msra.mxu0 0
    %2302 = vmatprep.subr.bf16.mxu0 0
    %2303 = vmatpush2.bf16.msra.mxu0 0
    %2304 = vmatprep.subr.bf16.mxu0 0
    %2305 = vmatpush2.bf16.msra.mxu0 0
    %2306 = vmatprep.subr.bf16.mxu0 0
    %2307 = vmatpush2.bf16.msra.mxu0 0
    %2308 = vmatprep.subr.bf16.mxu0 0
    %2309 = vmatpush2.bf16.msra.mxu0 0
    %2310 = vmatprep.subr.bf16.mxu0 0
    %2311 = vmatpush2.bf16.msra.mxu0 0
    %2312 = vmatprep.mubr.bf16.mxu0 0
    %2313 = vmatmul.mubr.bf16.gmra.mxu0 %v2266
    %v2314 = vpop.f32.mrf.mxu0
    %v2315 = vadd.f32 0.0, %v2314
    %v2316 = vpop.f32.mrf.mxu0
    %v2317 = vadd.f32 0.0, %v2316
    %v2318 = vpop.f32.mrf.mxu0
    %v2319 = vpop.f32.mrf.mxu0
    %2320 = vdwg.mxu0
    %2321 = vmatprep.subr.bf16.mxu0 0
    %2322 = vmatpush1.bf16.msra.mxu0 0
    %2323 = vmatprep.subr.bf16.mxu0 0
    %2324 = vmatpush1.bf16.msra.mxu0 0
    %2325 = vmatprep.subr.bf16.mxu0 0
    %2326 = vmatpush1.bf16.msra.mxu0 0
    %2327 = vmatprep.subr.bf16.mxu0 %v2278
    %2328 = vmatpush1.bf16.msra.mxu0 %v2275
    %2329 = vmatprep.subr.bf16.mxu0 %v2260
    %2330 = vmatpush1.bf16.msra.mxu0 %v2259
    %2331 = vmatprep.subr.bf16.mxu0 %v2256
    %2332 = vmatpush1.bf16.msra.mxu0 %v2255
    %2333 = vmatprep.subr.bf16.mxu0 %v2252
    %2334 = vmatpush1.bf16.msra.mxu0 %v2251
    %2335 = vmatprep.subr.bf16.mxu0 %v2248
    %2336 = vmatpush1.bf16.msra.mxu0 %v2247
    %2337 = vmatprep.subr.bf16.mxu0 0
    %2338 = vmatpush2.bf16.msra.mxu0 0
    %2339 = vmatprep.subr.bf16.mxu0 0
    %2340 = vmatpush2.bf16.msra.mxu0 0
    %2341 = vmatprep.subr.bf16.mxu0 0
    %2342 = vmatpush2.bf16.msra.mxu0 0
    %2343 = vmatprep.subr.bf16.mxu0 0
    %2344 = vmatpush2.bf16.msra.mxu0 0
    %2345 = vmatprep.subr.bf16.mxu0 0
    %2346 = vmatpush2.bf16.msra.mxu0 0
    %2347 = vmatprep.subr.bf16.mxu0 0
    %2348 = vmatpush2.bf16.msra.mxu0 0
    %2349 = vmatprep.subr.bf16.mxu0 0
    %2350 = vmatpush2.bf16.msra.mxu0 0
    %2351 = vmatprep.subr.bf16.mxu0 0
    %2352 = vmatpush2.bf16.msra.mxu0 0
    %2353 = vmatprep.mubr.bf16.mxu0 0
    %2354 = vmatmul.mubr.bf16.gmra.mxu0 %v2266
    %v2355 = vpop.f32.mrf.mxu0
    %v2356 = vadd.f32 0.0, %v2355
    %v2357 = vpop.f32.mrf.mxu0
    %v2358 = vadd.f32 0.0, %v2357
    %v2359 = vpop.f32.mrf.mxu0
    %v2360 = vpop.f32.mrf.mxu0
    %2361 = vdwg.mxu0
    %v2362 = vmul.f32 %v2315, %v755
    %v2363 = vmul.f32 %v2317, %v759
    %v2364 = vmul.f32 %v2356, %v763
    %v2365 = vmul.f32 %v2358, %v767
    %v2366 = vsel %vm625, %v2362, 0.0
    %v2367 = vsel %vm625, %v2363, 0.0
    %v2368 = vadd.f32 %v2366, %v2367
    %v2369 = vsel %vm625, %v2364, 0.0
    %v2370 = vadd.f32 %v2368, %v2369
    %v2371 = vsel %vm625, %v2365, 0.0
    %v2372 = vadd.f32 %v2370, %v2371
    %2373 = vadd.xlane.f32.xlu0 %v2372
    %v2374 = vpop.xlane.xlu0 %2373
    %v2375 = vmul.f32 %v2374, 0.00390625
    %v2376 = vmul.f32 %v2375, %v755
    %v2377 = vmul.f32 %v2375, %v759
    %v2378 = vmul.f32 %v2375, %v763
    %v2379 = vmul.f32 %v2375, %v767
    %v2380 = vadd.f32 %v2376, 0.0
    %v2381 = vadd.f32 %v2377, 0.0
    %v2382 = vadd.f32 %v2378, 0.0
    %v2383 = vadd.f32 %v2379, 0.0
    %v2384 = vmul.f32 %v2315, %v800
    %v2385 = vmul.f32 %v2317, %v804
    %v2386 = vmul.f32 %v2356, %v808
    %v2387 = vmul.f32 %v2358, %v812
    %v2388 = vsel %vm625, %v2384, 0.0
    %v2389 = vsel %vm625, %v2385, 0.0
    %v2390 = vadd.f32 %v2388, %v2389
    %v2391 = vsel %vm625, %v2386, 0.0
    %v2392 = vadd.f32 %v2390, %v2391
    %v2393 = vsel %vm625, %v2387, 0.0
    %v2394 = vadd.f32 %v2392, %v2393
    %2395 = vadd.xlane.f32.xlu0 %v2394
    %v2396 = vpop.xlane.xlu0 %2395
    %v2397 = vmul.f32 %v2396, 0.00390625
    %v2398 = vmul.f32 %v2397, %v800
    %v2399 = vmul.f32 %v2397, %v804
    %v2400 = vmul.f32 %v2397, %v808
    %v2401 = vmul.f32 %v2397, %v812
    %v2402 = vadd.f32 %v2380, %v2398
    %v2403 = vadd.f32 %v2381, %v2399
    %v2404 = vadd.f32 %v2382, %v2400
    %v2405 = vadd.f32 %v2383, %v2401
    %v2406 = vsub.f32 %v2315, %v2402
    %v2407 = vsub.f32 %v2317, %v2403
    %v2408 = vsub.f32 %v2356, %v2404
    %v2409 = vsub.f32 %v2358, %v2405
    %v2410 = vmul.f32 %v2406, %v2406
    %v2411 = vmul.f32 %v2407, %v2407
    %v2412 = vmul.f32 %v2408, %v2408
    %v2413 = vmul.f32 %v2409, %v2409
    %v2414 = vmul.f32 %v2410, %v755
    %v2415 = vmul.f32 %v2411, %v759
    %v2416 = vmul.f32 %v2412, %v763
    %v2417 = vmul.f32 %v2413, %v767
    %v2418 = vsel %vm625, %v2414, 0.0
    %v2419 = vsel %vm625, %v2415, 0.0
    %v2420 = vadd.f32 %v2418, %v2419
    %v2421 = vsel %vm625, %v2416, 0.0
    %v2422 = vadd.f32 %v2420, %v2421
    %v2423 = vsel %vm625, %v2417, 0.0
    %v2424 = vadd.f32 %v2422, %v2423
    %2425 = vadd.xlane.f32.xlu0 %v2424
    %v2426 = vpop.xlane.xlu0 %2425
    %v2427 = vmul.f32 %v2426, 0.00390625
    %v2428 = vmul.f32 %v2427, %v755
    %v2429 = vmul.f32 %v2427, %v759
    %v2430 = vmul.f32 %v2427, %v763
    %v2431 = vmul.f32 %v2427, %v767
    %v2432 = vadd.f32 %v2428, 0.0
    %v2433 = vadd.f32 %v2429, 0.0
    %v2434 = vadd.f32 %v2430, 0.0
    %v2435 = vadd.f32 %v2431, 0.0
    %v2436 = vmul.f32 %v2410, %v800
    %v2437 = vmul.f32 %v2411, %v804
    %v2438 = vmul.f32 %v2412, %v808
    %v2439 = vmul.f32 %v2413, %v812
    %v2440 = vsel %vm625, %v2436, 0.0
    %v2441 = vsel %vm625, %v2437, 0.0
    %v2442 = vadd.f32 %v2440, %v2441
    %v2443 = vsel %vm625, %v2438, 0.0
    %v2444 = vadd.f32 %v2442, %v2443
    %v2445 = vsel %vm625, %v2439, 0.0
    %v2446 = vadd.f32 %v2444, %v2445
    %2447 = vadd.xlane.f32.xlu0 %v2446
    %v2448 = vpop.xlane.xlu0 %2447
    %v2449 = vmul.f32 %v2448, 0.00390625
    %v2450 = vmul.f32 %v2449, %v800
    %v2451 = vmul.f32 %v2449, %v804
    %v2452 = vmul.f32 %v2449, %v808
    %v2453 = vmul.f32 %v2449, %v812
    %v2454 = vadd.f32 %v2432, %v2450
    %v2455 = vadd.f32 %v2433, %v2451
    %v2456 = vadd.f32 %v2434, %v2452
    %v2457 = vadd.f32 %v2435, %v2453
    %v2458 = vadd.f32 %v2454, 1e-05
    %v2459 = vadd.f32 %v2455, 1e-05
    %v2460 = vadd.f32 %v2456, 1e-05
    %v2461 = vadd.f32 %v2457, 1e-05
    %v2462 = vrsqrt.pop %v2458
    %v2463 = vrsqrt.pop %v2459
    %v2464 = vrsqrt.pop %v2460
    %v2465 = vrsqrt.pop %v2461
    %v2466 = vmul.f32 %v2406, %v2462
    %v2467 = vmul.f32 %v2407, %v2463
    %v2468 = vmul.f32 %v2408, %v2464
    %v2469 = vmul.f32 %v2409, %v2465
    %v2470 = vmax.f32 %v2466, 0.0
    %v2471 = vmax.f32 %v2467, 0.0
    %v2472 = vmax.f32 %v2468, 0.0
    %v2473 = vmax.f32 %v2469, 0.0
    %v2474 = vld [vmem:[%s16] sm:$0x1]
    %v2475 = vpack.c.bf16 %v2470, %v2470
    %v2476 = vpack.c.bf16 %v2471, %v2471
    %v2477 = vpack.c.bf16 %v2472, %v2472
    %v2478 = vpack.c.bf16 %v2473, %v2473
    %v2479 = vld [vmem:[#allocation2] sm:$0x1]
    %2481 = vset.pattern.permute.xlu0 0
    %2482 = vperm.xlu0 %2481, %v2479
    %v2483 = vpop.permute.xlu0 %2482
    %v2485 = vlaneseq
    %v2486 = vshrl.u32 %v2485, 7
    %v2487 = vsub.s32 0, %v2486
    %v2488 = vrot.slane %v2483, %v2487
    %vm2489 = vcmask 31744
    %v2491 = vsel %vm2489, %v2474, 0
    %v2494 = vsel %vm615, %v2475, 0
    %v2497 = vsel %vm615, %v2476, 0
    %v2500 = vsel %vm615, %v2477, 0
    %v2503 = vsel %vm615, %v2478, 0
    %2505 = vmatprep.subr.bf16.mxu0 0
    %2506 = vmatpush1.bf16.msra.mxu0 0
    %2507 = vmatprep.subr.bf16.mxu0 0
    %2508 = vmatpush1.bf16.msra.mxu0 0
    %2509 = vmatprep.subr.bf16.mxu0 0
    %2510 = vmatpush1.bf16.msra.mxu0 0
    %2511 = vmatprep.subr.bf16.mxu0 0
    %2512 = vmatpush1.bf16.msra.mxu0 0
    %2513 = vmatprep.subr.bf16.mxu0 0
    %2514 = vmatpush1.bf16.msra.mxu0 0
    %2515 = vmatprep.subr.bf16.mxu0 0
    %2516 = vmatpush1.bf16.msra.mxu0 0
    %2517 = vmatprep.subr.bf16.mxu0 0
    %2518 = vmatpush1.bf16.msra.mxu0 0
    %2519 = vmatprep.subr.bf16.mxu0 %v2497
    %2520 = vmatpush1.bf16.msra.mxu0 %v2494
    %2521 = vmatprep.subr.bf16.mxu0 0
    %2522 = vmatpush2.bf16.msra.mxu0 0
    %2523 = vmatprep.subr.bf16.mxu0 0
    %2524 = vmatpush2.bf16.msra.mxu0 0
    %2525 = vmatprep.subr.bf16.mxu0 0
    %2526 = vmatpush2.bf16.msra.mxu0 0
    %2527 = vmatprep.subr.bf16.mxu0 0
    %2528 = vmatpush2.bf16.msra.mxu0 0
    %2529 = vmatprep.subr.bf16.mxu0 0
    %2530 = vmatpush2.bf16.msra.mxu0 0
    %2531 = vmatprep.subr.bf16.mxu0 0
    %2532 = vmatpush2.bf16.msra.mxu0 0
    %2533 = vmatprep.subr.bf16.mxu0 0
    %2534 = vmatpush2.bf16.msra.mxu0 0
    %2535 = vmatprep.subr.bf16.mxu0 0
    %2536 = vmatpush2.bf16.msra.mxu0 0
    %2537 = vmatprep.mubr.bf16.mxu0 0
    %2538 = vmatmul.mubr.bf16.gmra.mxu0 %v2491
    %v2539 = vpop.f32.mrf.mxu0
    %v2540 = vadd.f32 %v2488, %v2539
    %v2541 = vpop.f32.mrf.mxu0
    %v2542 = vadd.f32 %v2488, %v2541
    %v2543 = vpop.f32.mrf.mxu0
    %v2544 = vpop.f32.mrf.mxu0
    %2545 = vdwg.mxu0
    %2546 = vmatprep.subr.bf16.mxu0 0
    %2547 = vmatpush1.bf16.msra.mxu0 0
    %2548 = vmatprep.subr.bf16.mxu0 0
    %2549 = vmatpush1.bf16.msra.mxu0 0
    %2550 = vmatprep.subr.bf16.mxu0 0
    %2551 = vmatpush1.bf16.msra.mxu0 0
    %2552 = vmatprep.subr.bf16.mxu0 0
    %2553 = vmatpush1.bf16.msra.mxu0 0
    %2554 = vmatprep.subr.bf16.mxu0 0
    %2555 = vmatpush1.bf16.msra.mxu0 0
    %2556 = vmatprep.subr.bf16.mxu0 0
    %2557 = vmatpush1.bf16.msra.mxu0 0
    %2558 = vmatprep.subr.bf16.mxu0 0
    %2559 = vmatpush1.bf16.msra.mxu0 0
    %2560 = vmatprep.subr.bf16.mxu0 %v2503
    %2561 = vmatpush1.bf16.msra.mxu0 %v2500
    %2562 = vmatprep.subr.bf16.mxu0 0
    %2563 = vmatpush2.bf16.msra.mxu0 0
    %2564 = vmatprep.subr.bf16.mxu0 0
    %2565 = vmatpush2.bf16.msra.mxu0 0
    %2566 = vmatprep.subr.bf16.mxu0 0
    %2567 = vmatpush2.bf16.msra.mxu0 0
    %2568 = vmatprep.subr.bf16.mxu0 0
    %2569 = vmatpush2.bf16.msra.mxu0 0
    %2570 = vmatprep.subr.bf16.mxu0 0
    %2571 = vmatpush2.bf16.msra.mxu0 0
    %2572 = vmatprep.subr.bf16.mxu0 0
    %2573 = vmatpush2.bf16.msra.mxu0 0
    %2574 = vmatprep.subr.bf16.mxu0 0
    %2575 = vmatpush2.bf16.msra.mxu0 0
    %2576 = vmatprep.subr.bf16.mxu0 0
    %2577 = vmatpush2.bf16.msra.mxu0 0
    %2578 = vmatprep.mubr.bf16.mxu0 0
    %2579 = vmatmul.mubr.bf16.gmra.mxu0 %v2491
    %v2580 = vpop.f32.mrf.mxu0
    %v2581 = vadd.f32 %v2488, %v2580
    %v2582 = vpop.f32.mrf.mxu0
    %v2583 = vadd.f32 %v2488, %v2582
    %v2584 = vpop.f32.mrf.mxu0
    %v2585 = vpop.f32.mrf.mxu0
    %2586 = vdwg.mxu0
    %v2587 = vadd.f32 %v2540, %v176
    %v2588 = vadd.f32 %v2542, %v180
    %v2589 = vadd.f32 %v2581, %v184
    %v2590 = vadd.f32 %v2583, %v188
    %v2595 = vcombine.low %v2587, %v2588
    %v2596 = vcombine.low %v2589, %v2590
    %v2598 = vunpack.c.l.s4 1966171168
    %v2599 = vunpack.c.0.s8 %v2598
    %v2600 = vlaneseq
    %v2601 = vshrl.u32 %v2600, 7
    %v2602 = vsub.s32 %v2599, %v2601
    %v2603 = vrot.slane %v2595, %v2602
    %v2605 = vunpack.c.l.s4 1966171168
    %v2606 = vunpack.c.0.s8 %v2605
    %v2607 = vlaneseq
    %v2608 = vshrl.u32 %v2607, 7
    %v2609 = vsub.s32 %v2606, %v2608
    %v2610 = vrot.slane %v2596, %v2609
    %v2611 = vcombine.low %v2603, %v2610
    %v2613 = vunpack.c.l.s4 1966171168
    %v2614 = vunpack.c.0.s8 %v2613
    %v2615 = vlaneseq
    %v2616 = vshrl.u32 %v2615, 7
    %v2617 = vsub.s32 %v2614, %v2616
    %v2618 = vrot.slane %v2611, %v2617
    %v2620 = vlaneseq
    %vm2621 = vcmp.ge.s32.totalorder %v2620, 0
    %vm2622 = vcmp.lt.s32.totalorder %v2620, 512
    %vm2623 = vmand %vm2621, %vm2622
    %2624 = vst.msk [vmem:[%s18] sm:$0xf] %vm2623, %v2618
    // Predicated region
    $region106: #{forward.1} parent=1 // pred_check
      _
    $region107: #{forward.1} parent=1 // pred_check_branch
      %2626 = sbr.rel (0) target = $region109
    $region108: #{forward.1} parent=1 // pred_region
      _
    $region109: #{forward.1} parent=1 // pred_fallthru
      _
    // Predicated region
    $region110: #{forward.1} parent=1 // pred_check
      _
    $region111: #{forward.1} parent=1 // pred_check_branch
      %2628 = sbr.rel (0) target = $region113
    $region112: #{forward.1} parent=1 // pred_region
      _
    $region113: #{forward.1} parent=1 // pred_fallthru
      _
    %2629 = vsyncpa [#allocation4], 1
    %2630 = vsyncpa [#allocation6], 1
    %2631 = vsyncpa [#allocation9], 1
    %2632 = vsyncpa [#allocation12], 1
    %2633 = vsyncpa [#allocation15], 1

</llo_original>
